<compile_context>
chip_gen: v7x
topology: tpu7x:2x2x1
jax: 0.10.0
libtpu: 0.0.40
codegen_flags: <defaults>
</compile_context>

<pallas_src>
import functools

import jax
import jax.numpy as jnp
from jax.experimental import pallas as pl
from jax.experimental.pallas import tpu as pltpu

BLOCK_M = 1024   # max lane tile over M = N*Ho*Wo
K_CHUNK = 8      # K rows per fori_loop chunk (one natural sublane tile)


def _round_up(x, m):
    return (x + m - 1) // m * m


def _choose_tile(m_total, cout):
    """Lane tile over M: multiple of 128, accumulator <= ~16 vregs, >=2 tiles."""
    mp128 = _round_up(max(m_total, 1), 128)
    # Keep the (cout, tm) f32 accumulator within ~16 vregs (16 * 1024 f32).
    cap = max(128, (16 * 1024) // max(cout, 1) // 128 * 128)
    cands = [t for t in (1024, 512, 256, 128) if t <= min(BLOCK_M, cap, mp128)]
    if not cands:
        return 128
    for t in cands:  # largest tile that still gives both v7x TCs a tile
        if pl.cdiv(mp128, t) >= 2:
            return t
    return cands[-1]


# ---------------------------------------------------------------- kernels ---

def _adder_conv_stats_kernel(a_ref, w_ref, sw_ref, y_ref, stats_ref, *,
                             m_total, block_m):
    """y[co, m] = 2*sum_k min(a[k,m], w[co,k]) - S_a[m] - S_w[co]
                = -sum_k |a[k,m] - w[co,k]|   (zero-padded K rows contribute 0)

    a_ref:     (NKC, K_CHUNK, TM)   im2col^T tile, chunk-major, M on lanes
    w_ref:     (NKC, Cout, K_CHUNK) flattened weights, chunk-major
    sw_ref:    (Cout, 1)            S_w = sum_k w[co, k]  (precomputed)
    y_ref:     (Cout, TM)           lane-dense output tile
    stats_ref: (1, Cout, 2)         per-tile [sum, tile-centered M2], valid lanes
    """
    i = pl.program_id(0)
    n_chunks = a_ref.shape[0]
    cout = w_ref.shape[1]

    def body(c, carry):
        acc, s_a = carry
        a_chunk = a_ref[c]                       # (K_CHUNK, TM)
        w_chunk = w_ref[c]                       # (Cout, K_CHUNK)
        for j in range(K_CHUNK):                 # unrolled; VALU: min + add
            acc = acc + jnp.minimum(a_chunk[j:j + 1, :], w_chunk[:, j:j + 1])
        # S_a reduction rides the XLU slot; overlaps the VALU-bound loop.
        s_a = s_a + jnp.sum(a_chunk, axis=0, keepdims=True)
        return acc, s_a

    if n_chunks <= 16:
        unroll = True
    elif n_chunks % 4 == 0:
        unroll = 4
    else:
        unroll = 1
    acc0 = jnp.zeros((cout, block_m), jnp.float32)
    sa0 = jnp.zeros((1, block_m), jnp.float32)
    acc, s_a = jax.lax.fori_loop(0, n_chunks, body, (acc0, sa0), unroll=unroll)

    y = 2.0 * acc - s_a - sw_ref[...]
    y_ref[...] = y

    # Per-tile BatchNorm partial statistics over the valid (non-padded) lanes.
    lane = jax.lax.broadcasted_iota(jnp.int32, (1, block_m), 1) + i * block_m
    valid = lane < m_total                                      # (1, TM)
    cnt = jnp.minimum(block_m, m_total - i * block_m).astype(jnp.float32)
    ym = jnp.where(valid, y, 0.0)
    s = jnp.sum(ym, axis=1, keepdims=True)                      # (Cout, 1)
    mu = s / cnt
    d = jnp.where(valid, y - mu, 0.0)
    m2 = jnp.sum(d * d, axis=1, keepdims=True)                  # (Cout, 1)
    # TODO(synk): last dim of 2 -> masked store + tiny DMA per step; fine at
    # these tile counts, lay out lane-dense if tiles ever shrink a lot.
    stats_ref[...] = jnp.concatenate([s, m2], axis=1)[None]     # (1, Cout, 2)


def _bn_relu_kernel(y_ref, scale_ref, shift_ref, o_ref):
    """Fused (pre-folded) BatchNorm affine + ReLU on lane-dense (Cout, TM)."""
    o_ref[...] = jnp.maximum(y_ref[...] * scale_ref[...] + shift_ref[...], 0.0)


def _bn_add_relu_kernel(y_ref, res_ref, scale_ref, shift_ref, o_ref):
    """Fused BatchNorm affine + residual add + ReLU."""
    o_ref[...] = jnp.maximum(
        y_ref[...] * scale_ref[...] + shift_ref[...] + res_ref[...], 0.0)


# ------------------------------------------------------------------- glue ---

def _im2col_t(x_cnhw, ksize=3, stride=1, padding=1):
    """(C, N, H, W) -> (C*k*k, N*Ho*Wo): K on rows, pixels on columns (lanes)."""
    C, N, H, W = x_cnhw.shape
    Ho = (H + 2 * padding - ksize) // stride + 1
    Wo = (W + 2 * padding - ksize) // stride + 1
    xp = jnp.pad(x_cnhw, ((0, 0), (0, 0), (padding, padding), (padding, padding)))
    cols = []
    for kh in range(ksize):
        for kw in range(ksize):
            cols.append(xp[:, :, kh:kh + stride * Ho:stride,
                           kw:kw + stride * Wo:stride])
    patches = jnp.stack(cols, axis=1)                 # (C, k*k, N, Ho, Wo)
    return patches.reshape(C * ksize * ksize, N * Ho * Wo), Ho, Wo


def adder_conv(a_t, w):
    """adder2d on im2col^T.  a_t: (K, M) f32;  w: (Cout, Cin, k, k).

    Returns y^T (Cout, Mp) f32, per-tile BN stats (T, Cout, 2), lane tile tm.
    """
    K, M = a_t.shape
    cout = w.shape[0]
    kp = _round_up(K, K_CHUNK)
    nkc = kp // K_CHUNK

    w_flat = w.reshape(cout, K).astype(jnp.float32)
    s_w = jnp.sum(w_flat, axis=1, keepdims=True)                  # (Cout, 1)
    w_chunks = jnp.pad(w_flat, ((0, 0), (0, kp - K))
                       ).reshape(cout, nkc, K_CHUNK).transpose(1, 0, 2)

    tm = _choose_tile(M, cout)
    mp = _round_up(M, tm)
    n_tiles = mp // tm
    a_chunks = jnp.pad(a_t.astype(jnp.float32),
                       ((0, kp - K), (0, mp - M))).reshape(nkc, K_CHUNK, mp)

    kernel = functools.partial(_adder_conv_stats_kernel, m_total=M, block_m=tm)
    y_t, stats = pl.pallas_call(
        kernel,
        out_shape=(jax.ShapeDtypeStruct((cout, mp), jnp.float32),
                   jax.ShapeDtypeStruct((n_tiles, cout, 2), jnp.float32)),
        grid=(n_tiles,),
        in_specs=[pl.BlockSpec((nkc, K_CHUNK, tm), lambda i: (0, 0, i)),
                  pl.BlockSpec((nkc, cout, K_CHUNK), lambda i: (0, 0, 0)),
                  pl.BlockSpec((cout, 1), lambda i: (0, 0))],
        out_specs=(pl.BlockSpec((cout, tm), lambda i: (0, i)),
                   pl.BlockSpec((1, cout, 2), lambda i: (i, 0, 0))),
        compiler_params=pltpu.CompilerParams(
            dimension_semantics=("parallel",)),
    )(a_chunks, w_chunks, s_w)
    return y_t, stats, tm


def _bn_scale_shift(stats, m_total, tm, gamma, beta, eps=1e-5):
    """Combine per-tile [sum, M2] (Chan's parallel variance) -> scale/shift.

    Train-mode BatchNorm2d: biased variance over (N, H, W), matching PyTorch.
    TODO(synk): running_mean / running_var buffer updates (training side
    effect) are not modeled; they do not affect the forward output.
    """
    sums = stats[:, :, 0]                                       # (T, C)
    m2s = stats[:, :, 1]                                        # (T, C)
    n_tiles = stats.shape[0]
    counts = jnp.minimum(tm, m_total - jnp.arange(n_tiles) * tm
                         ).astype(jnp.float32)[:, None]         # (T, 1)
    mean = jnp.sum(sums, axis=0) / m_total                      # (C,)
    mu_t = sums / counts
    var = (jnp.sum(m2s, axis=0)
           + jnp.sum(counts * (mu_t - mean) ** 2, axis=0)) / m_total
    scale = gamma / jnp.sqrt(var + eps)
    shift = beta - mean * scale
    return scale[:, None], shift[:, None]                       # (C, 1) each


def _bn_apply(y_t, scale, shift, tm, residual=None):
    """Apply BN affine (+ optional residual) + ReLU on lane-dense (C, Mp)."""
    cout, mp = y_t.shape
    grid = (mp // tm,)
    cparams = pltpu.CompilerParams(dimension_semantics=("parallel",))
    tile = pl.BlockSpec((cout, tm), lambda i: (0, i))
    vec = pl.BlockSpec((cout, 1), lambda i: (0, 0))
    out_shape = jax.ShapeDtypeStruct((cout, mp), jnp.float32)
    if residual is None:
        return pl.pallas_call(
            _bn_relu_kernel, out_shape=out_shape, grid=grid,
            in_specs=[tile, vec, vec], out_specs=tile,
            compiler_params=cparams,
        )(y_t, scale, shift)
    return pl.pallas_call(
        _bn_add_relu_kernel, out_shape=out_shape, grid=grid,
        in_specs=[tile, tile, vec, vec], out_specs=tile,
        compiler_params=cparams,
    )(y_t, residual, scale, shift)


def basic_block_forward(x, params, stride=1):
    """BasicBlock.forward with downsample=None (requires stride=1, Cin==planes)."""
    N, Cin, H, W = x.shape
    planes = params["w1"].shape[0]
    if stride != 1 or Cin != planes:
        # TODO(synk): downsample path (it is None in this configuration).
        raise NotImplementedError("downsample=None requires stride=1, Cin==planes")

    x_t = x.transpose(1, 0, 2, 3)                               # (C, N, H, W)

    a1, Ho, Wo = _im2col_t(x_t, 3, stride, 1)                   # conv1 patches
    y1, stats1, tm1 = adder_conv(a1, params["w1"])              # conv1 (+stats)
    m1 = N * Ho * Wo
    s1, b1 = _bn_scale_shift(stats1, m1, tm1, params["gamma1"], params["beta1"])
    h1 = _bn_apply(y1, s1, b1, tm1)                             # bn1 + relu
    h1_cnhw = h1[:, :m1].reshape(planes, N, Ho, Wo)

    a2, Ho2, Wo2 = _im2col_t(h1_cnhw, 3, 1, 1)                  # conv2 patches
    y2, stats2, tm2 = adder_conv(a2, params["w2"])              # conv2 (+stats)
    m2 = N * Ho2 * Wo2
    s2, b2 = _bn_scale_shift(stats2, m2, tm2, params["gamma2"], params["beta2"])

    residual = x_t.reshape(Cin, N * H * W)                      # identity path
    res_p = jnp.pad(residual, ((0, 0), (0, y2.shape[1] - m2)))
    out = _bn_apply(y2, s2, b2, tm2, residual=res_p)            # bn2 + add + relu
    return out[:, :m2].reshape(planes, N, Ho2, Wo2).transpose(1, 0, 2, 3)


# ------------------------------------------------------ pure-JAX reference ---

def _ref_adder_conv(x, w, stride=1, padding=1):
    N, C, H, W = x.shape
    cout, _, k, _ = w.shape
    Ho = (H + 2 * padding - k) // stride + 1
    Wo = (W + 2 * padding - k) // stride + 1
    xp = jnp.pad(x, ((0, 0), (0, 0), (padding, padding), (padding, padding)))
    out = jnp.zeros((N, cout, Ho, Wo), jnp.float32)
    for kh in range(k):
        for kw in range(k):
            patch = xp[:, :, kh:kh + stride * Ho:stride, kw:kw + stride * Wo:stride]
            d = jnp.abs(patch[:, None] - w[None, :, :, kh, kw][:, :, :, None, None])
            out = out - jnp.sum(d, axis=2)
    return out


def _ref_bn(y, gamma, beta, eps=1e-5):
    mean = jnp.mean(y, axis=(0, 2, 3), keepdims=True)
    var = jnp.var(y, axis=(0, 2, 3), keepdims=True)   # biased, matches PyTorch
    return ((y - mean) / jnp.sqrt(var + eps)
            * gamma[None, :, None, None] + beta[None, :, None, None])


def _ref_block(x, params, stride=1):
    y1 = _ref_adder_conv(x, params["w1"], stride)
    h1 = jnp.maximum(_ref_bn(y1, params["gamma1"], params["beta1"]), 0.0)
    y2 = _ref_adder_conv(h1, params["w2"], 1)
    h2 = _ref_bn(y2, params["gamma2"], params["beta2"])
    return jnp.maximum(h2 + x, 0.0)


# ------------------------------------------------------------------ main ----

if __name__ == "__main__":
    key = jax.random.PRNGKey(0)
    k1, k2, kx = jax.random.split(key, 3)

    # BasicBlock(inplanes=8, planes=8, stride=1, downsample=None)
    N, C, H, W = 2, 8, 16, 16
    planes = C
    params = {
        "w1": 0.1 * jax.random.normal(k1, (planes, C, 3, 3), jnp.float32),
        "w2": 0.1 * jax.random.normal(k2, (planes, planes, 3, 3), jnp.float32),
        "gamma1": jnp.ones((planes,), jnp.float32),   # PyTorch BN default init
        "beta1": jnp.zeros((planes,), jnp.float32),
        "gamma2": jnp.ones((planes,), jnp.float32),
        "beta2": jnp.zeros((planes,), jnp.float32),
    }
    x = jax.random.normal(kx, (N, C, H, W), jnp.float32)

    fwd = jax.jit(functools.partial(basic_block_forward, stride=1))
    out = jax.block_until_ready(fwd(x, params))

    ref = _ref_block(x, params, stride=1)
    assert out.shape == (N, planes, H, W), out.shape
    max_err = float(jnp.max(jnp.abs(out - ref)))
    assert jnp.allclose(out, ref, atol=2e-4, rtol=2e-4), max_err

    print("KERNEL_OK")
</pallas_src>

<mosaic_0001>
module attributes {stable_mosaic.version = 11 : i64} {
  func.func @_adder_conv_stats_kernel(%arg0: i32, %arg1: memref<9x8x256xf32, #tpu.memory_space<vmem>>, %arg2: memref<9x8x8xf32, #tpu.memory_space<vmem>>, %arg3: memref<8x1xf32, #tpu.memory_space<vmem>>, %arg4: memref<8x256xf32, #tpu.memory_space<vmem>>, %arg5: memref<1x8x2xf32, #tpu.memory_space<vmem>>) attributes {dimension_semantics = [#tpu.dimension_semantics<parallel>], iteration_bounds = array<i64: 2>, scalar_prefetch = 0 : i64, scratch_operands = 0 : i64, tpu.core_type = #tpu.core_type<tc>, window_params = [{transform_indices = @transform_0, window_bounds = array<i64: 9, 8, 256>}, {pipeline_mode = #tpu.pipeline_mode<synchronous>, transform_indices = @transform_1, window_bounds = array<i64: 9, 8, 8>}, {pipeline_mode = #tpu.pipeline_mode<synchronous>, transform_indices = @transform_2, window_bounds = array<i64: 8, 1>}, {transform_indices = @transform_3, window_bounds = array<i64: 8, 256>}, {transform_indices = @transform_4, window_bounds = array<i64: 1, 8, 2>}]} {
    %cst = arith.constant 0.000000e+00 : f32
    %0 = vector.broadcast %cst : f32 to vector<8x256xf32>
    %cst_0 = arith.constant 0.000000e+00 : f32
    %1 = vector.broadcast %cst_0 : f32 to vector<1x256xf32>
    %c0_i32 = arith.constant 0 : i32
    %2 = arith.index_cast %c0_i32 : i32 to index
    %c0 = arith.constant 0 : index
    %c0_1 = arith.constant 0 : index
    %3 = vector.load %arg1[%2, %c0, %c0_1] : memref<9x8x256xf32, #tpu.memory_space<vmem>>, vector<1x8x256xf32>
    %4 = vector.shape_cast %3 : vector<1x8x256xf32> to vector<8x256xf32>
    %5 = arith.index_cast %c0_i32 : i32 to index
    %c0_2 = arith.constant 0 : index
    %c0_3 = arith.constant 0 : index
    %6 = vector.load %arg2[%5, %c0_2, %c0_3] : memref<9x8x8xf32, #tpu.memory_space<vmem>>, vector<1x8x8xf32>
    %7 = vector.shape_cast %6 : vector<1x8x8xf32> to vector<8x8xf32>
    %8 = vector.extract_strided_slice %4 {offsets = [0, 0], sizes = [1, 256], strides = [1, 1]} : vector<8x256xf32> to vector<1x256xf32>
    %9 = vector.extract_strided_slice %7 {offsets = [0, 0], sizes = [8, 1], strides = [1, 1]} : vector<8x8xf32> to vector<8x1xf32>
    %10 = vector.broadcast %8 : vector<1x256xf32> to vector<8x256xf32>
    %11 = vector.broadcast %9 : vector<8x1xf32> to vector<8x256xf32>
    %12 = arith.minimumf %10, %11 : vector<8x256xf32>
    %13 = arith.addf %0, %12 : vector<8x256xf32>
    %14 = vector.extract_strided_slice %4 {offsets = [1, 0], sizes = [1, 256], strides = [1, 1]} : vector<8x256xf32> to vector<1x256xf32>
    %15 = vector.extract_strided_slice %7 {offsets = [0, 1], sizes = [8, 1], strides = [1, 1]} : vector<8x8xf32> to vector<8x1xf32>
    %16 = vector.broadcast %14 : vector<1x256xf32> to vector<8x256xf32>
    %17 = vector.broadcast %15 : vector<8x1xf32> to vector<8x256xf32>
    %18 = arith.minimumf %16, %17 : vector<8x256xf32>
    %19 = arith.addf %13, %18 : vector<8x256xf32>
    %20 = vector.extract_strided_slice %4 {offsets = [2, 0], sizes = [1, 256], strides = [1, 1]} : vector<8x256xf32> to vector<1x256xf32>
    %21 = vector.extract_strided_slice %7 {offsets = [0, 2], sizes = [8, 1], strides = [1, 1]} : vector<8x8xf32> to vector<8x1xf32>
    %22 = vector.broadcast %20 : vector<1x256xf32> to vector<8x256xf32>
    %23 = vector.broadcast %21 : vector<8x1xf32> to vector<8x256xf32>
    %24 = arith.minimumf %22, %23 : vector<8x256xf32>
    %25 = arith.addf %19, %24 : vector<8x256xf32>
    %26 = vector.extract_strided_slice %4 {offsets = [3, 0], sizes = [1, 256], strides = [1, 1]} : vector<8x256xf32> to vector<1x256xf32>
    %27 = vector.extract_strided_slice %7 {offsets = [0, 3], sizes = [8, 1], strides = [1, 1]} : vector<8x8xf32> to vector<8x1xf32>
    %28 = vector.broadcast %26 : vector<1x256xf32> to vector<8x256xf32>
    %29 = vector.broadcast %27 : vector<8x1xf32> to vector<8x256xf32>
    %30 = arith.minimumf %28, %29 : vector<8x256xf32>
    %31 = arith.addf %25, %30 : vector<8x256xf32>
    %32 = vector.extract_strided_slice %4 {offsets = [4, 0], sizes = [1, 256], strides = [1, 1]} : vector<8x256xf32> to vector<1x256xf32>
    %33 = vector.extract_strided_slice %7 {offsets = [0, 4], sizes = [8, 1], strides = [1, 1]} : vector<8x8xf32> to vector<8x1xf32>
    %34 = vector.broadcast %32 : vector<1x256xf32> to vector<8x256xf32>
    %35 = vector.broadcast %33 : vector<8x1xf32> to vector<8x256xf32>
    %36 = arith.minimumf %34, %35 : vector<8x256xf32>
    %37 = arith.addf %31, %36 : vector<8x256xf32>
    %38 = vector.extract_strided_slice %4 {offsets = [5, 0], sizes = [1, 256], strides = [1, 1]} : vector<8x256xf32> to vector<1x256xf32>
    %39 = vector.extract_strided_slice %7 {offsets = [0, 5], sizes = [8, 1], strides = [1, 1]} : vector<8x8xf32> to vector<8x1xf32>
    %40 = vector.broadcast %38 : vector<1x256xf32> to vector<8x256xf32>
    %41 = vector.broadcast %39 : vector<8x1xf32> to vector<8x256xf32>
    %42 = arith.minimumf %40, %41 : vector<8x256xf32>
    %43 = arith.addf %37, %42 : vector<8x256xf32>
    %44 = vector.extract_strided_slice %4 {offsets = [6, 0], sizes = [1, 256], strides = [1, 1]} : vector<8x256xf32> to vector<1x256xf32>
    %45 = vector.extract_strided_slice %7 {offsets = [0, 6], sizes = [8, 1], strides = [1, 1]} : vector<8x8xf32> to vector<8x1xf32>
    %46 = vector.broadcast %44 : vector<1x256xf32> to vector<8x256xf32>
    %47 = vector.broadcast %45 : vector<8x1xf32> to vector<8x256xf32>
    %48 = arith.minimumf %46, %47 : vector<8x256xf32>
    %49 = arith.addf %43, %48 : vector<8x256xf32>
    %50 = vector.extract_strided_slice %4 {offsets = [7, 0], sizes = [1, 256], strides = [1, 1]} : vector<8x256xf32> to vector<1x256xf32>
    %51 = vector.extract_strided_slice %7 {offsets = [0, 7], sizes = [8, 1], strides = [1, 1]} : vector<8x8xf32> to vector<8x1xf32>
    %52 = vector.broadcast %50 : vector<1x256xf32> to vector<8x256xf32>
    %53 = vector.broadcast %51 : vector<8x1xf32> to vector<8x256xf32>
    %54 = arith.minimumf %52, %53 : vector<8x256xf32>
    %55 = arith.addf %49, %54 : vector<8x256xf32>
    %cst_4 = arith.constant dense<0.000000e+00> : vector<256xf32>
    %56 = vector.multi_reduction <add>, %4, %cst_4 [0] : vector<8x256xf32> to vector<256xf32>
    %57 = vector.shape_cast %56 : vector<256xf32> to vector<1x256xf32>
    %58 = arith.addf %1, %57 : vector<1x256xf32>
    %c1_i32 = arith.constant 1 : i32
    %59 = arith.index_cast %c1_i32 : i32 to index
    %c0_5 = arith.constant 0 : index
    %c0_6 = arith.constant 0 : index
    %60 = vector.load %arg1[%59, %c0_5, %c0_6] : memref<9x8x256xf32, #tpu.memory_space<vmem>>, vector<1x8x256xf32>
    %61 = vector.shape_cast %60 : vector<1x8x256xf32> to vector<8x256xf32>
    %62 = arith.index_cast %c1_i32 : i32 to index
    %c0_7 = arith.constant 0 : index
    %c0_8 = arith.constant 0 : index
    %63 = vector.load %arg2[%62, %c0_7, %c0_8] : memref<9x8x8xf32, #tpu.memory_space<vmem>>, vector<1x8x8xf32>
    %64 = vector.shape_cast %63 : vector<1x8x8xf32> to vector<8x8xf32>
    %65 = vector.extract_strided_slice %61 {offsets = [0, 0], sizes = [1, 256], strides = [1, 1]} : vector<8x256xf32> to vector<1x256xf32>
    %66 = vector.extract_strided_slice %64 {offsets = [0, 0], sizes = [8, 1], strides = [1, 1]} : vector<8x8xf32> to vector<8x1xf32>
    %67 = vector.broadcast %65 : vector<1x256xf32> to vector<8x256xf32>
    %68 = vector.broadcast %66 : vector<8x1xf32> to vector<8x256xf32>
    %69 = arith.minimumf %67, %68 : vector<8x256xf32>
    %70 = arith.addf %55, %69 : vector<8x256xf32>
    %71 = vector.extract_strided_slice %61 {offsets = [1, 0], sizes = [1, 256], strides = [1, 1]} : vector<8x256xf32> to vector<1x256xf32>
    %72 = vector.extract_strided_slice %64 {offsets = [0, 1], sizes = [8, 1], strides = [1, 1]} : vector<8x8xf32> to vector<8x1xf32>
    %73 = vector.broadcast %71 : vector<1x256xf32> to vector<8x256xf32>
    %74 = vector.broadcast %72 : vector<8x1xf32> to vector<8x256xf32>
    %75 = arith.minimumf %73, %74 : vector<8x256xf32>
    %76 = arith.addf %70, %75 : vector<8x256xf32>
    %77 = vector.extract_strided_slice %61 {offsets = [2, 0], sizes = [1, 256], strides = [1, 1]} : vector<8x256xf32> to vector<1x256xf32>
    %78 = vector.extract_strided_slice %64 {offsets = [0, 2], sizes = [8, 1], strides = [1, 1]} : vector<8x8xf32> to vector<8x1xf32>
    %79 = vector.broadcast %77 : vector<1x256xf32> to vector<8x256xf32>
    %80 = vector.broadcast %78 : vector<8x1xf32> to vector<8x256xf32>
    %81 = arith.minimumf %79, %80 : vector<8x256xf32>
    %82 = arith.addf %76, %81 : vector<8x256xf32>
    %83 = vector.extract_strided_slice %61 {offsets = [3, 0], sizes = [1, 256], strides = [1, 1]} : vector<8x256xf32> to vector<1x256xf32>
    %84 = vector.extract_strided_slice %64 {offsets = [0, 3], sizes = [8, 1], strides = [1, 1]} : vector<8x8xf32> to vector<8x1xf32>
    %85 = vector.broadcast %83 : vector<1x256xf32> to vector<8x256xf32>
    %86 = vector.broadcast %84 : vector<8x1xf32> to vector<8x256xf32>
    %87 = arith.minimumf %85, %86 : vector<8x256xf32>
    %88 = arith.addf %82, %87 : vector<8x256xf32>
    %89 = vector.extract_strided_slice %61 {offsets = [4, 0], sizes = [1, 256], strides = [1, 1]} : vector<8x256xf32> to vector<1x256xf32>
    %90 = vector.extract_strided_slice %64 {offsets = [0, 4], sizes = [8, 1], strides = [1, 1]} : vector<8x8xf32> to vector<8x1xf32>
    %91 = vector.broadcast %89 : vector<1x256xf32> to vector<8x256xf32>
    %92 = vector.broadcast %90 : vector<8x1xf32> to vector<8x256xf32>
    %93 = arith.minimumf %91, %92 : vector<8x256xf32>
    %94 = arith.addf %88, %93 : vector<8x256xf32>
    %95 = vector.extract_strided_slice %61 {offsets = [5, 0], sizes = [1, 256], strides = [1, 1]} : vector<8x256xf32> to vector<1x256xf32>
    %96 = vector.extract_strided_slice %64 {offsets = [0, 5], sizes = [8, 1], strides = [1, 1]} : vector<8x8xf32> to vector<8x1xf32>
    %97 = vector.broadcast %95 : vector<1x256xf32> to vector<8x256xf32>
    %98 = vector.broadcast %96 : vector<8x1xf32> to vector<8x256xf32>
    %99 = arith.minimumf %97, %98 : vector<8x256xf32>
    %100 = arith.addf %94, %99 : vector<8x256xf32>
    %101 = vector.extract_strided_slice %61 {offsets = [6, 0], sizes = [1, 256], strides = [1, 1]} : vector<8x256xf32> to vector<1x256xf32>
    %102 = vector.extract_strided_slice %64 {offsets = [0, 6], sizes = [8, 1], strides = [1, 1]} : vector<8x8xf32> to vector<8x1xf32>
    %103 = vector.broadcast %101 : vector<1x256xf32> to vector<8x256xf32>
    %104 = vector.broadcast %102 : vector<8x1xf32> to vector<8x256xf32>
    %105 = arith.minimumf %103, %104 : vector<8x256xf32>
    %106 = arith.addf %100, %105 : vector<8x256xf32>
    %107 = vector.extract_strided_slice %61 {offsets = [7, 0], sizes = [1, 256], strides = [1, 1]} : vector<8x256xf32> to vector<1x256xf32>
    %108 = vector.extract_strided_slice %64 {offsets = [0, 7], sizes = [8, 1], strides = [1, 1]} : vector<8x8xf32> to vector<8x1xf32>
    %109 = vector.broadcast %107 : vector<1x256xf32> to vector<8x256xf32>
    %110 = vector.broadcast %108 : vector<8x1xf32> to vector<8x256xf32>
    %111 = arith.minimumf %109, %110 : vector<8x256xf32>
    %112 = arith.addf %106, %111 : vector<8x256xf32>
    %cst_9 = arith.constant dense<0.000000e+00> : vector<256xf32>
    %113 = vector.multi_reduction <add>, %61, %cst_9 [0] : vector<8x256xf32> to vector<256xf32>
    %114 = vector.shape_cast %113 : vector<256xf32> to vector<1x256xf32>
    %115 = arith.addf %58, %114 : vector<1x256xf32>
    %c2_i32 = arith.constant 2 : i32
    %116 = arith.index_cast %c2_i32 : i32 to index
    %c0_10 = arith.constant 0 : index
    %c0_11 = arith.constant 0 : index
    %117 = vector.load %arg1[%116, %c0_10, %c0_11] : memref<9x8x256xf32, #tpu.memory_space<vmem>>, vector<1x8x256xf32>
    %118 = vector.shape_cast %117 : vector<1x8x256xf32> to vector<8x256xf32>
    %119 = arith.index_cast %c2_i32 : i32 to index
    %c0_12 = arith.constant 0 : index
    %c0_13 = arith.constant 0 : index
    %120 = vector.load %arg2[%119, %c0_12, %c0_13] : memref<9x8x8xf32, #tpu.memory_space<vmem>>, vector<1x8x8xf32>
    %121 = vector.shape_cast %120 : vector<1x8x8xf32> to vector<8x8xf32>
    %122 = vector.extract_strided_slice %118 {offsets = [0, 0], sizes = [1, 256], strides = [1, 1]} : vector<8x256xf32> to vector<1x256xf32>
    %123 = vector.extract_strided_slice %121 {offsets = [0, 0], sizes = [8, 1], strides = [1, 1]} : vector<8x8xf32> to vector<8x1xf32>
    %124 = vector.broadcast %122 : vector<1x256xf32> to vector<8x256xf32>
    %125 = vector.broadcast %123 : vector<8x1xf32> to vector<8x256xf32>
    %126 = arith.minimumf %124, %125 : vector<8x256xf32>
    %127 = arith.addf %112, %126 : vector<8x256xf32>
    %128 = vector.extract_strided_slice %118 {offsets = [1, 0], sizes = [1, 256], strides = [1, 1]} : vector<8x256xf32> to vector<1x256xf32>
    %129 = vector.extract_strided_slice %121 {offsets = [0, 1], sizes = [8, 1], strides = [1, 1]} : vector<8x8xf32> to vector<8x1xf32>
    %130 = vector.broadcast %128 : vector<1x256xf32> to vector<8x256xf32>
    %131 = vector.broadcast %129 : vector<8x1xf32> to vector<8x256xf32>
    %132 = arith.minimumf %130, %131 : vector<8x256xf32>
    %133 = arith.addf %127, %132 : vector<8x256xf32>
    %134 = vector.extract_strided_slice %118 {offsets = [2, 0], sizes = [1, 256], strides = [1, 1]} : vector<8x256xf32> to vector<1x256xf32>
    %135 = vector.extract_strided_slice %121 {offsets = [0, 2], sizes = [8, 1], strides = [1, 1]} : vector<8x8xf32> to vector<8x1xf32>
    %136 = vector.broadcast %134 : vector<1x256xf32> to vector<8x256xf32>
    %137 = vector.broadcast %135 : vector<8x1xf32> to vector<8x256xf32>
    %138 = arith.minimumf %136, %137 : vector<8x256xf32>
    %139 = arith.addf %133, %138 : vector<8x256xf32>
    %140 = vector.extract_strided_slice %118 {offsets = [3, 0], sizes = [1, 256], strides = [1, 1]} : vector<8x256xf32> to vector<1x256xf32>
    %141 = vector.extract_strided_slice %121 {offsets = [0, 3], sizes = [8, 1], strides = [1, 1]} : vector<8x8xf32> to vector<8x1xf32>
    %142 = vector.broadcast %140 : vector<1x256xf32> to vector<8x256xf32>
    %143 = vector.broadcast %141 : vector<8x1xf32> to vector<8x256xf32>
    %144 = arith.minimumf %142, %143 : vector<8x256xf32>
    %145 = arith.addf %139, %144 : vector<8x256xf32>
    %146 = vector.extract_strided_slice %118 {offsets = [4, 0], sizes = [1, 256], strides = [1, 1]} : vector<8x256xf32> to vector<1x256xf32>
    %147 = vector.extract_strided_slice %121 {offsets = [0, 4], sizes = [8, 1], strides = [1, 1]} : vector<8x8xf32> to vector<8x1xf32>
    %148 = vector.broadcast %146 : vector<1x256xf32> to vector<8x256xf32>
    %149 = vector.broadcast %147 : vector<8x1xf32> to vector<8x256xf32>
    %150 = arith.minimumf %148, %149 : vector<8x256xf32>
    %151 = arith.addf %145, %150 : vector<8x256xf32>
    %152 = vector.extract_strided_slice %118 {offsets = [5, 0], sizes = [1, 256], strides = [1, 1]} : vector<8x256xf32> to vector<1x256xf32>
    %153 = vector.extract_strided_slice %121 {offsets = [0, 5], sizes = [8, 1], strides = [1, 1]} : vector<8x8xf32> to vector<8x1xf32>
    %154 = vector.broadcast %152 : vector<1x256xf32> to vector<8x256xf32>
    %155 = vector.broadcast %153 : vector<8x1xf32> to vector<8x256xf32>
    %156 = arith.minimumf %154, %155 : vector<8x256xf32>
    %157 = arith.addf %151, %156 : vector<8x256xf32>
    %158 = vector.extract_strided_slice %118 {offsets = [6, 0], sizes = [1, 256], strides = [1, 1]} : vector<8x256xf32> to vector<1x256xf32>
    %159 = vector.extract_strided_slice %121 {offsets = [0, 6], sizes = [8, 1], strides = [1, 1]} : vector<8x8xf32> to vector<8x1xf32>
    %160 = vector.broadcast %158 : vector<1x256xf32> to vector<8x256xf32>
    %161 = vector.broadcast %159 : vector<8x1xf32> to vector<8x256xf32>
    %162 = arith.minimumf %160, %161 : vector<8x256xf32>
    %163 = arith.addf %157, %162 : vector<8x256xf32>
    %164 = vector.extract_strided_slice %118 {offsets = [7, 0], sizes = [1, 256], strides = [1, 1]} : vector<8x256xf32> to vector<1x256xf32>
    %165 = vector.extract_strided_slice %121 {offsets = [0, 7], sizes = [8, 1], strides = [1, 1]} : vector<8x8xf32> to vector<8x1xf32>
    %166 = vector.broadcast %164 : vector<1x256xf32> to vector<8x256xf32>
    %167 = vector.broadcast %165 : vector<8x1xf32> to vector<8x256xf32>
    %168 = arith.minimumf %166, %167 : vector<8x256xf32>
    %169 = arith.addf %163, %168 : vector<8x256xf32>
    %cst_14 = arith.constant dense<0.000000e+00> : vector<256xf32>
    %170 = vector.multi_reduction <add>, %118, %cst_14 [0] : vector<8x256xf32> to vector<256xf32>
    %171 = vector.shape_cast %170 : vector<256xf32> to vector<1x256xf32>
    %172 = arith.addf %115, %171 : vector<1x256xf32>
    %c3_i32 = arith.constant 3 : i32
    %173 = arith.index_cast %c3_i32 : i32 to index
    %c0_15 = arith.constant 0 : index
    %c0_16 = arith.constant 0 : index
    %174 = vector.load %arg1[%173, %c0_15, %c0_16] : memref<9x8x256xf32, #tpu.memory_space<vmem>>, vector<1x8x256xf32>
    %175 = vector.shape_cast %174 : vector<1x8x256xf32> to vector<8x256xf32>
    %176 = arith.index_cast %c3_i32 : i32 to index
    %c0_17 = arith.constant 0 : index
    %c0_18 = arith.constant 0 : index
    %177 = vector.load %arg2[%176, %c0_17, %c0_18] : memref<9x8x8xf32, #tpu.memory_space<vmem>>, vector<1x8x8xf32>
    %178 = vector.shape_cast %177 : vector<1x8x8xf32> to vector<8x8xf32>
    %179 = vector.extract_strided_slice %175 {offsets = [0, 0], sizes = [1, 256], strides = [1, 1]} : vector<8x256xf32> to vector<1x256xf32>
    %180 = vector.extract_strided_slice %178 {offsets = [0, 0], sizes = [8, 1], strides = [1, 1]} : vector<8x8xf32> to vector<8x1xf32>
    %181 = vector.broadcast %179 : vector<1x256xf32> to vector<8x256xf32>
    %182 = vector.broadcast %180 : vector<8x1xf32> to vector<8x256xf32>
    %183 = arith.minimumf %181, %182 : vector<8x256xf32>
    %184 = arith.addf %169, %183 : vector<8x256xf32>
    %185 = vector.extract_strided_slice %175 {offsets = [1, 0], sizes = [1, 256], strides = [1, 1]} : vector<8x256xf32> to vector<1x256xf32>
    %186 = vector.extract_strided_slice %178 {offsets = [0, 1], sizes = [8, 1], strides = [1, 1]} : vector<8x8xf32> to vector<8x1xf32>
    %187 = vector.broadcast %185 : vector<1x256xf32> to vector<8x256xf32>
    %188 = vector.broadcast %186 : vector<8x1xf32> to vector<8x256xf32>
    %189 = arith.minimumf %187, %188 : vector<8x256xf32>
    %190 = arith.addf %184, %189 : vector<8x256xf32>
    %191 = vector.extract_strided_slice %175 {offsets = [2, 0], sizes = [1, 256], strides = [1, 1]} : vector<8x256xf32> to vector<1x256xf32>
    %192 = vector.extract_strided_slice %178 {offsets = [0, 2], sizes = [8, 1], strides = [1, 1]} : vector<8x8xf32> to vector<8x1xf32>
    %193 = vector.broadcast %191 : vector<1x256xf32> to vector<8x256xf32>
    %194 = vector.broadcast %192 : vector<8x1xf32> to vector<8x256xf32>
    %195 = arith.minimumf %193, %194 : vector<8x256xf32>
    %196 = arith.addf %190, %195 : vector<8x256xf32>
    %197 = vector.extract_strided_slice %175 {offsets = [3, 0], sizes = [1, 256], strides = [1, 1]} : vector<8x256xf32> to vector<1x256xf32>
    %198 = vector.extract_strided_slice %178 {offsets = [0, 3], sizes = [8, 1], strides = [1, 1]} : vector<8x8xf32> to vector<8x1xf32>
    %199 = vector.broadcast %197 : vector<1x256xf32> to vector<8x256xf32>
    %200 = vector.broadcast %198 : vector<8x1xf32> to vector<8x256xf32>
    %201 = arith.minimumf %199, %200 : vector<8x256xf32>
    %202 = arith.addf %196, %201 : vector<8x256xf32>
    %203 = vector.extract_strided_slice %175 {offsets = [4, 0], sizes = [1, 256], strides = [1, 1]} : vector<8x256xf32> to vector<1x256xf32>
    %204 = vector.extract_strided_slice %178 {offsets = [0, 4], sizes = [8, 1], strides = [1, 1]} : vector<8x8xf32> to vector<8x1xf32>
    %205 = vector.broadcast %203 : vector<1x256xf32> to vector<8x256xf32>
    %206 = vector.broadcast %204 : vector<8x1xf32> to vector<8x256xf32>
    %207 = arith.minimumf %205, %206 : vector<8x256xf32>
    %208 = arith.addf %202, %207 : vector<8x256xf32>
    %209 = vector.extract_strided_slice %175 {offsets = [5, 0], sizes = [1, 256], strides = [1, 1]} : vector<8x256xf32> to vector<1x256xf32>
    %210 = vector.extract_strided_slice %178 {offsets = [0, 5], sizes = [8, 1], strides = [1, 1]} : vector<8x8xf32> to vector<8x1xf32>
    %211 = vector.broadcast %209 : vector<1x256xf32> to vector<8x256xf32>
    %212 = vector.broadcast %210 : vector<8x1xf32> to vector<8x256xf32>
    %213 = arith.minimumf %211, %212 : vector<8x256xf32>
    %214 = arith.addf %208, %213 : vector<8x256xf32>
    %215 = vector.extract_strided_slice %175 {offsets = [6, 0], sizes = [1, 256], strides = [1, 1]} : vector<8x256xf32> to vector<1x256xf32>
    %216 = vector.extract_strided_slice %178 {offsets = [0, 6], sizes = [8, 1], strides = [1, 1]} : vector<8x8xf32> to vector<8x1xf32>
    %217 = vector.broadcast %215 : vector<1x256xf32> to vector<8x256xf32>
    %218 = vector.broadcast %216 : vector<8x1xf32> to vector<8x256xf32>
    %219 = arith.minimumf %217, %218 : vector<8x256xf32>
    %220 = arith.addf %214, %219 : vector<8x256xf32>
    %221 = vector.extract_strided_slice %175 {offsets = [7, 0], sizes = [1, 256], strides = [1, 1]} : vector<8x256xf32> to vector<1x256xf32>
    %222 = vector.extract_strided_slice %178 {offsets = [0, 7], sizes = [8, 1], strides = [1, 1]} : vector<8x8xf32> to vector<8x1xf32>
    %223 = vector.broadcast %221 : vector<1x256xf32> to vector<8x256xf32>
    %224 = vector.broadcast %222 : vector<8x1xf32> to vector<8x256xf32>
    %225 = arith.minimumf %223, %224 : vector<8x256xf32>
    %226 = arith.addf %220, %225 : vector<8x256xf32>
    %cst_19 = arith.constant dense<0.000000e+00> : vector<256xf32>
    %227 = vector.multi_reduction <add>, %175, %cst_19 [0] : vector<8x256xf32> to vector<256xf32>
    %228 = vector.shape_cast %227 : vector<256xf32> to vector<1x256xf32>
    %229 = arith.addf %172, %228 : vector<1x256xf32>
    %c4_i32 = arith.constant 4 : i32
    %230 = arith.index_cast %c4_i32 : i32 to index
    %c0_20 = arith.constant 0 : index
    %c0_21 = arith.constant 0 : index
    %231 = vector.load %arg1[%230, %c0_20, %c0_21] : memref<9x8x256xf32, #tpu.memory_space<vmem>>, vector<1x8x256xf32>
    %232 = vector.shape_cast %231 : vector<1x8x256xf32> to vector<8x256xf32>
    %233 = arith.index_cast %c4_i32 : i32 to index
    %c0_22 = arith.constant 0 : index
    %c0_23 = arith.constant 0 : index
    %234 = vector.load %arg2[%233, %c0_22, %c0_23] : memref<9x8x8xf32, #tpu.memory_space<vmem>>, vector<1x8x8xf32>
    %235 = vector.shape_cast %234 : vector<1x8x8xf32> to vector<8x8xf32>
    %236 = vector.extract_strided_slice %232 {offsets = [0, 0], sizes = [1, 256], strides = [1, 1]} : vector<8x256xf32> to vector<1x256xf32>
    %237 = vector.extract_strided_slice %235 {offsets = [0, 0], sizes = [8, 1], strides = [1, 1]} : vector<8x8xf32> to vector<8x1xf32>
    %238 = vector.broadcast %236 : vector<1x256xf32> to vector<8x256xf32>
    %239 = vector.broadcast %237 : vector<8x1xf32> to vector<8x256xf32>
    %240 = arith.minimumf %238, %239 : vector<8x256xf32>
    %241 = arith.addf %226, %240 : vector<8x256xf32>
    %242 = vector.extract_strided_slice %232 {offsets = [1, 0], sizes = [1, 256], strides = [1, 1]} : vector<8x256xf32> to vector<1x256xf32>
    %243 = vector.extract_strided_slice %235 {offsets = [0, 1], sizes = [8, 1], strides = [1, 1]} : vector<8x8xf32> to vector<8x1xf32>
    %244 = vector.broadcast %242 : vector<1x256xf32> to vector<8x256xf32>
    %245 = vector.broadcast %243 : vector<8x1xf32> to vector<8x256xf32>
    %246 = arith.minimumf %244, %245 : vector<8x256xf32>
    %247 = arith.addf %241, %246 : vector<8x256xf32>
    %248 = vector.extract_strided_slice %232 {offsets = [2, 0], sizes = [1, 256], strides = [1, 1]} : vector<8x256xf32> to vector<1x256xf32>
    %249 = vector.extract_strided_slice %235 {offsets = [0, 2], sizes = [8, 1], strides = [1, 1]} : vector<8x8xf32> to vector<8x1xf32>
    %250 = vector.broadcast %248 : vector<1x256xf32> to vector<8x256xf32>
    %251 = vector.broadcast %249 : vector<8x1xf32> to vector<8x256xf32>
    %252 = arith.minimumf %250, %251 : vector<8x256xf32>
    %253 = arith.addf %247, %252 : vector<8x256xf32>
    %254 = vector.extract_strided_slice %232 {offsets = [3, 0], sizes = [1, 256], strides = [1, 1]} : vector<8x256xf32> to vector<1x256xf32>
    %255 = vector.extract_strided_slice %235 {offsets = [0, 3], sizes = [8, 1], strides = [1, 1]} : vector<8x8xf32> to vector<8x1xf32>
    %256 = vector.broadcast %254 : vector<1x256xf32> to vector<8x256xf32>
    %257 = vector.broadcast %255 : vector<8x1xf32> to vector<8x256xf32>
    %258 = arith.minimumf %256, %257 : vector<8x256xf32>
    %259 = arith.addf %253, %258 : vector<8x256xf32>
    %260 = vector.extract_strided_slice %232 {offsets = [4, 0], sizes = [1, 256], strides = [1, 1]} : vector<8x256xf32> to vector<1x256xf32>
    %261 = vector.extract_strided_slice %235 {offsets = [0, 4], sizes = [8, 1], strides = [1, 1]} : vector<8x8xf32> to vector<8x1xf32>
    %262 = vector.broadcast %260 : vector<1x256xf32> to vector<8x256xf32>
    %263 = vector.broadcast %261 : vector<8x1xf32> to vector<8x256xf32>
    %264 = arith.minimumf %262, %263 : vector<8x256xf32>
    %265 = arith.addf %259, %264 : vector<8x256xf32>
    %266 = vector.extract_strided_slice %232 {offsets = [5, 0], sizes = [1, 256], strides = [1, 1]} : vector<8x256xf32> to vector<1x256xf32>
    %267 = vector.extract_strided_slice %235 {offsets = [0, 5], sizes = [8, 1], strides = [1, 1]} : vector<8x8xf32> to vector<8x1xf32>
    %268 = vector.broadcast %266 : vector<1x256xf32> to vector<8x256xf32>
    %269 = vector.broadcast %267 : vector<8x1xf32> to vector<8x256xf32>
    %270 = arith.minimumf %268, %269 : vector<8x256xf32>
    %271 = arith.addf %265, %270 : vector<8x256xf32>
    %272 = vector.extract_strided_slice %232 {offsets = [6, 0], sizes = [1, 256], strides = [1, 1]} : vector<8x256xf32> to vector<1x256xf32>
    %273 = vector.extract_strided_slice %235 {offsets = [0, 6], sizes = [8, 1], strides = [1, 1]} : vector<8x8xf32> to vector<8x1xf32>
    %274 = vector.broadcast %272 : vector<1x256xf32> to vector<8x256xf32>
    %275 = vector.broadcast %273 : vector<8x1xf32> to vector<8x256xf32>
    %276 = arith.minimumf %274, %275 : vector<8x256xf32>
    %277 = arith.addf %271, %276 : vector<8x256xf32>
    %278 = vector.extract_strided_slice %232 {offsets = [7, 0], sizes = [1, 256], strides = [1, 1]} : vector<8x256xf32> to vector<1x256xf32>
    %279 = vector.extract_strided_slice %235 {offsets = [0, 7], sizes = [8, 1], strides = [1, 1]} : vector<8x8xf32> to vector<8x1xf32>
    %280 = vector.broadcast %278 : vector<1x256xf32> to vector<8x256xf32>
    %281 = vector.broadcast %279 : vector<8x1xf32> to vector<8x256xf32>
    %282 = arith.minimumf %280, %281 : vector<8x256xf32>
    %283 = arith.addf %277, %282 : vector<8x256xf32>
    %cst_24 = arith.constant dense<0.000000e+00> : vector<256xf32>
    %284 = vector.multi_reduction <add>, %232, %cst_24 [0] : vector<8x256xf32> to vector<256xf32>
    %285 = vector.shape_cast %284 : vector<256xf32> to vector<1x256xf32>
    %286 = arith.addf %229, %285 : vector<1x256xf32>
    %c5_i32 = arith.constant 5 : i32
    %287 = arith.index_cast %c5_i32 : i32 to index
    %c0_25 = arith.constant 0 : index
    %c0_26 = arith.constant 0 : index
    %288 = vector.load %arg1[%287, %c0_25, %c0_26] : memref<9x8x256xf32, #tpu.memory_space<vmem>>, vector<1x8x256xf32>
    %289 = vector.shape_cast %288 : vector<1x8x256xf32> to vector<8x256xf32>
    %290 = arith.index_cast %c5_i32 : i32 to index
    %c0_27 = arith.constant 0 : index
    %c0_28 = arith.constant 0 : index
    %291 = vector.load %arg2[%290, %c0_27, %c0_28] : memref<9x8x8xf32, #tpu.memory_space<vmem>>, vector<1x8x8xf32>
    %292 = vector.shape_cast %291 : vector<1x8x8xf32> to vector<8x8xf32>
    %293 = vector.extract_strided_slice %289 {offsets = [0, 0], sizes = [1, 256], strides = [1, 1]} : vector<8x256xf32> to vector<1x256xf32>
    %294 = vector.extract_strided_slice %292 {offsets = [0, 0], sizes = [8, 1], strides = [1, 1]} : vector<8x8xf32> to vector<8x1xf32>
    %295 = vector.broadcast %293 : vector<1x256xf32> to vector<8x256xf32>
    %296 = vector.broadcast %294 : vector<8x1xf32> to vector<8x256xf32>
    %297 = arith.minimumf %295, %296 : vector<8x256xf32>
    %298 = arith.addf %283, %297 : vector<8x256xf32>
    %299 = vector.extract_strided_slice %289 {offsets = [1, 0], sizes = [1, 256], strides = [1, 1]} : vector<8x256xf32> to vector<1x256xf32>
    %300 = vector.extract_strided_slice %292 {offsets = [0, 1], sizes = [8, 1], strides = [1, 1]} : vector<8x8xf32> to vector<8x1xf32>
    %301 = vector.broadcast %299 : vector<1x256xf32> to vector<8x256xf32>
    %302 = vector.broadcast %300 : vector<8x1xf32> to vector<8x256xf32>
    %303 = arith.minimumf %301, %302 : vector<8x256xf32>
    %304 = arith.addf %298, %303 : vector<8x256xf32>
    %305 = vector.extract_strided_slice %289 {offsets = [2, 0], sizes = [1, 256], strides = [1, 1]} : vector<8x256xf32> to vector<1x256xf32>
    %306 = vector.extract_strided_slice %292 {offsets = [0, 2], sizes = [8, 1], strides = [1, 1]} : vector<8x8xf32> to vector<8x1xf32>
    %307 = vector.broadcast %305 : vector<1x256xf32> to vector<8x256xf32>
    %308 = vector.broadcast %306 : vector<8x1xf32> to vector<8x256xf32>
    %309 = arith.minimumf %307, %308 : vector<8x256xf32>
    %310 = arith.addf %304, %309 : vector<8x256xf32>
    %311 = vector.extract_strided_slice %289 {offsets = [3, 0], sizes = [1, 256], strides = [1, 1]} : vector<8x256xf32> to vector<1x256xf32>
    %312 = vector.extract_strided_slice %292 {offsets = [0, 3], sizes = [8, 1], strides = [1, 1]} : vector<8x8xf32> to vector<8x1xf32>
    %313 = vector.broadcast %311 : vector<1x256xf32> to vector<8x256xf32>
    %314 = vector.broadcast %312 : vector<8x1xf32> to vector<8x256xf32>
    %315 = arith.minimumf %313, %314 : vector<8x256xf32>
    %316 = arith.addf %310, %315 : vector<8x256xf32>
    %317 = vector.extract_strided_slice %289 {offsets = [4, 0], sizes = [1, 256], strides = [1, 1]} : vector<8x256xf32> to vector<1x256xf32>
    %318 = vector.extract_strided_slice %292 {offsets = [0, 4], sizes = [8, 1], strides = [1, 1]} : vector<8x8xf32> to vector<8x1xf32>
    %319 = vector.broadcast %317 : vector<1x256xf32> to vector<8x256xf32>
    %320 = vector.broadcast %318 : vector<8x1xf32> to vector<8x256xf32>
    %321 = arith.minimumf %319, %320 : vector<8x256xf32>
    %322 = arith.addf %316, %321 : vector<8x256xf32>
    %323 = vector.extract_strided_slice %289 {offsets = [5, 0], sizes = [1, 256], strides = [1, 1]} : vector<8x256xf32> to vector<1x256xf32>
    %324 = vector.extract_strided_slice %292 {offsets = [0, 5], sizes = [8, 1], strides = [1, 1]} : vector<8x8xf32> to vector<8x1xf32>
    %325 = vector.broadcast %323 : vector<1x256xf32> to vector<8x256xf32>
    %326 = vector.broadcast %324 : vector<8x1xf32> to vector<8x256xf32>
    %327 = arith.minimumf %325, %326 : vector<8x256xf32>
    %328 = arith.addf %322, %327 : vector<8x256xf32>
    %329 = vector.extract_strided_slice %289 {offsets = [6, 0], sizes = [1, 256], strides = [1, 1]} : vector<8x256xf32> to vector<1x256xf32>
    %330 = vector.extract_strided_slice %292 {offsets = [0, 6], sizes = [8, 1], strides = [1, 1]} : vector<8x8xf32> to vector<8x1xf32>
    %331 = vector.broadcast %329 : vector<1x256xf32> to vector<8x256xf32>
    %332 = vector.broadcast %330 : vector<8x1xf32> to vector<8x256xf32>
    %333 = arith.minimumf %331, %332 : vector<8x256xf32>
    %334 = arith.addf %328, %333 : vector<8x256xf32>
    %335 = vector.extract_strided_slice %289 {offsets = [7, 0], sizes = [1, 256], strides = [1, 1]} : vector<8x256xf32> to vector<1x256xf32>
    %336 = vector.extract_strided_slice %292 {offsets = [0, 7], sizes = [8, 1], strides = [1, 1]} : vector<8x8xf32> to vector<8x1xf32>
    %337 = vector.broadcast %335 : vector<1x256xf32> to vector<8x256xf32>
    %338 = vector.broadcast %336 : vector<8x1xf32> to vector<8x256xf32>
    %339 = arith.minimumf %337, %338 : vector<8x256xf32>
    %340 = arith.addf %334, %339 : vector<8x256xf32>
    %cst_29 = arith.constant dense<0.000000e+00> : vector<256xf32>
    %341 = vector.multi_reduction <add>, %289, %cst_29 [0] : vector<8x256xf32> to vector<256xf32>
    %342 = vector.shape_cast %341 : vector<256xf32> to vector<1x256xf32>
    %343 = arith.addf %286, %342 : vector<1x256xf32>
    %c6_i32 = arith.constant 6 : i32
    %344 = arith.index_cast %c6_i32 : i32 to index
    %c0_30 = arith.constant 0 : index
    %c0_31 = arith.constant 0 : index
    %345 = vector.load %arg1[%344, %c0_30, %c0_31] : memref<9x8x256xf32, #tpu.memory_space<vmem>>, vector<1x8x256xf32>
    %346 = vector.shape_cast %345 : vector<1x8x256xf32> to vector<8x256xf32>
    %347 = arith.index_cast %c6_i32 : i32 to index
    %c0_32 = arith.constant 0 : index
    %c0_33 = arith.constant 0 : index
    %348 = vector.load %arg2[%347, %c0_32, %c0_33] : memref<9x8x8xf32, #tpu.memory_space<vmem>>, vector<1x8x8xf32>
    %349 = vector.shape_cast %348 : vector<1x8x8xf32> to vector<8x8xf32>
    %350 = vector.extract_strided_slice %346 {offsets = [0, 0], sizes = [1, 256], strides = [1, 1]} : vector<8x256xf32> to vector<1x256xf32>
    %351 = vector.extract_strided_slice %349 {offsets = [0, 0], sizes = [8, 1], strides = [1, 1]} : vector<8x8xf32> to vector<8x1xf32>
    %352 = vector.broadcast %350 : vector<1x256xf32> to vector<8x256xf32>
    %353 = vector.broadcast %351 : vector<8x1xf32> to vector<8x256xf32>
    %354 = arith.minimumf %352, %353 : vector<8x256xf32>
    %355 = arith.addf %340, %354 : vector<8x256xf32>
    %356 = vector.extract_strided_slice %346 {offsets = [1, 0], sizes = [1, 256], strides = [1, 1]} : vector<8x256xf32> to vector<1x256xf32>
    %357 = vector.extract_strided_slice %349 {offsets = [0, 1], sizes = [8, 1], strides = [1, 1]} : vector<8x8xf32> to vector<8x1xf32>
    %358 = vector.broadcast %356 : vector<1x256xf32> to vector<8x256xf32>
    %359 = vector.broadcast %357 : vector<8x1xf32> to vector<8x256xf32>
    %360 = arith.minimumf %358, %359 : vector<8x256xf32>
    %361 = arith.addf %355, %360 : vector<8x256xf32>
    %362 = vector.extract_strided_slice %346 {offsets = [2, 0], sizes = [1, 256], strides = [1, 1]} : vector<8x256xf32> to vector<1x256xf32>
    %363 = vector.extract_strided_slice %349 {offsets = [0, 2], sizes = [8, 1], strides = [1, 1]} : vector<8x8xf32> to vector<8x1xf32>
    %364 = vector.broadcast %362 : vector<1x256xf32> to vector<8x256xf32>
    %365 = vector.broadcast %363 : vector<8x1xf32> to vector<8x256xf32>
    %366 = arith.minimumf %364, %365 : vector<8x256xf32>
    %367 = arith.addf %361, %366 : vector<8x256xf32>
    %368 = vector.extract_strided_slice %346 {offsets = [3, 0], sizes = [1, 256], strides = [1, 1]} : vector<8x256xf32> to vector<1x256xf32>
    %369 = vector.extract_strided_slice %349 {offsets = [0, 3], sizes = [8, 1], strides = [1, 1]} : vector<8x8xf32> to vector<8x1xf32>
    %370 = vector.broadcast %368 : vector<1x256xf32> to vector<8x256xf32>
    %371 = vector.broadcast %369 : vector<8x1xf32> to vector<8x256xf32>
    %372 = arith.minimumf %370, %371 : vector<8x256xf32>
    %373 = arith.addf %367, %372 : vector<8x256xf32>
    %374 = vector.extract_strided_slice %346 {offsets = [4, 0], sizes = [1, 256], strides = [1, 1]} : vector<8x256xf32> to vector<1x256xf32>
    %375 = vector.extract_strided_slice %349 {offsets = [0, 4], sizes = [8, 1], strides = [1, 1]} : vector<8x8xf32> to vector<8x1xf32>
    %376 = vector.broadcast %374 : vector<1x256xf32> to vector<8x256xf32>
    %377 = vector.broadcast %375 : vector<8x1xf32> to vector<8x256xf32>
    %378 = arith.minimumf %376, %377 : vector<8x256xf32>
    %379 = arith.addf %373, %378 : vector<8x256xf32>
    %380 = vector.extract_strided_slice %346 {offsets = [5, 0], sizes = [1, 256], strides = [1, 1]} : vector<8x256xf32> to vector<1x256xf32>
    %381 = vector.extract_strided_slice %349 {offsets = [0, 5], sizes = [8, 1], strides = [1, 1]} : vector<8x8xf32> to vector<8x1xf32>
    %382 = vector.broadcast %380 : vector<1x256xf32> to vector<8x256xf32>
    %383 = vector.broadcast %381 : vector<8x1xf32> to vector<8x256xf32>
    %384 = arith.minimumf %382, %383 : vector<8x256xf32>
    %385 = arith.addf %379, %384 : vector<8x256xf32>
    %386 = vector.extract_strided_slice %346 {offsets = [6, 0], sizes = [1, 256], strides = [1, 1]} : vector<8x256xf32> to vector<1x256xf32>
    %387 = vector.extract_strided_slice %349 {offsets = [0, 6], sizes = [8, 1], strides = [1, 1]} : vector<8x8xf32> to vector<8x1xf32>
    %388 = vector.broadcast %386 : vector<1x256xf32> to vector<8x256xf32>
    %389 = vector.broadcast %387 : vector<8x1xf32> to vector<8x256xf32>
    %390 = arith.minimumf %388, %389 : vector<8x256xf32>
    %391 = arith.addf %385, %390 : vector<8x256xf32>
    %392 = vector.extract_strided_slice %346 {offsets = [7, 0], sizes = [1, 256], strides = [1, 1]} : vector<8x256xf32> to vector<1x256xf32>
    %393 = vector.extract_strided_slice %349 {offsets = [0, 7], sizes = [8, 1], strides = [1, 1]} : vector<8x8xf32> to vector<8x1xf32>
    %394 = vector.broadcast %392 : vector<1x256xf32> to vector<8x256xf32>
    %395 = vector.broadcast %393 : vector<8x1xf32> to vector<8x256xf32>
    %396 = arith.minimumf %394, %395 : vector<8x256xf32>
    %397 = arith.addf %391, %396 : vector<8x256xf32>
    %cst_34 = arith.constant dense<0.000000e+00> : vector<256xf32>
    %398 = vector.multi_reduction <add>, %346, %cst_34 [0] : vector<8x256xf32> to vector<256xf32>
    %399 = vector.shape_cast %398 : vector<256xf32> to vector<1x256xf32>
    %400 = arith.addf %343, %399 : vector<1x256xf32>
    %c7_i32 = arith.constant 7 : i32
    %401 = arith.index_cast %c7_i32 : i32 to index
    %c0_35 = arith.constant 0 : index
    %c0_36 = arith.constant 0 : index
    %402 = vector.load %arg1[%401, %c0_35, %c0_36] : memref<9x8x256xf32, #tpu.memory_space<vmem>>, vector<1x8x256xf32>
    %403 = vector.shape_cast %402 : vector<1x8x256xf32> to vector<8x256xf32>
    %404 = arith.index_cast %c7_i32 : i32 to index
    %c0_37 = arith.constant 0 : index
    %c0_38 = arith.constant 0 : index
    %405 = vector.load %arg2[%404, %c0_37, %c0_38] : memref<9x8x8xf32, #tpu.memory_space<vmem>>, vector<1x8x8xf32>
    %406 = vector.shape_cast %405 : vector<1x8x8xf32> to vector<8x8xf32>
    %407 = vector.extract_strided_slice %403 {offsets = [0, 0], sizes = [1, 256], strides = [1, 1]} : vector<8x256xf32> to vector<1x256xf32>
    %408 = vector.extract_strided_slice %406 {offsets = [0, 0], sizes = [8, 1], strides = [1, 1]} : vector<8x8xf32> to vector<8x1xf32>
    %409 = vector.broadcast %407 : vector<1x256xf32> to vector<8x256xf32>
    %410 = vector.broadcast %408 : vector<8x1xf32> to vector<8x256xf32>
    %411 = arith.minimumf %409, %410 : vector<8x256xf32>
    %412 = arith.addf %397, %411 : vector<8x256xf32>
    %413 = vector.extract_strided_slice %403 {offsets = [1, 0], sizes = [1, 256], strides = [1, 1]} : vector<8x256xf32> to vector<1x256xf32>
    %414 = vector.extract_strided_slice %406 {offsets = [0, 1], sizes = [8, 1], strides = [1, 1]} : vector<8x8xf32> to vector<8x1xf32>
    %415 = vector.broadcast %413 : vector<1x256xf32> to vector<8x256xf32>
    %416 = vector.broadcast %414 : vector<8x1xf32> to vector<8x256xf32>
    %417 = arith.minimumf %415, %416 : vector<8x256xf32>
    %418 = arith.addf %412, %417 : vector<8x256xf32>
    %419 = vector.extract_strided_slice %403 {offsets = [2, 0], sizes = [1, 256], strides = [1, 1]} : vector<8x256xf32> to vector<1x256xf32>
    %420 = vector.extract_strided_slice %406 {offsets = [0, 2], sizes = [8, 1], strides = [1, 1]} : vector<8x8xf32> to vector<8x1xf32>
    %421 = vector.broadcast %419 : vector<1x256xf32> to vector<8x256xf32>
    %422 = vector.broadcast %420 : vector<8x1xf32> to vector<8x256xf32>
    %423 = arith.minimumf %421, %422 : vector<8x256xf32>
    %424 = arith.addf %418, %423 : vector<8x256xf32>
    %425 = vector.extract_strided_slice %403 {offsets = [3, 0], sizes = [1, 256], strides = [1, 1]} : vector<8x256xf32> to vector<1x256xf32>
    %426 = vector.extract_strided_slice %406 {offsets = [0, 3], sizes = [8, 1], strides = [1, 1]} : vector<8x8xf32> to vector<8x1xf32>
    %427 = vector.broadcast %425 : vector<1x256xf32> to vector<8x256xf32>
    %428 = vector.broadcast %426 : vector<8x1xf32> to vector<8x256xf32>
    %429 = arith.minimumf %427, %428 : vector<8x256xf32>
    %430 = arith.addf %424, %429 : vector<8x256xf32>
    %431 = vector.extract_strided_slice %403 {offsets = [4, 0], sizes = [1, 256], strides = [1, 1]} : vector<8x256xf32> to vector<1x256xf32>
    %432 = vector.extract_strided_slice %406 {offsets = [0, 4], sizes = [8, 1], strides = [1, 1]} : vector<8x8xf32> to vector<8x1xf32>
    %433 = vector.broadcast %431 : vector<1x256xf32> to vector<8x256xf32>
    %434 = vector.broadcast %432 : vector<8x1xf32> to vector<8x256xf32>
    %435 = arith.minimumf %433, %434 : vector<8x256xf32>
    %436 = arith.addf %430, %435 : vector<8x256xf32>
    %437 = vector.extract_strided_slice %403 {offsets = [5, 0], sizes = [1, 256], strides = [1, 1]} : vector<8x256xf32> to vector<1x256xf32>
    %438 = vector.extract_strided_slice %406 {offsets = [0, 5], sizes = [8, 1], strides = [1, 1]} : vector<8x8xf32> to vector<8x1xf32>
    %439 = vector.broadcast %437 : vector<1x256xf32> to vector<8x256xf32>
    %440 = vector.broadcast %438 : vector<8x1xf32> to vector<8x256xf32>
    %441 = arith.minimumf %439, %440 : vector<8x256xf32>
    %442 = arith.addf %436, %441 : vector<8x256xf32>
    %443 = vector.extract_strided_slice %403 {offsets = [6, 0], sizes = [1, 256], strides = [1, 1]} : vector<8x256xf32> to vector<1x256xf32>
    %444 = vector.extract_strided_slice %406 {offsets = [0, 6], sizes = [8, 1], strides = [1, 1]} : vector<8x8xf32> to vector<8x1xf32>
    %445 = vector.broadcast %443 : vector<1x256xf32> to vector<8x256xf32>
    %446 = vector.broadcast %444 : vector<8x1xf32> to vector<8x256xf32>
    %447 = arith.minimumf %445, %446 : vector<8x256xf32>
    %448 = arith.addf %442, %447 : vector<8x256xf32>
    %449 = vector.extract_strided_slice %403 {offsets = [7, 0], sizes = [1, 256], strides = [1, 1]} : vector<8x256xf32> to vector<1x256xf32>
    %450 = vector.extract_strided_slice %406 {offsets = [0, 7], sizes = [8, 1], strides = [1, 1]} : vector<8x8xf32> to vector<8x1xf32>
    %451 = vector.broadcast %449 : vector<1x256xf32> to vector<8x256xf32>
    %452 = vector.broadcast %450 : vector<8x1xf32> to vector<8x256xf32>
    %453 = arith.minimumf %451, %452 : vector<8x256xf32>
    %454 = arith.addf %448, %453 : vector<8x256xf32>
    %cst_39 = arith.constant dense<0.000000e+00> : vector<256xf32>
    %455 = vector.multi_reduction <add>, %403, %cst_39 [0] : vector<8x256xf32> to vector<256xf32>
    %456 = vector.shape_cast %455 : vector<256xf32> to vector<1x256xf32>
    %457 = arith.addf %400, %456 : vector<1x256xf32>
    %c8_i32 = arith.constant 8 : i32
    %458 = arith.index_cast %c8_i32 : i32 to index
    %c0_40 = arith.constant 0 : index
    %c0_41 = arith.constant 0 : index
    %459 = vector.load %arg1[%458, %c0_40, %c0_41] : memref<9x8x256xf32, #tpu.memory_space<vmem>>, vector<1x8x256xf32>
    %460 = vector.shape_cast %459 : vector<1x8x256xf32> to vector<8x256xf32>
    %461 = arith.index_cast %c8_i32 : i32 to index
    %c0_42 = arith.constant 0 : index
    %c0_43 = arith.constant 0 : index
    %462 = vector.load %arg2[%461, %c0_42, %c0_43] : memref<9x8x8xf32, #tpu.memory_space<vmem>>, vector<1x8x8xf32>
    %463 = vector.shape_cast %462 : vector<1x8x8xf32> to vector<8x8xf32>
    %464 = vector.extract_strided_slice %460 {offsets = [0, 0], sizes = [1, 256], strides = [1, 1]} : vector<8x256xf32> to vector<1x256xf32>
    %465 = vector.extract_strided_slice %463 {offsets = [0, 0], sizes = [8, 1], strides = [1, 1]} : vector<8x8xf32> to vector<8x1xf32>
    %466 = vector.broadcast %464 : vector<1x256xf32> to vector<8x256xf32>
    %467 = vector.broadcast %465 : vector<8x1xf32> to vector<8x256xf32>
    %468 = arith.minimumf %466, %467 : vector<8x256xf32>
    %469 = arith.addf %454, %468 : vector<8x256xf32>
    %470 = vector.extract_strided_slice %460 {offsets = [1, 0], sizes = [1, 256], strides = [1, 1]} : vector<8x256xf32> to vector<1x256xf32>
    %471 = vector.extract_strided_slice %463 {offsets = [0, 1], sizes = [8, 1], strides = [1, 1]} : vector<8x8xf32> to vector<8x1xf32>
    %472 = vector.broadcast %470 : vector<1x256xf32> to vector<8x256xf32>
    %473 = vector.broadcast %471 : vector<8x1xf32> to vector<8x256xf32>
    %474 = arith.minimumf %472, %473 : vector<8x256xf32>
    %475 = arith.addf %469, %474 : vector<8x256xf32>
    %476 = vector.extract_strided_slice %460 {offsets = [2, 0], sizes = [1, 256], strides = [1, 1]} : vector<8x256xf32> to vector<1x256xf32>
    %477 = vector.extract_strided_slice %463 {offsets = [0, 2], sizes = [8, 1], strides = [1, 1]} : vector<8x8xf32> to vector<8x1xf32>
    %478 = vector.broadcast %476 : vector<1x256xf32> to vector<8x256xf32>
    %479 = vector.broadcast %477 : vector<8x1xf32> to vector<8x256xf32>
    %480 = arith.minimumf %478, %479 : vector<8x256xf32>
    %481 = arith.addf %475, %480 : vector<8x256xf32>
    %482 = vector.extract_strided_slice %460 {offsets = [3, 0], sizes = [1, 256], strides = [1, 1]} : vector<8x256xf32> to vector<1x256xf32>
    %483 = vector.extract_strided_slice %463 {offsets = [0, 3], sizes = [8, 1], strides = [1, 1]} : vector<8x8xf32> to vector<8x1xf32>
    %484 = vector.broadcast %482 : vector<1x256xf32> to vector<8x256xf32>
    %485 = vector.broadcast %483 : vector<8x1xf32> to vector<8x256xf32>
    %486 = arith.minimumf %484, %485 : vector<8x256xf32>
    %487 = arith.addf %481, %486 : vector<8x256xf32>
    %488 = vector.extract_strided_slice %460 {offsets = [4, 0], sizes = [1, 256], strides = [1, 1]} : vector<8x256xf32> to vector<1x256xf32>
    %489 = vector.extract_strided_slice %463 {offsets = [0, 4], sizes = [8, 1], strides = [1, 1]} : vector<8x8xf32> to vector<8x1xf32>
    %490 = vector.broadcast %488 : vector<1x256xf32> to vector<8x256xf32>
    %491 = vector.broadcast %489 : vector<8x1xf32> to vector<8x256xf32>
    %492 = arith.minimumf %490, %491 : vector<8x256xf32>
    %493 = arith.addf %487, %492 : vector<8x256xf32>
    %494 = vector.extract_strided_slice %460 {offsets = [5, 0], sizes = [1, 256], strides = [1, 1]} : vector<8x256xf32> to vector<1x256xf32>
    %495 = vector.extract_strided_slice %463 {offsets = [0, 5], sizes = [8, 1], strides = [1, 1]} : vector<8x8xf32> to vector<8x1xf32>
    %496 = vector.broadcast %494 : vector<1x256xf32> to vector<8x256xf32>
    %497 = vector.broadcast %495 : vector<8x1xf32> to vector<8x256xf32>
    %498 = arith.minimumf %496, %497 : vector<8x256xf32>
    %499 = arith.addf %493, %498 : vector<8x256xf32>
    %500 = vector.extract_strided_slice %460 {offsets = [6, 0], sizes = [1, 256], strides = [1, 1]} : vector<8x256xf32> to vector<1x256xf32>
    %501 = vector.extract_strided_slice %463 {offsets = [0, 6], sizes = [8, 1], strides = [1, 1]} : vector<8x8xf32> to vector<8x1xf32>
    %502 = vector.broadcast %500 : vector<1x256xf32> to vector<8x256xf32>
    %503 = vector.broadcast %501 : vector<8x1xf32> to vector<8x256xf32>
    %504 = arith.minimumf %502, %503 : vector<8x256xf32>
    %505 = arith.addf %499, %504 : vector<8x256xf32>
    %506 = vector.extract_strided_slice %460 {offsets = [7, 0], sizes = [1, 256], strides = [1, 1]} : vector<8x256xf32> to vector<1x256xf32>
    %507 = vector.extract_strided_slice %463 {offsets = [0, 7], sizes = [8, 1], strides = [1, 1]} : vector<8x8xf32> to vector<8x1xf32>
    %508 = vector.broadcast %506 : vector<1x256xf32> to vector<8x256xf32>
    %509 = vector.broadcast %507 : vector<8x1xf32> to vector<8x256xf32>
    %510 = arith.minimumf %508, %509 : vector<8x256xf32>
    %511 = arith.addf %505, %510 : vector<8x256xf32>
    %cst_44 = arith.constant dense<0.000000e+00> : vector<256xf32>
    %512 = vector.multi_reduction <add>, %460, %cst_44 [0] : vector<8x256xf32> to vector<256xf32>
    %513 = vector.shape_cast %512 : vector<256xf32> to vector<1x256xf32>
    %514 = arith.addf %457, %513 : vector<1x256xf32>
    %c9_i32 = arith.constant 9 : i32
    %cst_45 = arith.constant 2.000000e+00 : f32
    %515 = vector.broadcast %cst_45 : f32 to vector<8x256xf32>
    %516 = arith.mulf %515, %511 : vector<8x256xf32>
    %517 = vector.broadcast %514 : vector<1x256xf32> to vector<8x256xf32>
    %518 = arith.subf %516, %517 : vector<8x256xf32>
    %c0_46 = arith.constant 0 : index
    %c0_47 = arith.constant 0 : index
    %519 = vector.load %arg3[%c0_46, %c0_47] : memref<8x1xf32, #tpu.memory_space<vmem>>, vector<8x1xf32>
    %520 = vector.broadcast %519 : vector<8x1xf32> to vector<8x256xf32>
    %521 = arith.subf %518, %520 : vector<8x256xf32>
    %c0_48 = arith.constant 0 : index
    %c0_49 = arith.constant 0 : index
    %522 = vector.load %arg4[%c0_48, %c0_49] : memref<8x256xf32, #tpu.memory_space<vmem>>, vector<8x256xf32>
    tpu.vector_store %arg4[%c0_48, %c0_49], %521 {strides = array<i32>} : memref<8x256xf32, #tpu.memory_space<vmem>>, vector<8x256xf32>,
    %523 = tpu.iota {dimensions = array<i32: 1>} : vector<1x256xi32>
    %c256_i32 = arith.constant 256 : i32
    %524 = arith.muli %arg0, %c256_i32 : i32
    %525 = vector.broadcast %524 : i32 to vector<1x256xi32>
    %526 = arith.addi %523, %525 : vector<1x256xi32>
    %c512_i32 = arith.constant 512 : i32
    %527 = vector.broadcast %c512_i32 : i32 to vector<1x256xi32>
    %528 = arith.cmpi slt, %526, %527 : vector<1x256xi32>
    %c256_i32_50 = arith.constant 256 : i32
    %529 = arith.muli %arg0, %c256_i32_50 : i32
    %c512_i32_51 = arith.constant 512 : i32
    %530 = arith.subi %c512_i32_51, %529 : i32
    %c256_i32_52 = arith.constant 256 : i32
    %531 = arith.minsi %c256_i32_52, %530 : i32
    %532 = arith.sitofp %531 : i32 to f32
    %cst_53 = arith.constant 0.000000e+00 : f32
    %533 = vector.shape_cast %528 : vector<1x256xi1> to vector<1x256xi1>
    %534 = vector.broadcast %533 : vector<1x256xi1> to vector<8x256xi1>
    %535 = vector.broadcast %cst_53 : f32 to vector<8x256xf32>
    %536 = arith.select %534, %521, %535 : vector<8x256xi1>, vector<8x256xf32>
    %cst_54 = arith.constant dense<0.000000e+00> : vector<8xf32>
    %537 = vector.multi_reduction <add>, %536, %cst_54 [1] : vector<8x256xf32> to vector<8xf32>
    %538 = vector.shape_cast %537 : vector<8xf32> to vector<8x1xf32>
    %539 = vector.broadcast %532 : f32 to vector<8x1xf32>
    %540 = arith.divf %538, %539 : vector<8x1xf32>
    %541 = vector.broadcast %540 : vector<8x1xf32> to vector<8x256xf32>
    %542 = arith.subf %521, %541 : vector<8x256xf32>
    %cst_55 = arith.constant 0.000000e+00 : f32
    %543 = vector.shape_cast %528 : vector<1x256xi1> to vector<1x256xi1>
    %544 = vector.broadcast %543 : vector<1x256xi1> to vector<8x256xi1>
    %545 = vector.broadcast %cst_55 : f32 to vector<8x256xf32>
    %546 = arith.select %544, %542, %545 : vector<8x256xi1>, vector<8x256xf32>
    %547 = arith.mulf %546, %546 : vector<8x256xf32>
    %cst_56 = arith.constant dense<0.000000e+00> : vector<8xf32>
    %548 = vector.multi_reduction <add>, %547, %cst_56 [1] : vector<8x256xf32> to vector<8xf32>
    %549 = vector.shape_cast %548 : vector<8xf32> to vector<8x1xf32>
    %550 = tpu.concatenate %538, %549 in 1 : vector<8x1xf32>, vector<8x1xf32> -> vector<8x2xf32>
    %551 = vector.shape_cast %550 : vector<8x2xf32> to vector<1x8x2xf32>
    %c0_57 = arith.constant 0 : index
    %c0_58 = arith.constant 0 : index
    %c0_59 = arith.constant 0 : index
    %552 = vector.load %arg5[%c0_57, %c0_58, %c0_59] : memref<1x8x2xf32, #tpu.memory_space<vmem>>, vector<1x8x2xf32>
    tpu.vector_store %arg5[%c0_57, %c0_58, %c0_59], %551 {strides = array<i32>} : memref<1x8x2xf32, #tpu.memory_space<vmem>>, vector<1x8x2xf32>,
    return
  }
  func.func @transform_0(%arg0: i32) -> (i32, i32, i32) {
    %c0_i32 = arith.constant 0 : i32
    %c0_i32_0 = arith.constant 0 : i32
    %c0_i32_1 = arith.constant 0 : i32
    return %c0_i32, %c0_i32_0, %arg0 : i32, i32, i32
  }
  func.func @transform_1(%arg0: i32) -> (i32, i32, i32) {
    %c0_i32 = arith.constant 0 : i32
    %c0_i32_0 = arith.constant 0 : i32
    %c0_i32_1 = arith.constant 0 : i32
    %c0_i32_2 = arith.constant 0 : i32
    return %c0_i32, %c0_i32_0, %c0_i32_1 : i32, i32, i32
  }
  func.func @transform_2(%arg0: i32) -> (i32, i32) {
    %c0_i32 = arith.constant 0 : i32
    %c0_i32_0 = arith.constant 0 : i32
    %c0_i32_1 = arith.constant 0 : i32
    return %c0_i32, %c0_i32_0 : i32, i32
  }
  func.func @transform_3(%arg0: i32) -> (i32, i32) {
    %c0_i32 = arith.constant 0 : i32
    %c0_i32_0 = arith.constant 0 : i32
    return %c0_i32, %arg0 : i32, i32
  }
  func.func @transform_4(%arg0: i32) -> (i32, i32, i32) {
    %c0_i32 = arith.constant 0 : i32
    %c0_i32_0 = arith.constant 0 : i32
    %c0_i32_1 = arith.constant 0 : i32
    return %arg0, %c0_i32, %c0_i32_0 : i32, i32, i32
  }
}

module attributes {stable_mosaic.version = 11 : i64} {
  func.func @_bn_relu_kernel(%arg0: i32, %arg1: memref<8x256xf32, #tpu.memory_space<vmem>>, %arg2: memref<8x1xf32, #tpu.memory_space<vmem>>, %arg3: memref<8x1xf32, #tpu.memory_space<vmem>>, %arg4: memref<8x256xf32, #tpu.memory_space<vmem>>) attributes {dimension_semantics = [#tpu.dimension_semantics<parallel>], iteration_bounds = array<i64: 2>, scalar_prefetch = 0 : i64, scratch_operands = 0 : i64, tpu.core_type = #tpu.core_type<tc>, window_params = [{transform_indices = @transform_0, window_bounds = array<i64: 8, 256>}, {pipeline_mode = #tpu.pipeline_mode<synchronous>, transform_indices = @transform_1, window_bounds = array<i64: 8, 1>}, {pipeline_mode = #tpu.pipeline_mode<synchronous>, transform_indices = @transform_2, window_bounds = array<i64: 8, 1>}, {transform_indices = @transform_3, window_bounds = array<i64: 8, 256>}]} {
    %c0 = arith.constant 0 : index
    %c0_0 = arith.constant 0 : index
    %0 = vector.load %arg1[%c0, %c0_0] : memref<8x256xf32, #tpu.memory_space<vmem>>, vector<8x256xf32>
    %c0_1 = arith.constant 0 : index
    %c0_2 = arith.constant 0 : index
    %1 = vector.load %arg2[%c0_1, %c0_2] : memref<8x1xf32, #tpu.memory_space<vmem>>, vector<8x1xf32>
    %2 = vector.broadcast %1 : vector<8x1xf32> to vector<8x256xf32>
    %3 = arith.mulf %0, %2 : vector<8x256xf32>
    %c0_3 = arith.constant 0 : index
    %c0_4 = arith.constant 0 : index
    %4 = vector.load %arg3[%c0_3, %c0_4] : memref<8x1xf32, #tpu.memory_space<vmem>>, vector<8x1xf32>
    %5 = vector.broadcast %4 : vector<8x1xf32> to vector<8x256xf32>
    %6 = arith.addf %3, %5 : vector<8x256xf32>
    %cst = arith.constant 0.000000e+00 : f32
    %7 = vector.broadcast %cst : f32 to vector<8x256xf32>
    %8 = arith.maximumf %6, %7 : vector<8x256xf32>
    %c0_5 = arith.constant 0 : index
    %c0_6 = arith.constant 0 : index
    %9 = vector.load %arg4[%c0_5, %c0_6] : memref<8x256xf32, #tpu.memory_space<vmem>>, vector<8x256xf32>
    tpu.vector_store %arg4[%c0_5, %c0_6], %8 {strides = array<i32>} : memref<8x256xf32, #tpu.memory_space<vmem>>, vector<8x256xf32>,
    return
  }
  func.func @transform_0(%arg0: i32) -> (i32, i32) {
    %c0_i32 = arith.constant 0 : i32
    %c0_i32_0 = arith.constant 0 : i32
    return %c0_i32, %arg0 : i32, i32
  }
  func.func @transform_1(%arg0: i32) -> (i32, i32) {
    %c0_i32 = arith.constant 0 : i32
    %c0_i32_0 = arith.constant 0 : i32
    %c0_i32_1 = arith.constant 0 : i32
    return %c0_i32, %c0_i32_0 : i32, i32
  }
  func.func @transform_2(%arg0: i32) -> (i32, i32) {
    %c0_i32 = arith.constant 0 : i32
    %c0_i32_0 = arith.constant 0 : i32
    %c0_i32_1 = arith.constant 0 : i32
    return %c0_i32, %c0_i32_0 : i32, i32
  }
  func.func @transform_3(%arg0: i32) -> (i32, i32) {
    %c0_i32 = arith.constant 0 : i32
    %c0_i32_0 = arith.constant 0 : i32
    return %c0_i32, %arg0 : i32, i32
  }
}

module attributes {stable_mosaic.version = 11 : i64} {
  func.func @_bn_add_relu_kernel(%arg0: i32, %arg1: memref<8x256xf32, #tpu.memory_space<vmem>>, %arg2: memref<8x256xf32, #tpu.memory_space<vmem>>, %arg3: memref<8x1xf32, #tpu.memory_space<vmem>>, %arg4: memref<8x1xf32, #tpu.memory_space<vmem>>, %arg5: memref<8x256xf32, #tpu.memory_space<vmem>>) attributes {dimension_semantics = [#tpu.dimension_semantics<parallel>], iteration_bounds = array<i64: 2>, scalar_prefetch = 0 : i64, scratch_operands = 0 : i64, tpu.core_type = #tpu.core_type<tc>, window_params = [{transform_indices = @transform_0, window_bounds = array<i64: 8, 256>}, {transform_indices = @transform_1, window_bounds = array<i64: 8, 256>}, {pipeline_mode = #tpu.pipeline_mode<synchronous>, transform_indices = @transform_2, window_bounds = array<i64: 8, 1>}, {pipeline_mode = #tpu.pipeline_mode<synchronous>, transform_indices = @transform_3, window_bounds = array<i64: 8, 1>}, {transform_indices = @transform_4, window_bounds = array<i64: 8, 256>}]} {
    %c0 = arith.constant 0 : index
    %c0_0 = arith.constant 0 : index
    %0 = vector.load %arg1[%c0, %c0_0] : memref<8x256xf32, #tpu.memory_space<vmem>>, vector<8x256xf32>
    %c0_1 = arith.constant 0 : index
    %c0_2 = arith.constant 0 : index
    %1 = vector.load %arg3[%c0_1, %c0_2] : memref<8x1xf32, #tpu.memory_space<vmem>>, vector<8x1xf32>
    %2 = vector.broadcast %1 : vector<8x1xf32> to vector<8x256xf32>
    %3 = arith.mulf %0, %2 : vector<8x256xf32>
    %c0_3 = arith.constant 0 : index
    %c0_4 = arith.constant 0 : index
    %4 = vector.load %arg4[%c0_3, %c0_4] : memref<8x1xf32, #tpu.memory_space<vmem>>, vector<8x1xf32>
    %5 = vector.broadcast %4 : vector<8x1xf32> to vector<8x256xf32>
    %6 = arith.addf %3, %5 : vector<8x256xf32>
    %c0_5 = arith.constant 0 : index
    %c0_6 = arith.constant 0 : index
    %7 = vector.load %arg2[%c0_5, %c0_6] : memref<8x256xf32, #tpu.memory_space<vmem>>, vector<8x256xf32>
    %8 = arith.addf %6, %7 : vector<8x256xf32>
    %cst = arith.constant 0.000000e+00 : f32
    %9 = vector.broadcast %cst : f32 to vector<8x256xf32>
    %10 = arith.maximumf %8, %9 : vector<8x256xf32>
    %c0_7 = arith.constant 0 : index
    %c0_8 = arith.constant 0 : index
    %11 = vector.load %arg5[%c0_7, %c0_8] : memref<8x256xf32, #tpu.memory_space<vmem>>, vector<8x256xf32>
    tpu.vector_store %arg5[%c0_7, %c0_8], %10 {strides = array<i32>} : memref<8x256xf32, #tpu.memory_space<vmem>>, vector<8x256xf32>,
    return
  }
  func.func @transform_0(%arg0: i32) -> (i32, i32) {
    %c0_i32 = arith.constant 0 : i32
    %c0_i32_0 = arith.constant 0 : i32
    return %c0_i32, %arg0 : i32, i32
  }
  func.func @transform_1(%arg0: i32) -> (i32, i32) {
    %c0_i32 = arith.constant 0 : i32
    %c0_i32_0 = arith.constant 0 : i32
    return %c0_i32, %arg0 : i32, i32
  }
  func.func @transform_2(%arg0: i32) -> (i32, i32) {
    %c0_i32 = arith.constant 0 : i32
    %c0_i32_0 = arith.constant 0 : i32
    %c0_i32_1 = arith.constant 0 : i32
    return %c0_i32, %c0_i32_0 : i32, i32
  }
  func.func @transform_3(%arg0: i32) -> (i32, i32) {
    %c0_i32 = arith.constant 0 : i32
    %c0_i32_0 = arith.constant 0 : i32
    %c0_i32_1 = arith.constant 0 : i32
    return %c0_i32, %c0_i32_0 : i32, i32
  }
  func.func @transform_4(%arg0: i32) -> (i32, i32) {
    %c0_i32 = arith.constant 0 : i32
    %c0_i32_0 = arith.constant 0 : i32
    return %c0_i32, %arg0 : i32, i32
  }
}

</mosaic_0001>

<llo_original>
// kernel: basic_block_forward.5
$region0: #{basic_block_forward.5}
  #allocation0 [shape = 'u32[]', space=smem, size = 0x4, offset = 0x4, fixed_abs, tag = 'smem constant byte address 0x4 - core index']
  #allocation1 [shape = 'u32[144,128]{1,0:T(1,128)}', space=vmem, size = 0x12000, scoped, tag = 'internal scratch']
  %s0 = inlined_call_operand.vmem [shape: f32[8,512], index: 0, kind: input, shape index: {}]
  %s1 = inlined_call_operand.vmem [shape: f32[8,1], index: 1, kind: input, shape index: {}]
  %s2 = inlined_call_operand.vmem [shape: f32[8,1], index: 2, kind: input, shape index: {}]
  %s3 = inlined_call_operand.vmem [shape: f32[8,512], index: 3, kind: output, shape index: {}]
  %s4 = sld [smem:[#allocation0]]
  $region45: #{basic_block_forward.5} parent=0
    _
  %s6 = ssub.s32 1, %s4
  %s7 = scalar_select 0, %s6, %s4
  loop: start=0, step=1, limit=4
  $region2: #{basic_block_forward.5} parent=0 // loop_pre_header
    _
  $region3: #{basic_block_forward.5} parent=0 // loop_header
    %s9 = sphi 0, %s13
    %p10 = scmp.ge.s32.totalorder %s9, 4
    %s19 = sphi 0, %s21
    %s22 = sphi 0, %s19
    %s23 = sphi 0, %s22
    %s39 = sphi 0, %s23
    %s43 = sphi 0, %s43
    %s45 = sphi 0, %s43
    %s46 = sphi 0, %s45
    %s60 = sphi 0, %s46
    %s64 = sphi 0, %s64
    %s66 = sphi 0, %s64
    %s67 = sphi 0, %s66
    %s81 = sphi 0, %s67
    %s87 = sphi 0, %s89
    %s90 = sphi 0, %s87
    %s91 = sphi 0, %s90
    %s107 = sphi 0, %s91
  $region4: #{basic_block_forward.5} parent=0 // loop_header_branch
    %12 = sbr.rel (%p10) target = $region8
  $region5: #{basic_block_forward.5} parent=0 // loop_body
    %s14 = ssub.s32 %s9, 1
    %s15 = ssub.s32 %s9, 2
    %s16 = sadd.s32 %s9, 1
    %s17 = ssub.s32 %s9, %s16
    %p18 = scmp.eq.s32.totalorder %s17, 0
    %s20 = sadd.s32 %s19, 1
    %s21 = scalar_select %p18, %s19, %s20
    %p24 = pneg %p18
    %p25 = scmp.eq.s32.totalorder %s9, 1
    %p26 = por %p24, %p25
    %p27 = scmp.ne.s32.totalorder %s19, %s22
    %p28 = scmp.eq.s32.totalorder %s9, 0
    %p29 = por %p27, %p28
    %p30 = scmp.ne.s32.totalorder %s19, %s22
    %p31 = scmp.eq.s32.totalorder %s14, 1
    %p32 = por %p30, %p31
    %p33 = scmp.ne.s32.totalorder %s22, %s23
    %p34 = scmp.eq.s32.totalorder %s14, 0
    %p35 = por %p33, %p34
    %p36 = scmp.ne.s32.totalorder %s22, %s23
    %p37 = scmp.eq.s32.totalorder %s15, 1
    %p38 = por %p36, %p37
    %p40 = scmp.ne.s32.totalorder %s23, %s39
    %p41 = scmp.eq.s32.totalorder %s15, 0
    %p42 = por %p40, %p41
    %s44 = sadd.s32 %s43, 1
    %p47 = scmp.eq.s32.totalorder %s9, 1
    %p48 = scmp.ne.s32.totalorder %s43, %s45
    %p49 = scmp.eq.s32.totalorder %s9, 0
    %p50 = por %p48, %p49
    %p51 = scmp.ne.s32.totalorder %s43, %s45
    %p52 = scmp.eq.s32.totalorder %s14, 1
    %p53 = por %p51, %p52
    %p54 = scmp.ne.s32.totalorder %s45, %s46
    %p55 = scmp.eq.s32.totalorder %s14, 0
    %p56 = por %p54, %p55
    %p57 = scmp.ne.s32.totalorder %s45, %s46
    %p58 = scmp.eq.s32.totalorder %s15, 1
    %p59 = por %p57, %p58
    %p61 = scmp.ne.s32.totalorder %s46, %s60
    %p62 = scmp.eq.s32.totalorder %s15, 0
    %p63 = por %p61, %p62
    %s65 = sadd.s32 %s64, 1
    %p68 = scmp.eq.s32.totalorder %s9, 1
    %p69 = scmp.ne.s32.totalorder %s64, %s66
    %p70 = scmp.eq.s32.totalorder %s9, 0
    %p71 = por %p69, %p70
    %p72 = scmp.ne.s32.totalorder %s64, %s66
    %p73 = scmp.eq.s32.totalorder %s14, 1
    %p74 = por %p72, %p73
    %p75 = scmp.ne.s32.totalorder %s66, %s67
    %p76 = scmp.eq.s32.totalorder %s14, 0
    %p77 = por %p75, %p76
    %p78 = scmp.ne.s32.totalorder %s66, %s67
    %p79 = scmp.eq.s32.totalorder %s15, 1
    %p80 = por %p78, %p79
    %p82 = scmp.ne.s32.totalorder %s67, %s81
    %p83 = scmp.eq.s32.totalorder %s15, 0
    %p84 = por %p82, %p83
    %s85 = ssub.s32 %s9, %s16
    %p86 = scmp.eq.s32.totalorder %s85, 0
    %s88 = sadd.s32 %s87, 1
    %s89 = scalar_select %p86, %s87, %s88
    %p92 = pneg %p86
    %p93 = scmp.eq.s32.totalorder %s9, 1
    %p94 = por %p92, %p93
    %p95 = scmp.ne.s32.totalorder %s87, %s90
    %p96 = scmp.eq.s32.totalorder %s9, 0
    %p97 = por %p95, %p96
    %p98 = scmp.ne.s32.totalorder %s87, %s90
    %p99 = scmp.eq.s32.totalorder %s14, 1
    %p100 = por %p98, %p99
    %p101 = scmp.ne.s32.totalorder %s90, %s91
    %p102 = scmp.eq.s32.totalorder %s14, 0
    %p103 = por %p101, %p102
    %p104 = scmp.ne.s32.totalorder %s90, %s91
    %p105 = scmp.eq.s32.totalorder %s15, 1
    %p106 = por %p104, %p105
    %p108 = scmp.ne.s32.totalorder %s91, %s107
    %p109 = scmp.eq.s32.totalorder %s15, 0
    %p110 = por %p108, %p109
    %p111 = scmp.le.s32.totalorder 1, %s9
    %p112 = scmp.lt.s32.totalorder %s9, 3
    %p113 = pnand %p111, %p112
    %p114 = pneg %p113
    // Predicated region
    $region9: #{basic_block_forward.5} parent=5 // pred_check
      _
    $region10: #{basic_block_forward.5} parent=5 // pred_check_branch
      %116 = sbr.rel (%p113) target = $region12
    $region11: #{basic_block_forward.5} parent=5 // pred_region
      %s117 = ssub.s32 %s9, 1
      // Predicated region
      $region13: #{basic_block_forward.5} parent=11 // pred_check
        %p118 = pneg %p56
      $region14: #{basic_block_forward.5} parent=11 // pred_check_branch
        %120 = sbr.rel (%p118) target = $region16
      $region15: #{basic_block_forward.5} parent=11 // pred_region
        _
      $region16: #{basic_block_forward.5} parent=11 // pred_fallthru
        _
      // Predicated region
      $region17: #{basic_block_forward.5} parent=11 // pred_check
        %p121 = pneg %p77
      $region18: #{basic_block_forward.5} parent=11 // pred_check_branch
        %123 = sbr.rel (%p121) target = $region20
      $region19: #{basic_block_forward.5} parent=11 // pred_region
        _
      $region20: #{basic_block_forward.5} parent=11 // pred_fallthru
        _
    $region12: #{basic_block_forward.5} parent=5 // pred_fallthru
      _
    %p124 = scmp.lt.s32.totalorder %s9, 2
    // Predicated region
    $region21: #{basic_block_forward.5} parent=5 // pred_check
      %p125 = pneg %p124
    $region22: #{basic_block_forward.5} parent=5 // pred_check_branch
      %127 = sbr.rel (%p125) target = $region24
    $region23: #{basic_block_forward.5} parent=5 // pred_region
      // Predicated region
      $region25: #{basic_block_forward.5} parent=23 // pred_check
        %p128 = pneg %p29
      $region26: #{basic_block_forward.5} parent=23 // pred_check_branch
        %130 = sbr.rel (%p128) target = $region28
      $region27: #{basic_block_forward.5} parent=23 // pred_region
        %s131 = smul.u32 2, %s9
        %p132 = scmp.lt.s32.totalorder %s131, 3
        %s133 = scalar_select %p132, %s131, 3
        %s134 = smul.addr %s133, 8
        %s135 = scalar_lea.vmem %s0, %s134
        %s136 = smul.u32 2, %s9
      $region28: #{basic_block_forward.5} parent=23 // pred_fallthru
        _
    $region24: #{basic_block_forward.5} parent=5 // pred_fallthru
      _
    %p137 = scmp.le.s32.totalorder 1, %s9
    %p138 = scmp.lt.s32.totalorder %s9, 3
    %p139 = pnand %p137, %p138
    %p140 = pneg %p139
    // Predicated region
    $region29: #{basic_block_forward.5} parent=5 // pred_check
      _
    $region30: #{basic_block_forward.5} parent=5 // pred_check_branch
      %142 = sbr.rel (%p139) target = $region32
    $region31: #{basic_block_forward.5} parent=5 // pred_region
      %s143 = ssub.s32 %s9, 1
      %s144 = smul.u32 2, %s14
      %p145 = scmp.lt.s32.totalorder %s144, 3
      %s146 = scalar_select %p145, %s144, 3
      %s147 = smul.addr %s146, 8
      %s148 = scalar_lea.vmem %s0, %s147
      %p149 = pneg %p35
      %p150 = pneg %p32
      %p151 = pneg %p56
      %p152 = pneg %p53
      %p153 = pneg %p77
      %p154 = pneg %p74
      %p155 = pneg %p103
      %p156 = pneg %p100
      %s157 = smul.u32 2, %s14
      %p158 = scmp.lt.s32.totalorder %s157, 3
      %s159 = scalar_select %p158, %s157, 3
      %s160 = smul.addr %s159, 8
      %s161 = scalar_lea.vmem %s3, %s160
      %s162 = smul.u32 2, %s14
      %p163 = scmp.lt.s32.totalorder %s162, 3
      %s164 = scalar_select %p163, %s162, 3
      %s165 = smul.addr %s164, 8
      %s166 = scalar_lea.vmem %s0, %s165
      %s167 = smul.u32 2, %s14
      %s168 = smul.u32 2, %s14
      %p169 = scmp.lt.s32.totalorder %s168, 3
      %s170 = scalar_select %p169, %s168, 3
      %s171 = smul.addr %s170, 8
      %s172 = scalar_lea.vmem %s3, %s171
      %s173 = smul.u32 2, %s14
      %v174 = vld [vmem:[%s166] sm:$0xff]
      %v175 = vld [vmem:[%s166 + $0x8] sm:$0xff]
      %v176 = vld [vmem:[%s1] sm:$0xff]
      %178 = vset.pattern.permute.xlu0 0
      %179 = vperm.xlu0 %178, %v176
      %v180 = vpop.permute.xlu0 %179
      %v182 = vmul.f32 %v174, %v180
      %v183 = vmul.f32 %v175, %v180
      %v184 = vld [vmem:[%s2] sm:$0xff]
      %186 = vset.pattern.permute.xlu0 0
      %187 = vperm.xlu0 %186, %v184
      %v188 = vpop.permute.xlu0 %187
      %v190 = vadd.f32 %v182, %v188
      %v191 = vadd.f32 %v183, %v188
      %v192 = vmax.f32 %v190, 0.0
      %v193 = vmax.f32 %v191, 0.0
      %194 = vst [vmem:[%s172] sm:$0xff] %v192
      %195 = vst [vmem:[%s172 + $0x8] sm:$0xff] %v193
      %s196 = smul.u32 2, %s14
      %p197 = scmp.lt.s32.totalorder %s196, 3
      %s198 = scalar_select %p197, %s196, 3
      %s199 = smul.addr %s198, 8
      %s200 = scalar_lea.vmem %s3, %s199
      // Predicated region
      $region33: #{basic_block_forward.5} parent=31 // pred_check
        %p201 = pneg %p100
      $region34: #{basic_block_forward.5} parent=31 // pred_check_branch
        %203 = sbr.rel (%p201) target = $region36
      $region35: #{basic_block_forward.5} parent=31 // pred_region
        %s204 = smul.u32 2, %s14
      $region36: #{basic_block_forward.5} parent=31 // pred_fallthru
        _
    $region32: #{basic_block_forward.5} parent=5 // pred_fallthru
      _
    %p205 = scmp.le.s32.totalorder 2, %s9
    // Predicated region
    $region37: #{basic_block_forward.5} parent=5 // pred_check
      %p206 = pneg %p205
    $region38: #{basic_block_forward.5} parent=5 // pred_check_branch
      %208 = sbr.rel (%p206) target = $region40
    $region39: #{basic_block_forward.5} parent=5 // pred_region
      %s209 = ssub.s32 %s9, 2
      // Predicated region
      $region41: #{basic_block_forward.5} parent=39 // pred_check
        %p210 = pneg %p106
      $region42: #{basic_block_forward.5} parent=39 // pred_check_branch
        %212 = sbr.rel (%p210) target = $region44
      $region43: #{basic_block_forward.5} parent=39 // pred_region
        %s213 = smul.u32 2, %s15
        %p214 = scmp.lt.s32.totalorder %s213, 3
        %s215 = scalar_select %p214, %s213, 3
        %s216 = smul.addr %s215, 8
        %s217 = scalar_lea.vmem %s3, %s216
      $region44: #{basic_block_forward.5} parent=39 // pred_fallthru
        _
    $region40: #{basic_block_forward.5} parent=5 // pred_fallthru
      _
  $region6: #{basic_block_forward.5} parent=0 // loop_footer
    %s13 = sadd.s32 1, %s9
  $region7: #{basic_block_forward.5} parent=0 // loop_footer_branch
    %8 = sbr.rel target = $region3
  $region8: #{basic_block_forward.5} parent=0 // loop_exit
    _

// kernel: basic_block_forward.4
$region0: #{basic_block_forward.4}
  #allocation0 [shape = 'u32[]', space=smem, size = 0x4, offset = 0x4, fixed_abs, tag = 'smem constant byte address 0x4 - core index']
  #allocation1 [shape = 'u32[144,128]{1,0:T(1,128)}', space=vmem, size = 0x12000, scoped, tag = 'internal scratch']
  %s0 = inlined_call_operand.vmem [shape: f32[9,8,512], index: 0, kind: input, shape index: {}]
  %s1 = inlined_call_operand.vmem [shape: f32[9,8,8], index: 1, kind: input, shape index: {}]
  %s2 = inlined_call_operand.vmem [shape: f32[8,1], index: 2, kind: input, shape index: {}]
  %s3 = inlined_call_operand.vmem [shape: f32[8,512], index: 3, kind: output, shape index: {0}]
  %s4 = inlined_call_operand.vmem [shape: f32[2,8,2], index: 4, kind: output, shape index: {1}]
  %5 = xla_tuple %s3, %s4
  %s6 = sld [smem:[#allocation0]]
  $region76: #{basic_block_forward.4} parent=0
    _
  %s8 = ssub.s32 1, %s6
  %s9 = scalar_select 0, %s8, %s6
  $region1: #{basic_block_forward.4} parent=0
    #allocation2 [shape = 'u8[147456]{0}', space=vmem, size = 0x24000, scoped, tag = 'input window, operand 0']
    loop: start=0, step=1, limit=4
    $region2: #{basic_block_forward.4} parent=1 // loop_pre_header
      _
    $region3: #{basic_block_forward.4} parent=1 // loop_header
      %s11 = sphi 0, %s15
      %p12 = scmp.ge.s32.totalorder %s11, 4
      %s21 = sphi 0, %s23
      %s24 = sphi 0, %s21
      %s25 = sphi 0, %s24
      %s41 = sphi 0, %s25
      %s45 = sphi 0, %s45
      %s47 = sphi 0, %s45
      %s48 = sphi 0, %s47
      %s62 = sphi 0, %s48
      %s66 = sphi 0, %s66
      %s68 = sphi 0, %s66
      %s69 = sphi 0, %s68
      %s83 = sphi 0, %s69
      %s89 = sphi 0, %s91
      %s92 = sphi 0, %s89
      %s93 = sphi 0, %s92
      %s109 = sphi 0, %s93
      %s115 = sphi 0, %s117
      %s118 = sphi 0, %s115
      %s119 = sphi 0, %s118
      %s135 = sphi 0, %s119
    $region4: #{basic_block_forward.4} parent=1 // loop_header_branch
      %14 = sbr.rel (%p12) target = $region8
    $region5: #{basic_block_forward.4} parent=1 // loop_body
      %s16 = ssub.s32 %s11, 1
      %s17 = ssub.s32 %s11, 2
      %s18 = sadd.s32 %s11, 1
      %s19 = ssub.s32 %s11, %s18
      %p20 = scmp.eq.s32.totalorder %s19, 0
      %s22 = sadd.s32 %s21, 1
      %s23 = scalar_select %p20, %s21, %s22
      %p26 = pneg %p20
      %p27 = scmp.eq.s32.totalorder %s11, 1
      %p28 = por %p26, %p27
      %p29 = scmp.ne.s32.totalorder %s21, %s24
      %p30 = scmp.eq.s32.totalorder %s11, 0
      %p31 = por %p29, %p30
      %p32 = scmp.ne.s32.totalorder %s21, %s24
      %p33 = scmp.eq.s32.totalorder %s16, 1
      %p34 = por %p32, %p33
      %p35 = scmp.ne.s32.totalorder %s24, %s25
      %p36 = scmp.eq.s32.totalorder %s16, 0
      %p37 = por %p35, %p36
      %p38 = scmp.ne.s32.totalorder %s24, %s25
      %p39 = scmp.eq.s32.totalorder %s17, 1
      %p40 = por %p38, %p39
      %p42 = scmp.ne.s32.totalorder %s25, %s41
      %p43 = scmp.eq.s32.totalorder %s17, 0
      %p44 = por %p42, %p43
      %s46 = sadd.s32 %s45, 1
      %p49 = scmp.eq.s32.totalorder %s11, 1
      %p50 = scmp.ne.s32.totalorder %s45, %s47
      %p51 = scmp.eq.s32.totalorder %s11, 0
      %p52 = por %p50, %p51
      %p53 = scmp.ne.s32.totalorder %s45, %s47
      %p54 = scmp.eq.s32.totalorder %s16, 1
      %p55 = por %p53, %p54
      %p56 = scmp.ne.s32.totalorder %s47, %s48
      %p57 = scmp.eq.s32.totalorder %s16, 0
      %p58 = por %p56, %p57
      %p59 = scmp.ne.s32.totalorder %s47, %s48
      %p60 = scmp.eq.s32.totalorder %s17, 1
      %p61 = por %p59, %p60
      %p63 = scmp.ne.s32.totalorder %s48, %s62
      %p64 = scmp.eq.s32.totalorder %s17, 0
      %p65 = por %p63, %p64
      %s67 = sadd.s32 %s66, 1
      %p70 = scmp.eq.s32.totalorder %s11, 1
      %p71 = scmp.ne.s32.totalorder %s66, %s68
      %p72 = scmp.eq.s32.totalorder %s11, 0
      %p73 = por %p71, %p72
      %p74 = scmp.ne.s32.totalorder %s66, %s68
      %p75 = scmp.eq.s32.totalorder %s16, 1
      %p76 = por %p74, %p75
      %p77 = scmp.ne.s32.totalorder %s68, %s69
      %p78 = scmp.eq.s32.totalorder %s16, 0
      %p79 = por %p77, %p78
      %p80 = scmp.ne.s32.totalorder %s68, %s69
      %p81 = scmp.eq.s32.totalorder %s17, 1
      %p82 = por %p80, %p81
      %p84 = scmp.ne.s32.totalorder %s69, %s83
      %p85 = scmp.eq.s32.totalorder %s17, 0
      %p86 = por %p84, %p85
      %s87 = ssub.s32 %s11, %s18
      %p88 = scmp.eq.s32.totalorder %s87, 0
      %s90 = sadd.s32 %s89, 1
      %s91 = scalar_select %p88, %s89, %s90
      %p94 = pneg %p88
      %p95 = scmp.eq.s32.totalorder %s11, 1
      %p96 = por %p94, %p95
      %p97 = scmp.ne.s32.totalorder %s89, %s92
      %p98 = scmp.eq.s32.totalorder %s11, 0
      %p99 = por %p97, %p98
      %p100 = scmp.ne.s32.totalorder %s89, %s92
      %p101 = scmp.eq.s32.totalorder %s16, 1
      %p102 = por %p100, %p101
      %p103 = scmp.ne.s32.totalorder %s92, %s93
      %p104 = scmp.eq.s32.totalorder %s16, 0
      %p105 = por %p103, %p104
      %p106 = scmp.ne.s32.totalorder %s92, %s93
      %p107 = scmp.eq.s32.totalorder %s17, 1
      %p108 = por %p106, %p107
      %p110 = scmp.ne.s32.totalorder %s93, %s109
      %p111 = scmp.eq.s32.totalorder %s17, 0
      %p112 = por %p110, %p111
      %s113 = ssub.s32 %s11, %s18
      %p114 = scmp.eq.s32.totalorder %s113, 0
      %s116 = sadd.s32 %s115, 1
      %s117 = scalar_select %p114, %s115, %s116
      %p120 = pneg %p114
      %p121 = scmp.eq.s32.totalorder %s11, 1
      %p122 = por %p120, %p121
      %p123 = scmp.ne.s32.totalorder %s115, %s118
      %p124 = scmp.eq.s32.totalorder %s11, 0
      %p125 = por %p123, %p124
      %p126 = scmp.ne.s32.totalorder %s115, %s118
      %p127 = scmp.eq.s32.totalorder %s16, 1
      %p128 = por %p126, %p127
      %p129 = scmp.ne.s32.totalorder %s118, %s119
      %p130 = scmp.eq.s32.totalorder %s16, 0
      %p131 = por %p129, %p130
      %p132 = scmp.ne.s32.totalorder %s118, %s119
      %p133 = scmp.eq.s32.totalorder %s17, 1
      %p134 = por %p132, %p133
      %p136 = scmp.ne.s32.totalorder %s119, %s135
      %p137 = scmp.eq.s32.totalorder %s17, 0
      %p138 = por %p136, %p137
      %p139 = scmp.le.s32.totalorder 1, %s11
      %p140 = scmp.lt.s32.totalorder %s11, 3
      %p141 = pnand %p139, %p140
      %p142 = pneg %p141
      // Predicated region
      $region9: #{basic_block_forward.4} parent=5 // pred_check
        _
      $region10: #{basic_block_forward.4} parent=5 // pred_check_branch
        %144 = sbr.rel (%p141) target = $region12
      $region11: #{basic_block_forward.4} parent=5 // pred_region
        %s145 = ssub.s32 %s11, 1
        // Predicated region
        $region13: #{basic_block_forward.4} parent=11 // pred_check
          %p146 = pneg %p58
        $region14: #{basic_block_forward.4} parent=11 // pred_check_branch
          %148 = sbr.rel (%p146) target = $region16
        $region15: #{basic_block_forward.4} parent=11 // pred_region
          _
        $region16: #{basic_block_forward.4} parent=11 // pred_fallthru
          _
        // Predicated region
        $region17: #{basic_block_forward.4} parent=11 // pred_check
          %p149 = pneg %p79
        $region18: #{basic_block_forward.4} parent=11 // pred_check_branch
          %151 = sbr.rel (%p149) target = $region20
        $region19: #{basic_block_forward.4} parent=11 // pred_region
          _
        $region20: #{basic_block_forward.4} parent=11 // pred_fallthru
          _
      $region12: #{basic_block_forward.4} parent=5 // pred_fallthru
        _
      %p152 = scmp.lt.s32.totalorder %s11, 2
      // Predicated region
      $region21: #{basic_block_forward.4} parent=5 // pred_check
        %p153 = pneg %p152
      $region22: #{basic_block_forward.4} parent=5 // pred_check_branch
        %155 = sbr.rel (%p153) target = $region24
      $region23: #{basic_block_forward.4} parent=5 // pred_region
        // Predicated region
        $region25: #{basic_block_forward.4} parent=23 // pred_check
          %p156 = pneg %p31
        $region26: #{basic_block_forward.4} parent=23 // pred_check_branch
          %158 = sbr.rel (%p156) target = $region28
        $region27: #{basic_block_forward.4} parent=23 // pred_region
          %s159 = sand.u32 %s21, 1
          %s160 = sand.u32 %s21, 1
          %s161 = smul.addr %s160, 144
          %s162 = scalar_lea.vmem [#allocation2], %s161
          %s163 = smul.u32 2, %s11
          %s164 = smul.addr %s163, 8
          %s165 = scalar_lea.vmem %s0, %s164
          // Predicated region
          $region29: #{basic_block_forward.4} parent=27 // pred_check
            _
          $region30: #{basic_block_forward.4} parent=27 // pred_check_branch
            %167 = sbr.rel (0) target = $region32
          $region31: #{basic_block_forward.4} parent=27 // pred_region
            // Predicated region
            $region33: #{basic_block_forward.4} parent=31 // pred_check
              _
            $region34: #{basic_block_forward.4} parent=31 // pred_check_branch
              %169 = sbr.rel (0) target = $region36
            $region35: #{basic_block_forward.4} parent=31 // pred_region
              loop: start=0, step=1, limit=1
              $region37: #{basic_block_forward.4} parent=35 // loop_pre_header
                _
              $region38: #{basic_block_forward.4} parent=35 // loop_header
                %s171 = sphi 0, %s175
                %p172 = scmp.ge.s32.totalorder %s171, 1
                %s176 = sphi %s165, %s165
                %s177 = sphi %s162, %s162
              $region39: #{basic_block_forward.4} parent=35 // loop_header_branch
                %174 = sbr.rel (%p172) target = $region43
              $region40: #{basic_block_forward.4} parent=35 // loop_body
                %v178 = vld [vmem:[%s176] sm:$0xff]
                %179 = vst [vmem:[%s177] sm:$0xff] %v178
                %v180 = vld [vmem:[%s176 + $0x8] sm:$0xff]
                %181 = vst [vmem:[%s177 + $0x8] sm:$0xff] %v180
                %v182 = vld [vmem:[%s176 + $0x20] sm:$0xff]
                %183 = vst [vmem:[%s177 + $0x10] sm:$0xff] %v182
                %v184 = vld [vmem:[%s176 + $0x28] sm:$0xff]
                %185 = vst [vmem:[%s177 + $0x18] sm:$0xff] %v184
                %v186 = vld [vmem:[%s176 + $0x40] sm:$0xff]
                %187 = vst [vmem:[%s177 + $0x20] sm:$0xff] %v186
                %v188 = vld [vmem:[%s176 + $0x48] sm:$0xff]
                %189 = vst [vmem:[%s177 + $0x28] sm:$0xff] %v188
                %v190 = vld [vmem:[%s176 + $0x60] sm:$0xff]
                %191 = vst [vmem:[%s177 + $0x30] sm:$0xff] %v190
                %v192 = vld [vmem:[%s176 + $0x68] sm:$0xff]
                %193 = vst [vmem:[%s177 + $0x38] sm:$0xff] %v192
                %v194 = vld [vmem:[%s176 + $0x80] sm:$0xff]
                %195 = vst [vmem:[%s177 + $0x40] sm:$0xff] %v194
                %v196 = vld [vmem:[%s176 + $0x88] sm:$0xff]
                %197 = vst [vmem:[%s177 + $0x48] sm:$0xff] %v196
                %v198 = vld [vmem:[%s176 + $0xa0] sm:$0xff]
                %199 = vst [vmem:[%s177 + $0x50] sm:$0xff] %v198
                %v200 = vld [vmem:[%s176 + $0xa8] sm:$0xff]
                %201 = vst [vmem:[%s177 + $0x58] sm:$0xff] %v200
                %v202 = vld [vmem:[%s176 + $0xc0] sm:$0xff]
                %203 = vst [vmem:[%s177 + $0x60] sm:$0xff] %v202
                %v204 = vld [vmem:[%s176 + $0xc8] sm:$0xff]
                %205 = vst [vmem:[%s177 + $0x68] sm:$0xff] %v204
                %v206 = vld [vmem:[%s176 + $0xe0] sm:$0xff]
                %207 = vst [vmem:[%s177 + $0x70] sm:$0xff] %v206
                %v208 = vld [vmem:[%s176 + $0xe8] sm:$0xff]
                %209 = vst [vmem:[%s177 + $0x78] sm:$0xff] %v208
                %v210 = vld [vmem:[%s176 + $0x100] sm:$0xff]
                %211 = vst [vmem:[%s177 + $0x80] sm:$0xff] %v210
                %v212 = vld [vmem:[%s176 + $0x108] sm:$0xff]
                %213 = vst [vmem:[%s177 + $0x88] sm:$0xff] %v212
              $region41: #{basic_block_forward.4} parent=35 // loop_footer
                %s175 = sadd.s32 1, %s171
              $region42: #{basic_block_forward.4} parent=35 // loop_footer_branch
                %170 = sbr.rel target = $region38
              $region43: #{basic_block_forward.4} parent=35 // loop_exit
                _
            $region36: #{basic_block_forward.4} parent=31 // pred_fallthru
              _
            // Predicated region
            $region44: #{basic_block_forward.4} parent=31 // pred_check
              _
            $region45: #{basic_block_forward.4} parent=31 // pred_check_branch
              %215 = sbr.rel target = $region47
            $region46: #{basic_block_forward.4} parent=31 // pred_region
              _
            $region47: #{basic_block_forward.4} parent=31 // pred_fallthru
              _
          $region32: #{basic_block_forward.4} parent=27 // pred_fallthru
            _
          %216 = vnop
        $region28: #{basic_block_forward.4} parent=23 // pred_fallthru
          _
      $region24: #{basic_block_forward.4} parent=5 // pred_fallthru
        _
      %p217 = scmp.le.s32.totalorder 1, %s11
      %p218 = scmp.lt.s32.totalorder %s11, 3
      %p219 = pnand %p217, %p218
      %p220 = pneg %p219
      // Predicated region
      $region48: #{basic_block_forward.4} parent=5 // pred_check
        _
      $region49: #{basic_block_forward.4} parent=5 // pred_check_branch
        %222 = sbr.rel (%p219) target = $region51
      $region50: #{basic_block_forward.4} parent=5 // pred_region
        %s223 = ssub.s32 %s11, 1
        %s224 = sand.u32 %s24, 1
        %s225 = sand.u32 %s24, 1
        %s226 = smul.addr %s225, 144
        %s227 = scalar_lea.vmem [#allocation2], %s226
        // Predicated region
        $region52: #{basic_block_forward.4} parent=50 // pred_check
          %p228 = pneg %p37
        $region53: #{basic_block_forward.4} parent=50 // pred_check_branch
          %230 = sbr.rel (%p228) target = $region55
        $region54: #{basic_block_forward.4} parent=50 // pred_region
          _
        $region55: #{basic_block_forward.4} parent=50 // pred_fallthru
          _
        %s231 = sand.u32 %s24, 1
        %s232 = sand.u32 %s24, 1
        %s233 = smul.addr %s232, 144
        %s234 = scalar_lea.vmem [#allocation2], %s233
        %p235 = pneg %p37
        %p236 = pneg %p34
        %p237 = pneg %p58
        %p238 = pneg %p55
        %p239 = pneg %p79
        %p240 = pneg %p76
        %p241 = pneg %p105
        %p242 = pneg %p102
        %s243 = smul.u32 2, %s16
        %p244 = scmp.lt.s32.totalorder %s243, 3
        %s245 = scalar_select %p244, %s243, 3
        %s246 = smul.addr %s245, 8
        %s247 = scalar_lea.vmem %s3, %s246
        %p248 = pneg %p131
        %p249 = pneg %p128
        %p250 = scmp.lt.s32.totalorder %s16, 1
        %s251 = scalar_select %p250, %s16, 1
        %s252 = smul.addr %s251, 8
        %s253 = scalar_lea.vmem %s4, %s252
        %s254 = smul.u32 2, %s16
        %s255 = smul.u32 2, %s16
        %p256 = scmp.lt.s32.totalorder %s255, 3
        %s257 = scalar_select %p256, %s255, 3
        %s258 = smul.addr %s257, 8
        %s259 = scalar_lea.vmem %s3, %s258
        %s260 = smul.u32 2, %s16
        %p261 = scmp.lt.s32.totalorder %s16, 1
        %s262 = scalar_select %p261, %s16, 1
        %s263 = smul.addr %s262, 8
        %s264 = scalar_lea.vmem %s4, %s263
        %v265 = vld [vmem:[%s227] sm:$0xff]
        %v266 = vld [vmem:[%s227 + $0x8] sm:$0xff]
        %v267 = vld [vmem:[%s1] sm:$0xff]
        %v268 = vlaneseq
        %v269 = vshrl.u32 %v268, 7
        %v270 = vsub.s32 0, %v269
        %v271 = vrot.slane %v265, %v270
        %v272 = vlaneseq
        %v273 = vshrl.u32 %v272, 7
        %v274 = vsub.s32 0, %v273
        %v275 = vrot.slane %v266, %v274
        %277 = vset.pattern.permute.xlu0 0
        %278 = vperm.xlu0 %277, %v267
        %v279 = vpop.permute.xlu0 %278
        %v281 = vmin.f32 %v271, %v279
        %v282 = vmin.f32 %v275, %v279
        %v283 = vadd.f32 %v281, 0.0
        %v284 = vadd.f32 %v282, 0.0
        %v285 = vlaneseq
        %v286 = vshrl.u32 %v285, 7
        %v287 = vsub.s32 1, %v286
        %v288 = vrot.slane %v265, %v287
        %v289 = vlaneseq
        %v290 = vshrl.u32 %v289, 7
        %v291 = vsub.s32 1, %v290
        %v292 = vrot.slane %v266, %v291
        %293 = vset.pattern.permute.xlu0 1
        %294 = vperm.xlu0 %293, %v267
        %v295 = vpop.permute.xlu0 %294
        %v297 = vmin.f32 %v288, %v295
        %v298 = vmin.f32 %v292, %v295
        %v299 = vadd.f32 %v283, %v297
        %v300 = vadd.f32 %v284, %v298
        %v301 = vlaneseq
        %v302 = vshrl.u32 %v301, 7
        %v303 = vsub.s32 2, %v302
        %v304 = vrot.slane %v265, %v303
        %v305 = vlaneseq
        %v306 = vshrl.u32 %v305, 7
        %v307 = vsub.s32 2, %v306
        %v308 = vrot.slane %v266, %v307
        %309 = vset.pattern.permute.xlu0 2
        %310 = vperm.xlu0 %309, %v267
        %v311 = vpop.permute.xlu0 %310
        %v313 = vmin.f32 %v304, %v311
        %v314 = vmin.f32 %v308, %v311
        %v315 = vadd.f32 %v299, %v313
        %v316 = vadd.f32 %v300, %v314
        %v317 = vlaneseq
        %v318 = vshrl.u32 %v317, 7
        %v319 = vsub.s32 3, %v318
        %v320 = vrot.slane %v265, %v319
        %v321 = vlaneseq
        %v322 = vshrl.u32 %v321, 7
        %v323 = vsub.s32 3, %v322
        %v324 = vrot.slane %v266, %v323
        %325 = vset.pattern.permute.xlu0 3
        %326 = vperm.xlu0 %325, %v267
        %v327 = vpop.permute.xlu0 %326
        %v329 = vmin.f32 %v320, %v327
        %v330 = vmin.f32 %v324, %v327
        %v331 = vadd.f32 %v315, %v329
        %v332 = vadd.f32 %v316, %v330
        %v333 = vlaneseq
        %v334 = vshrl.u32 %v333, 7
        %v335 = vsub.s32 4, %v334
        %v336 = vrot.slane %v265, %v335
        %v337 = vlaneseq
        %v338 = vshrl.u32 %v337, 7
        %v339 = vsub.s32 4, %v338
        %v340 = vrot.slane %v266, %v339
        %341 = vset.pattern.permute.xlu0 4
        %342 = vperm.xlu0 %341, %v267
        %v343 = vpop.permute.xlu0 %342
        %v345 = vmin.f32 %v336, %v343
        %v346 = vmin.f32 %v340, %v343
        %v347 = vadd.f32 %v331, %v345
        %v348 = vadd.f32 %v332, %v346
        %v349 = vlaneseq
        %v350 = vshrl.u32 %v349, 7
        %v351 = vsub.s32 5, %v350
        %v352 = vrot.slane %v265, %v351
        %v353 = vlaneseq
        %v354 = vshrl.u32 %v353, 7
        %v355 = vsub.s32 5, %v354
        %v356 = vrot.slane %v266, %v355
        %357 = vset.pattern.permute.xlu0 5
        %358 = vperm.xlu0 %357, %v267
        %v359 = vpop.permute.xlu0 %358
        %v361 = vmin.f32 %v352, %v359
        %v362 = vmin.f32 %v356, %v359
        %v363 = vadd.f32 %v347, %v361
        %v364 = vadd.f32 %v348, %v362
        %v365 = vlaneseq
        %v366 = vshrl.u32 %v365, 7
        %v367 = vsub.s32 6, %v366
        %v368 = vrot.slane %v265, %v367
        %v369 = vlaneseq
        %v370 = vshrl.u32 %v369, 7
        %v371 = vsub.s32 6, %v370
        %v372 = vrot.slane %v266, %v371
        %373 = vset.pattern.permute.xlu0 6
        %374 = vperm.xlu0 %373, %v267
        %v375 = vpop.permute.xlu0 %374
        %v377 = vmin.f32 %v368, %v375
        %v378 = vmin.f32 %v372, %v375
        %v379 = vadd.f32 %v363, %v377
        %v380 = vadd.f32 %v364, %v378
        %v381 = vlaneseq
        %v382 = vshrl.u32 %v381, 7
        %v383 = vsub.s32 7, %v382
        %v384 = vrot.slane %v265, %v383
        %v385 = vlaneseq
        %v386 = vshrl.u32 %v385, 7
        %v387 = vsub.s32 7, %v386
        %v388 = vrot.slane %v266, %v387
        %389 = vset.pattern.permute.xlu0 7
        %390 = vperm.xlu0 %389, %v267
        %v391 = vpop.permute.xlu0 %390
        %v393 = vmin.f32 %v384, %v391
        %v394 = vmin.f32 %v388, %v391
        %v395 = vadd.f32 %v379, %v393
        %v396 = vadd.f32 %v380, %v394
        %v397 = vrot.slane %v265, 4
        %v398 = vadd.f32 %v265, %v397
        %v399 = vrot.slane %v398, 2
        %v400 = vadd.f32 %v398, %v399
        %v401 = vrot.slane %v400, 1
        %v402 = vadd.f32 %v400, %v401
        %v403 = vrot.slane %v266, 4
        %v404 = vadd.f32 %v266, %v403
        %v405 = vrot.slane %v404, 2
        %v406 = vadd.f32 %v404, %v405
        %v407 = vrot.slane %v406, 1
        %v408 = vadd.f32 %v406, %v407
        %v409 = vadd.f32 %v402, 0.0
        %v410 = vadd.f32 %v408, 0.0
        %s411 = scalar_lea.vmem %s227, 16 [#allocation2]
        %v412 = vld [vmem:[%s411] sm:$0xff]
        %v413 = vld [vmem:[%s411 + $0x8] sm:$0xff]
        %s414 = scalar_lea.vmem %s1, 8
        %v415 = vld [vmem:[%s414] sm:$0xff]
        %v416 = vlaneseq
        %v417 = vshrl.u32 %v416, 7
        %v418 = vsub.s32 0, %v417
        %v419 = vrot.slane %v412, %v418
        %v420 = vlaneseq
        %v421 = vshrl.u32 %v420, 7
        %v422 = vsub.s32 0, %v421
        %v423 = vrot.slane %v413, %v422
        %425 = vset.pattern.permute.xlu0 0
        %426 = vperm.xlu0 %425, %v415
        %v427 = vpop.permute.xlu0 %426
        %v429 = vmin.f32 %v419, %v427
        %v430 = vmin.f32 %v423, %v427
        %v431 = vadd.f32 %v395, %v429
        %v432 = vadd.f32 %v396, %v430
        %v433 = vlaneseq
        %v434 = vshrl.u32 %v433, 7
        %v435 = vsub.s32 1, %v434
        %v436 = vrot.slane %v412, %v435
        %v437 = vlaneseq
        %v438 = vshrl.u32 %v437, 7
        %v439 = vsub.s32 1, %v438
        %v440 = vrot.slane %v413, %v439
        %441 = vset.pattern.permute.xlu0 1
        %442 = vperm.xlu0 %441, %v415
        %v443 = vpop.permute.xlu0 %442
        %v445 = vmin.f32 %v436, %v443
        %v446 = vmin.f32 %v440, %v443
        %v447 = vadd.f32 %v431, %v445
        %v448 = vadd.f32 %v432, %v446
        %v449 = vlaneseq
        %v450 = vshrl.u32 %v449, 7
        %v451 = vsub.s32 2, %v450
        %v452 = vrot.slane %v412, %v451
        %v453 = vlaneseq
        %v454 = vshrl.u32 %v453, 7
        %v455 = vsub.s32 2, %v454
        %v456 = vrot.slane %v413, %v455
        %457 = vset.pattern.permute.xlu0 2
        %458 = vperm.xlu0 %457, %v415
        %v459 = vpop.permute.xlu0 %458
        %v461 = vmin.f32 %v452, %v459
        %v462 = vmin.f32 %v456, %v459
        %v463 = vadd.f32 %v447, %v461
        %v464 = vadd.f32 %v448, %v462
        %v465 = vlaneseq
        %v466 = vshrl.u32 %v465, 7
        %v467 = vsub.s32 3, %v466
        %v468 = vrot.slane %v412, %v467
        %v469 = vlaneseq
        %v470 = vshrl.u32 %v469, 7
        %v471 = vsub.s32 3, %v470
        %v472 = vrot.slane %v413, %v471
        %473 = vset.pattern.permute.xlu0 3
        %474 = vperm.xlu0 %473, %v415
        %v475 = vpop.permute.xlu0 %474
        %v477 = vmin.f32 %v468, %v475
        %v478 = vmin.f32 %v472, %v475
        %v479 = vadd.f32 %v463, %v477
        %v480 = vadd.f32 %v464, %v478
        %v481 = vlaneseq
        %v482 = vshrl.u32 %v481, 7
        %v483 = vsub.s32 4, %v482
        %v484 = vrot.slane %v412, %v483
        %v485 = vlaneseq
        %v486 = vshrl.u32 %v485, 7
        %v487 = vsub.s32 4, %v486
        %v488 = vrot.slane %v413, %v487
        %489 = vset.pattern.permute.xlu0 4
        %490 = vperm.xlu0 %489, %v415
        %v491 = vpop.permute.xlu0 %490
        %v493 = vmin.f32 %v484, %v491
        %v494 = vmin.f32 %v488, %v491
        %v495 = vadd.f32 %v479, %v493
        %v496 = vadd.f32 %v480, %v494
        %v497 = vlaneseq
        %v498 = vshrl.u32 %v497, 7
        %v499 = vsub.s32 5, %v498
        %v500 = vrot.slane %v412, %v499
        %v501 = vlaneseq
        %v502 = vshrl.u32 %v501, 7
        %v503 = vsub.s32 5, %v502
        %v504 = vrot.slane %v413, %v503
        %505 = vset.pattern.permute.xlu0 5
        %506 = vperm.xlu0 %505, %v415
        %v507 = vpop.permute.xlu0 %506
        %v509 = vmin.f32 %v500, %v507
        %v510 = vmin.f32 %v504, %v507
        %v511 = vadd.f32 %v495, %v509
        %v512 = vadd.f32 %v496, %v510
        %v513 = vlaneseq
        %v514 = vshrl.u32 %v513, 7
        %v515 = vsub.s32 6, %v514
        %v516 = vrot.slane %v412, %v515
        %v517 = vlaneseq
        %v518 = vshrl.u32 %v517, 7
        %v519 = vsub.s32 6, %v518
        %v520 = vrot.slane %v413, %v519
        %521 = vset.pattern.permute.xlu0 6
        %522 = vperm.xlu0 %521, %v415
        %v523 = vpop.permute.xlu0 %522
        %v525 = vmin.f32 %v516, %v523
        %v526 = vmin.f32 %v520, %v523
        %v527 = vadd.f32 %v511, %v525
        %v528 = vadd.f32 %v512, %v526
        %v529 = vlaneseq
        %v530 = vshrl.u32 %v529, 7
        %v531 = vsub.s32 7, %v530
        %v532 = vrot.slane %v412, %v531
        %v533 = vlaneseq
        %v534 = vshrl.u32 %v533, 7
        %v535 = vsub.s32 7, %v534
        %v536 = vrot.slane %v413, %v535
        %537 = vset.pattern.permute.xlu0 7
        %538 = vperm.xlu0 %537, %v415
        %v539 = vpop.permute.xlu0 %538
        %v541 = vmin.f32 %v532, %v539
        %v542 = vmin.f32 %v536, %v539
        %v543 = vadd.f32 %v527, %v541
        %v544 = vadd.f32 %v528, %v542
        %v545 = vrot.slane %v412, 4
        %v546 = vadd.f32 %v412, %v545
        %v547 = vrot.slane %v546, 2
        %v548 = vadd.f32 %v546, %v547
        %v549 = vrot.slane %v548, 1
        %v550 = vadd.f32 %v548, %v549
        %v551 = vrot.slane %v413, 4
        %v552 = vadd.f32 %v413, %v551
        %v553 = vrot.slane %v552, 2
        %v554 = vadd.f32 %v552, %v553
        %v555 = vrot.slane %v554, 1
        %v556 = vadd.f32 %v554, %v555
        %v557 = vadd.f32 %v409, %v550
        %v558 = vadd.f32 %v410, %v556
        %s559 = scalar_lea.vmem %s227, 32 [#allocation2]
        %v560 = vld [vmem:[%s559] sm:$0xff]
        %v561 = vld [vmem:[%s559 + $0x8] sm:$0xff]
        %s562 = scalar_lea.vmem %s1, 16
        %v563 = vld [vmem:[%s562] sm:$0xff]
        %v564 = vlaneseq
        %v565 = vshrl.u32 %v564, 7
        %v566 = vsub.s32 0, %v565
        %v567 = vrot.slane %v560, %v566
        %v568 = vlaneseq
        %v569 = vshrl.u32 %v568, 7
        %v570 = vsub.s32 0, %v569
        %v571 = vrot.slane %v561, %v570
        %573 = vset.pattern.permute.xlu0 0
        %574 = vperm.xlu0 %573, %v563
        %v575 = vpop.permute.xlu0 %574
        %v577 = vmin.f32 %v567, %v575
        %v578 = vmin.f32 %v571, %v575
        %v579 = vadd.f32 %v543, %v577
        %v580 = vadd.f32 %v544, %v578
        %v581 = vlaneseq
        %v582 = vshrl.u32 %v581, 7
        %v583 = vsub.s32 1, %v582
        %v584 = vrot.slane %v560, %v583
        %v585 = vlaneseq
        %v586 = vshrl.u32 %v585, 7
        %v587 = vsub.s32 1, %v586
        %v588 = vrot.slane %v561, %v587
        %589 = vset.pattern.permute.xlu0 1
        %590 = vperm.xlu0 %589, %v563
        %v591 = vpop.permute.xlu0 %590
        %v593 = vmin.f32 %v584, %v591
        %v594 = vmin.f32 %v588, %v591
        %v595 = vadd.f32 %v579, %v593
        %v596 = vadd.f32 %v580, %v594
        %v597 = vlaneseq
        %v598 = vshrl.u32 %v597, 7
        %v599 = vsub.s32 2, %v598
        %v600 = vrot.slane %v560, %v599
        %v601 = vlaneseq
        %v602 = vshrl.u32 %v601, 7
        %v603 = vsub.s32 2, %v602
        %v604 = vrot.slane %v561, %v603
        %605 = vset.pattern.permute.xlu0 2
        %606 = vperm.xlu0 %605, %v563
        %v607 = vpop.permute.xlu0 %606
        %v609 = vmin.f32 %v600, %v607
        %v610 = vmin.f32 %v604, %v607
        %v611 = vadd.f32 %v595, %v609
        %v612 = vadd.f32 %v596, %v610
        %v613 = vlaneseq
        %v614 = vshrl.u32 %v613, 7
        %v615 = vsub.s32 3, %v614
        %v616 = vrot.slane %v560, %v615
        %v617 = vlaneseq
        %v618 = vshrl.u32 %v617, 7
        %v619 = vsub.s32 3, %v618
        %v620 = vrot.slane %v561, %v619
        %621 = vset.pattern.permute.xlu0 3
        %622 = vperm.xlu0 %621, %v563
        %v623 = vpop.permute.xlu0 %622
        %v625 = vmin.f32 %v616, %v623
        %v626 = vmin.f32 %v620, %v623
        %v627 = vadd.f32 %v611, %v625
        %v628 = vadd.f32 %v612, %v626
        %v629 = vlaneseq
        %v630 = vshrl.u32 %v629, 7
        %v631 = vsub.s32 4, %v630
        %v632 = vrot.slane %v560, %v631
        %v633 = vlaneseq
        %v634 = vshrl.u32 %v633, 7
        %v635 = vsub.s32 4, %v634
        %v636 = vrot.slane %v561, %v635
        %637 = vset.pattern.permute.xlu0 4
        %638 = vperm.xlu0 %637, %v563
        %v639 = vpop.permute.xlu0 %638
        %v641 = vmin.f32 %v632, %v639
        %v642 = vmin.f32 %v636, %v639
        %v643 = vadd.f32 %v627, %v641
        %v644 = vadd.f32 %v628, %v642
        %v645 = vlaneseq
        %v646 = vshrl.u32 %v645, 7
        %v647 = vsub.s32 5, %v646
        %v648 = vrot.slane %v560, %v647
        %v649 = vlaneseq
        %v650 = vshrl.u32 %v649, 7
        %v651 = vsub.s32 5, %v650
        %v652 = vrot.slane %v561, %v651
        %653 = vset.pattern.permute.xlu0 5
        %654 = vperm.xlu0 %653, %v563
        %v655 = vpop.permute.xlu0 %654
        %v657 = vmin.f32 %v648, %v655
        %v658 = vmin.f32 %v652, %v655
        %v659 = vadd.f32 %v643, %v657
        %v660 = vadd.f32 %v644, %v658
        %v661 = vlaneseq
        %v662 = vshrl.u32 %v661, 7
        %v663 = vsub.s32 6, %v662
        %v664 = vrot.slane %v560, %v663
        %v665 = vlaneseq
        %v666 = vshrl.u32 %v665, 7
        %v667 = vsub.s32 6, %v666
        %v668 = vrot.slane %v561, %v667
        %669 = vset.pattern.permute.xlu0 6
        %670 = vperm.xlu0 %669, %v563
        %v671 = vpop.permute.xlu0 %670
        %v673 = vmin.f32 %v664, %v671
        %v674 = vmin.f32 %v668, %v671
        %v675 = vadd.f32 %v659, %v673
        %v676 = vadd.f32 %v660, %v674
        %v677 = vlaneseq
        %v678 = vshrl.u32 %v677, 7
        %v679 = vsub.s32 7, %v678
        %v680 = vrot.slane %v560, %v679
        %v681 = vlaneseq
        %v682 = vshrl.u32 %v681, 7
        %v683 = vsub.s32 7, %v682
        %v684 = vrot.slane %v561, %v683
        %685 = vset.pattern.permute.xlu0 7
        %686 = vperm.xlu0 %685, %v563
        %v687 = vpop.permute.xlu0 %686
        %v689 = vmin.f32 %v680, %v687
        %v690 = vmin.f32 %v684, %v687
        %v691 = vadd.f32 %v675, %v689
        %v692 = vadd.f32 %v676, %v690
        %v693 = vrot.slane %v560, 4
        %v694 = vadd.f32 %v560, %v693
        %v695 = vrot.slane %v694, 2
        %v696 = vadd.f32 %v694, %v695
        %v697 = vrot.slane %v696, 1
        %v698 = vadd.f32 %v696, %v697
        %v699 = vrot.slane %v561, 4
        %v700 = vadd.f32 %v561, %v699
        %v701 = vrot.slane %v700, 2
        %v702 = vadd.f32 %v700, %v701
        %v703 = vrot.slane %v702, 1
        %v704 = vadd.f32 %v702, %v703
        %v705 = vadd.f32 %v557, %v698
        %v706 = vadd.f32 %v558, %v704
        %s707 = scalar_lea.vmem %s227, 48 [#allocation2]
        %v708 = vld [vmem:[%s707] sm:$0xff]
        %v709 = vld [vmem:[%s707 + $0x8] sm:$0xff]
        %s710 = scalar_lea.vmem %s1, 24
        %v711 = vld [vmem:[%s710] sm:$0xff]
        %v712 = vlaneseq
        %v713 = vshrl.u32 %v712, 7
        %v714 = vsub.s32 0, %v713
        %v715 = vrot.slane %v708, %v714
        %v716 = vlaneseq
        %v717 = vshrl.u32 %v716, 7
        %v718 = vsub.s32 0, %v717
        %v719 = vrot.slane %v709, %v718
        %721 = vset.pattern.permute.xlu0 0
        %722 = vperm.xlu0 %721, %v711
        %v723 = vpop.permute.xlu0 %722
        %v725 = vmin.f32 %v715, %v723
        %v726 = vmin.f32 %v719, %v723
        %v727 = vadd.f32 %v691, %v725
        %v728 = vadd.f32 %v692, %v726
        %v729 = vlaneseq
        %v730 = vshrl.u32 %v729, 7
        %v731 = vsub.s32 1, %v730
        %v732 = vrot.slane %v708, %v731
        %v733 = vlaneseq
        %v734 = vshrl.u32 %v733, 7
        %v735 = vsub.s32 1, %v734
        %v736 = vrot.slane %v709, %v735
        %737 = vset.pattern.permute.xlu0 1
        %738 = vperm.xlu0 %737, %v711
        %v739 = vpop.permute.xlu0 %738
        %v741 = vmin.f32 %v732, %v739
        %v742 = vmin.f32 %v736, %v739
        %v743 = vadd.f32 %v727, %v741
        %v744 = vadd.f32 %v728, %v742
        %v745 = vlaneseq
        %v746 = vshrl.u32 %v745, 7
        %v747 = vsub.s32 2, %v746
        %v748 = vrot.slane %v708, %v747
        %v749 = vlaneseq
        %v750 = vshrl.u32 %v749, 7
        %v751 = vsub.s32 2, %v750
        %v752 = vrot.slane %v709, %v751
        %753 = vset.pattern.permute.xlu0 2
        %754 = vperm.xlu0 %753, %v711
        %v755 = vpop.permute.xlu0 %754
        %v757 = vmin.f32 %v748, %v755
        %v758 = vmin.f32 %v752, %v755
        %v759 = vadd.f32 %v743, %v757
        %v760 = vadd.f32 %v744, %v758
        %v761 = vlaneseq
        %v762 = vshrl.u32 %v761, 7
        %v763 = vsub.s32 3, %v762
        %v764 = vrot.slane %v708, %v763
        %v765 = vlaneseq
        %v766 = vshrl.u32 %v765, 7
        %v767 = vsub.s32 3, %v766
        %v768 = vrot.slane %v709, %v767
        %769 = vset.pattern.permute.xlu0 3
        %770 = vperm.xlu0 %769, %v711
        %v771 = vpop.permute.xlu0 %770
        %v773 = vmin.f32 %v764, %v771
        %v774 = vmin.f32 %v768, %v771
        %v775 = vadd.f32 %v759, %v773
        %v776 = vadd.f32 %v760, %v774
        %v777 = vlaneseq
        %v778 = vshrl.u32 %v777, 7
        %v779 = vsub.s32 4, %v778
        %v780 = vrot.slane %v708, %v779
        %v781 = vlaneseq
        %v782 = vshrl.u32 %v781, 7
        %v783 = vsub.s32 4, %v782
        %v784 = vrot.slane %v709, %v783
        %785 = vset.pattern.permute.xlu0 4
        %786 = vperm.xlu0 %785, %v711
        %v787 = vpop.permute.xlu0 %786
        %v789 = vmin.f32 %v780, %v787
        %v790 = vmin.f32 %v784, %v787
        %v791 = vadd.f32 %v775, %v789
        %v792 = vadd.f32 %v776, %v790
        %v793 = vlaneseq
        %v794 = vshrl.u32 %v793, 7
        %v795 = vsub.s32 5, %v794
        %v796 = vrot.slane %v708, %v795
        %v797 = vlaneseq
        %v798 = vshrl.u32 %v797, 7
        %v799 = vsub.s32 5, %v798
        %v800 = vrot.slane %v709, %v799
        %801 = vset.pattern.permute.xlu0 5
        %802 = vperm.xlu0 %801, %v711
        %v803 = vpop.permute.xlu0 %802
        %v805 = vmin.f32 %v796, %v803
        %v806 = vmin.f32 %v800, %v803
        %v807 = vadd.f32 %v791, %v805
        %v808 = vadd.f32 %v792, %v806
        %v809 = vlaneseq
        %v810 = vshrl.u32 %v809, 7
        %v811 = vsub.s32 6, %v810
        %v812 = vrot.slane %v708, %v811
        %v813 = vlaneseq
        %v814 = vshrl.u32 %v813, 7
        %v815 = vsub.s32 6, %v814
        %v816 = vrot.slane %v709, %v815
        %817 = vset.pattern.permute.xlu0 6
        %818 = vperm.xlu0 %817, %v711
        %v819 = vpop.permute.xlu0 %818
        %v821 = vmin.f32 %v812, %v819
        %v822 = vmin.f32 %v816, %v819
        %v823 = vadd.f32 %v807, %v821
        %v824 = vadd.f32 %v808, %v822
        %v825 = vlaneseq
        %v826 = vshrl.u32 %v825, 7
        %v827 = vsub.s32 7, %v826
        %v828 = vrot.slane %v708, %v827
        %v829 = vlaneseq
        %v830 = vshrl.u32 %v829, 7
        %v831 = vsub.s32 7, %v830
        %v832 = vrot.slane %v709, %v831
        %833 = vset.pattern.permute.xlu0 7
        %834 = vperm.xlu0 %833, %v711
        %v835 = vpop.permute.xlu0 %834
        %v837 = vmin.f32 %v828, %v835
        %v838 = vmin.f32 %v832, %v835
        %v839 = vadd.f32 %v823, %v837
        %v840 = vadd.f32 %v824, %v838
        %v841 = vrot.slane %v708, 4
        %v842 = vadd.f32 %v708, %v841
        %v843 = vrot.slane %v842, 2
        %v844 = vadd.f32 %v842, %v843
        %v845 = vrot.slane %v844, 1
        %v846 = vadd.f32 %v844, %v845
        %v847 = vrot.slane %v709, 4
        %v848 = vadd.f32 %v709, %v847
        %v849 = vrot.slane %v848, 2
        %v850 = vadd.f32 %v848, %v849
        %v851 = vrot.slane %v850, 1
        %v852 = vadd.f32 %v850, %v851
        %v853 = vadd.f32 %v705, %v846
        %v854 = vadd.f32 %v706, %v852
        %s855 = scalar_lea.vmem %s227, 64 [#allocation2]
        %v856 = vld [vmem:[%s855] sm:$0xff]
        %v857 = vld [vmem:[%s855 + $0x8] sm:$0xff]
        %s858 = scalar_lea.vmem %s1, 32
        %v859 = vld [vmem:[%s858] sm:$0xff]
        %v860 = vlaneseq
        %v861 = vshrl.u32 %v860, 7
        %v862 = vsub.s32 0, %v861
        %v863 = vrot.slane %v856, %v862
        %v864 = vlaneseq
        %v865 = vshrl.u32 %v864, 7
        %v866 = vsub.s32 0, %v865
        %v867 = vrot.slane %v857, %v866
        %869 = vset.pattern.permute.xlu0 0
        %870 = vperm.xlu0 %869, %v859
        %v871 = vpop.permute.xlu0 %870
        %v873 = vmin.f32 %v863, %v871
        %v874 = vmin.f32 %v867, %v871
        %v875 = vadd.f32 %v839, %v873
        %v876 = vadd.f32 %v840, %v874
        %v877 = vlaneseq
        %v878 = vshrl.u32 %v877, 7
        %v879 = vsub.s32 1, %v878
        %v880 = vrot.slane %v856, %v879
        %v881 = vlaneseq
        %v882 = vshrl.u32 %v881, 7
        %v883 = vsub.s32 1, %v882
        %v884 = vrot.slane %v857, %v883
        %885 = vset.pattern.permute.xlu0 1
        %886 = vperm.xlu0 %885, %v859
        %v887 = vpop.permute.xlu0 %886
        %v889 = vmin.f32 %v880, %v887
        %v890 = vmin.f32 %v884, %v887
        %v891 = vadd.f32 %v875, %v889
        %v892 = vadd.f32 %v876, %v890
        %v893 = vlaneseq
        %v894 = vshrl.u32 %v893, 7
        %v895 = vsub.s32 2, %v894
        %v896 = vrot.slane %v856, %v895
        %v897 = vlaneseq
        %v898 = vshrl.u32 %v897, 7
        %v899 = vsub.s32 2, %v898
        %v900 = vrot.slane %v857, %v899
        %901 = vset.pattern.permute.xlu0 2
        %902 = vperm.xlu0 %901, %v859
        %v903 = vpop.permute.xlu0 %902
        %v905 = vmin.f32 %v896, %v903
        %v906 = vmin.f32 %v900, %v903
        %v907 = vadd.f32 %v891, %v905
        %v908 = vadd.f32 %v892, %v906
        %v909 = vlaneseq
        %v910 = vshrl.u32 %v909, 7
        %v911 = vsub.s32 3, %v910
        %v912 = vrot.slane %v856, %v911
        %v913 = vlaneseq
        %v914 = vshrl.u32 %v913, 7
        %v915 = vsub.s32 3, %v914
        %v916 = vrot.slane %v857, %v915
        %917 = vset.pattern.permute.xlu0 3
        %918 = vperm.xlu0 %917, %v859
        %v919 = vpop.permute.xlu0 %918
        %v921 = vmin.f32 %v912, %v919
        %v922 = vmin.f32 %v916, %v919
        %v923 = vadd.f32 %v907, %v921
        %v924 = vadd.f32 %v908, %v922
        %v925 = vlaneseq
        %v926 = vshrl.u32 %v925, 7
        %v927 = vsub.s32 4, %v926
        %v928 = vrot.slane %v856, %v927
        %v929 = vlaneseq
        %v930 = vshrl.u32 %v929, 7
        %v931 = vsub.s32 4, %v930
        %v932 = vrot.slane %v857, %v931
        %933 = vset.pattern.permute.xlu0 4
        %934 = vperm.xlu0 %933, %v859
        %v935 = vpop.permute.xlu0 %934
        %v937 = vmin.f32 %v928, %v935
        %v938 = vmin.f32 %v932, %v935
        %v939 = vadd.f32 %v923, %v937
        %v940 = vadd.f32 %v924, %v938
        %v941 = vlaneseq
        %v942 = vshrl.u32 %v941, 7
        %v943 = vsub.s32 5, %v942
        %v944 = vrot.slane %v856, %v943
        %v945 = vlaneseq
        %v946 = vshrl.u32 %v945, 7
        %v947 = vsub.s32 5, %v946
        %v948 = vrot.slane %v857, %v947
        %949 = vset.pattern.permute.xlu0 5
        %950 = vperm.xlu0 %949, %v859
        %v951 = vpop.permute.xlu0 %950
        %v953 = vmin.f32 %v944, %v951
        %v954 = vmin.f32 %v948, %v951
        %v955 = vadd.f32 %v939, %v953
        %v956 = vadd.f32 %v940, %v954
        %v957 = vlaneseq
        %v958 = vshrl.u32 %v957, 7
        %v959 = vsub.s32 6, %v958
        %v960 = vrot.slane %v856, %v959
        %v961 = vlaneseq
        %v962 = vshrl.u32 %v961, 7
        %v963 = vsub.s32 6, %v962
        %v964 = vrot.slane %v857, %v963
        %965 = vset.pattern.permute.xlu0 6
        %966 = vperm.xlu0 %965, %v859
        %v967 = vpop.permute.xlu0 %966
        %v969 = vmin.f32 %v960, %v967
        %v970 = vmin.f32 %v964, %v967
        %v971 = vadd.f32 %v955, %v969
        %v972 = vadd.f32 %v956, %v970
        %v973 = vlaneseq
        %v974 = vshrl.u32 %v973, 7
        %v975 = vsub.s32 7, %v974
        %v976 = vrot.slane %v856, %v975
        %v977 = vlaneseq
        %v978 = vshrl.u32 %v977, 7
        %v979 = vsub.s32 7, %v978
        %v980 = vrot.slane %v857, %v979
        %981 = vset.pattern.permute.xlu0 7
        %982 = vperm.xlu0 %981, %v859
        %v983 = vpop.permute.xlu0 %982
        %v985 = vmin.f32 %v976, %v983
        %v986 = vmin.f32 %v980, %v983
        %v987 = vadd.f32 %v971, %v985
        %v988 = vadd.f32 %v972, %v986
        %v989 = vrot.slane %v856, 4
        %v990 = vadd.f32 %v856, %v989
        %v991 = vrot.slane %v990, 2
        %v992 = vadd.f32 %v990, %v991
        %v993 = vrot.slane %v992, 1
        %v994 = vadd.f32 %v992, %v993
        %v995 = vrot.slane %v857, 4
        %v996 = vadd.f32 %v857, %v995
        %v997 = vrot.slane %v996, 2
        %v998 = vadd.f32 %v996, %v997
        %v999 = vrot.slane %v998, 1
        %v1000 = vadd.f32 %v998, %v999
        %v1001 = vadd.f32 %v853, %v994
        %v1002 = vadd.f32 %v854, %v1000
        %s1003 = scalar_lea.vmem %s227, 80 [#allocation2]
        %v1004 = vld [vmem:[%s1003] sm:$0xff]
        %v1005 = vld [vmem:[%s1003 + $0x8] sm:$0xff]
        %s1006 = scalar_lea.vmem %s1, 40
        %v1007 = vld [vmem:[%s1006] sm:$0xff]
        %v1008 = vlaneseq
        %v1009 = vshrl.u32 %v1008, 7
        %v1010 = vsub.s32 0, %v1009
        %v1011 = vrot.slane %v1004, %v1010
        %v1012 = vlaneseq
        %v1013 = vshrl.u32 %v1012, 7
        %v1014 = vsub.s32 0, %v1013
        %v1015 = vrot.slane %v1005, %v1014
        %1017 = vset.pattern.permute.xlu0 0
        %1018 = vperm.xlu0 %1017, %v1007
        %v1019 = vpop.permute.xlu0 %1018
        %v1021 = vmin.f32 %v1011, %v1019
        %v1022 = vmin.f32 %v1015, %v1019
        %v1023 = vadd.f32 %v987, %v1021
        %v1024 = vadd.f32 %v988, %v1022
        %v1025 = vlaneseq
        %v1026 = vshrl.u32 %v1025, 7
        %v1027 = vsub.s32 1, %v1026
        %v1028 = vrot.slane %v1004, %v1027
        %v1029 = vlaneseq
        %v1030 = vshrl.u32 %v1029, 7
        %v1031 = vsub.s32 1, %v1030
        %v1032 = vrot.slane %v1005, %v1031
        %1033 = vset.pattern.permute.xlu0 1
        %1034 = vperm.xlu0 %1033, %v1007
        %v1035 = vpop.permute.xlu0 %1034
        %v1037 = vmin.f32 %v1028, %v1035
        %v1038 = vmin.f32 %v1032, %v1035
        %v1039 = vadd.f32 %v1023, %v1037
        %v1040 = vadd.f32 %v1024, %v1038
        %v1041 = vlaneseq
        %v1042 = vshrl.u32 %v1041, 7
        %v1043 = vsub.s32 2, %v1042
        %v1044 = vrot.slane %v1004, %v1043
        %v1045 = vlaneseq
        %v1046 = vshrl.u32 %v1045, 7
        %v1047 = vsub.s32 2, %v1046
        %v1048 = vrot.slane %v1005, %v1047
        %1049 = vset.pattern.permute.xlu0 2
        %1050 = vperm.xlu0 %1049, %v1007
        %v1051 = vpop.permute.xlu0 %1050
        %v1053 = vmin.f32 %v1044, %v1051
        %v1054 = vmin.f32 %v1048, %v1051
        %v1055 = vadd.f32 %v1039, %v1053
        %v1056 = vadd.f32 %v1040, %v1054
        %v1057 = vlaneseq
        %v1058 = vshrl.u32 %v1057, 7
        %v1059 = vsub.s32 3, %v1058
        %v1060 = vrot.slane %v1004, %v1059
        %v1061 = vlaneseq
        %v1062 = vshrl.u32 %v1061, 7
        %v1063 = vsub.s32 3, %v1062
        %v1064 = vrot.slane %v1005, %v1063
        %1065 = vset.pattern.permute.xlu0 3
        %1066 = vperm.xlu0 %1065, %v1007
        %v1067 = vpop.permute.xlu0 %1066
        %v1069 = vmin.f32 %v1060, %v1067
        %v1070 = vmin.f32 %v1064, %v1067
        %v1071 = vadd.f32 %v1055, %v1069
        %v1072 = vadd.f32 %v1056, %v1070
        %v1073 = vlaneseq
        %v1074 = vshrl.u32 %v1073, 7
        %v1075 = vsub.s32 4, %v1074
        %v1076 = vrot.slane %v1004, %v1075
        %v1077 = vlaneseq
        %v1078 = vshrl.u32 %v1077, 7
        %v1079 = vsub.s32 4, %v1078
        %v1080 = vrot.slane %v1005, %v1079
        %1081 = vset.pattern.permute.xlu0 4
        %1082 = vperm.xlu0 %1081, %v1007
        %v1083 = vpop.permute.xlu0 %1082
        %v1085 = vmin.f32 %v1076, %v1083
        %v1086 = vmin.f32 %v1080, %v1083
        %v1087 = vadd.f32 %v1071, %v1085
        %v1088 = vadd.f32 %v1072, %v1086
        %v1089 = vlaneseq
        %v1090 = vshrl.u32 %v1089, 7
        %v1091 = vsub.s32 5, %v1090
        %v1092 = vrot.slane %v1004, %v1091
        %v1093 = vlaneseq
        %v1094 = vshrl.u32 %v1093, 7
        %v1095 = vsub.s32 5, %v1094
        %v1096 = vrot.slane %v1005, %v1095
        %1097 = vset.pattern.permute.xlu0 5
        %1098 = vperm.xlu0 %1097, %v1007
        %v1099 = vpop.permute.xlu0 %1098
        %v1101 = vmin.f32 %v1092, %v1099
        %v1102 = vmin.f32 %v1096, %v1099
        %v1103 = vadd.f32 %v1087, %v1101
        %v1104 = vadd.f32 %v1088, %v1102
        %v1105 = vlaneseq
        %v1106 = vshrl.u32 %v1105, 7
        %v1107 = vsub.s32 6, %v1106
        %v1108 = vrot.slane %v1004, %v1107
        %v1109 = vlaneseq
        %v1110 = vshrl.u32 %v1109, 7
        %v1111 = vsub.s32 6, %v1110
        %v1112 = vrot.slane %v1005, %v1111
        %1113 = vset.pattern.permute.xlu0 6
        %1114 = vperm.xlu0 %1113, %v1007
        %v1115 = vpop.permute.xlu0 %1114
        %v1117 = vmin.f32 %v1108, %v1115
        %v1118 = vmin.f32 %v1112, %v1115
        %v1119 = vadd.f32 %v1103, %v1117
        %v1120 = vadd.f32 %v1104, %v1118
        %v1121 = vlaneseq
        %v1122 = vshrl.u32 %v1121, 7
        %v1123 = vsub.s32 7, %v1122
        %v1124 = vrot.slane %v1004, %v1123
        %v1125 = vlaneseq
        %v1126 = vshrl.u32 %v1125, 7
        %v1127 = vsub.s32 7, %v1126
        %v1128 = vrot.slane %v1005, %v1127
        %1129 = vset.pattern.permute.xlu0 7
        %1130 = vperm.xlu0 %1129, %v1007
        %v1131 = vpop.permute.xlu0 %1130
        %v1133 = vmin.f32 %v1124, %v1131
        %v1134 = vmin.f32 %v1128, %v1131
        %v1135 = vadd.f32 %v1119, %v1133
        %v1136 = vadd.f32 %v1120, %v1134
        %v1137 = vrot.slane %v1004, 4
        %v1138 = vadd.f32 %v1004, %v1137
        %v1139 = vrot.slane %v1138, 2
        %v1140 = vadd.f32 %v1138, %v1139
        %v1141 = vrot.slane %v1140, 1
        %v1142 = vadd.f32 %v1140, %v1141
        %v1143 = vrot.slane %v1005, 4
        %v1144 = vadd.f32 %v1005, %v1143
        %v1145 = vrot.slane %v1144, 2
        %v1146 = vadd.f32 %v1144, %v1145
        %v1147 = vrot.slane %v1146, 1
        %v1148 = vadd.f32 %v1146, %v1147
        %v1149 = vadd.f32 %v1001, %v1142
        %v1150 = vadd.f32 %v1002, %v1148
        %s1151 = scalar_lea.vmem %s227, 96 [#allocation2]
        %v1152 = vld [vmem:[%s1151] sm:$0xff]
        %v1153 = vld [vmem:[%s1151 + $0x8] sm:$0xff]
        %s1154 = scalar_lea.vmem %s1, 48
        %v1155 = vld [vmem:[%s1154] sm:$0xff]
        %v1156 = vlaneseq
        %v1157 = vshrl.u32 %v1156, 7
        %v1158 = vsub.s32 0, %v1157
        %v1159 = vrot.slane %v1152, %v1158
        %v1160 = vlaneseq
        %v1161 = vshrl.u32 %v1160, 7
        %v1162 = vsub.s32 0, %v1161
        %v1163 = vrot.slane %v1153, %v1162
        %1165 = vset.pattern.permute.xlu0 0
        %1166 = vperm.xlu0 %1165, %v1155
        %v1167 = vpop.permute.xlu0 %1166
        %v1169 = vmin.f32 %v1159, %v1167
        %v1170 = vmin.f32 %v1163, %v1167
        %v1171 = vadd.f32 %v1135, %v1169
        %v1172 = vadd.f32 %v1136, %v1170
        %v1173 = vlaneseq
        %v1174 = vshrl.u32 %v1173, 7
        %v1175 = vsub.s32 1, %v1174
        %v1176 = vrot.slane %v1152, %v1175
        %v1177 = vlaneseq
        %v1178 = vshrl.u32 %v1177, 7
        %v1179 = vsub.s32 1, %v1178
        %v1180 = vrot.slane %v1153, %v1179
        %1181 = vset.pattern.permute.xlu0 1
        %1182 = vperm.xlu0 %1181, %v1155
        %v1183 = vpop.permute.xlu0 %1182
        %v1185 = vmin.f32 %v1176, %v1183
        %v1186 = vmin.f32 %v1180, %v1183
        %v1187 = vadd.f32 %v1171, %v1185
        %v1188 = vadd.f32 %v1172, %v1186
        %v1189 = vlaneseq
        %v1190 = vshrl.u32 %v1189, 7
        %v1191 = vsub.s32 2, %v1190
        %v1192 = vrot.slane %v1152, %v1191
        %v1193 = vlaneseq
        %v1194 = vshrl.u32 %v1193, 7
        %v1195 = vsub.s32 2, %v1194
        %v1196 = vrot.slane %v1153, %v1195
        %1197 = vset.pattern.permute.xlu0 2
        %1198 = vperm.xlu0 %1197, %v1155
        %v1199 = vpop.permute.xlu0 %1198
        %v1201 = vmin.f32 %v1192, %v1199
        %v1202 = vmin.f32 %v1196, %v1199
        %v1203 = vadd.f32 %v1187, %v1201
        %v1204 = vadd.f32 %v1188, %v1202
        %v1205 = vlaneseq
        %v1206 = vshrl.u32 %v1205, 7
        %v1207 = vsub.s32 3, %v1206
        %v1208 = vrot.slane %v1152, %v1207
        %v1209 = vlaneseq
        %v1210 = vshrl.u32 %v1209, 7
        %v1211 = vsub.s32 3, %v1210
        %v1212 = vrot.slane %v1153, %v1211
        %1213 = vset.pattern.permute.xlu0 3
        %1214 = vperm.xlu0 %1213, %v1155
        %v1215 = vpop.permute.xlu0 %1214
        %v1217 = vmin.f32 %v1208, %v1215
        %v1218 = vmin.f32 %v1212, %v1215
        %v1219 = vadd.f32 %v1203, %v1217
        %v1220 = vadd.f32 %v1204, %v1218
        %v1221 = vlaneseq
        %v1222 = vshrl.u32 %v1221, 7
        %v1223 = vsub.s32 4, %v1222
        %v1224 = vrot.slane %v1152, %v1223
        %v1225 = vlaneseq
        %v1226 = vshrl.u32 %v1225, 7
        %v1227 = vsub.s32 4, %v1226
        %v1228 = vrot.slane %v1153, %v1227
        %1229 = vset.pattern.permute.xlu0 4
        %1230 = vperm.xlu0 %1229, %v1155
        %v1231 = vpop.permute.xlu0 %1230
        %v1233 = vmin.f32 %v1224, %v1231
        %v1234 = vmin.f32 %v1228, %v1231
        %v1235 = vadd.f32 %v1219, %v1233
        %v1236 = vadd.f32 %v1220, %v1234
        %v1237 = vlaneseq
        %v1238 = vshrl.u32 %v1237, 7
        %v1239 = vsub.s32 5, %v1238
        %v1240 = vrot.slane %v1152, %v1239
        %v1241 = vlaneseq
        %v1242 = vshrl.u32 %v1241, 7
        %v1243 = vsub.s32 5, %v1242
        %v1244 = vrot.slane %v1153, %v1243
        %1245 = vset.pattern.permute.xlu0 5
        %1246 = vperm.xlu0 %1245, %v1155
        %v1247 = vpop.permute.xlu0 %1246
        %v1249 = vmin.f32 %v1240, %v1247
        %v1250 = vmin.f32 %v1244, %v1247
        %v1251 = vadd.f32 %v1235, %v1249
        %v1252 = vadd.f32 %v1236, %v1250
        %v1253 = vlaneseq
        %v1254 = vshrl.u32 %v1253, 7
        %v1255 = vsub.s32 6, %v1254
        %v1256 = vrot.slane %v1152, %v1255
        %v1257 = vlaneseq
        %v1258 = vshrl.u32 %v1257, 7
        %v1259 = vsub.s32 6, %v1258
        %v1260 = vrot.slane %v1153, %v1259
        %1261 = vset.pattern.permute.xlu0 6
        %1262 = vperm.xlu0 %1261, %v1155
        %v1263 = vpop.permute.xlu0 %1262
        %v1265 = vmin.f32 %v1256, %v1263
        %v1266 = vmin.f32 %v1260, %v1263
        %v1267 = vadd.f32 %v1251, %v1265
        %v1268 = vadd.f32 %v1252, %v1266
        %v1269 = vlaneseq
        %v1270 = vshrl.u32 %v1269, 7
        %v1271 = vsub.s32 7, %v1270
        %v1272 = vrot.slane %v1152, %v1271
        %v1273 = vlaneseq
        %v1274 = vshrl.u32 %v1273, 7
        %v1275 = vsub.s32 7, %v1274
        %v1276 = vrot.slane %v1153, %v1275
        %1277 = vset.pattern.permute.xlu0 7
        %1278 = vperm.xlu0 %1277, %v1155
        %v1279 = vpop.permute.xlu0 %1278
        %v1281 = vmin.f32 %v1272, %v1279
        %v1282 = vmin.f32 %v1276, %v1279
        %v1283 = vadd.f32 %v1267, %v1281
        %v1284 = vadd.f32 %v1268, %v1282
        %v1285 = vrot.slane %v1152, 4
        %v1286 = vadd.f32 %v1152, %v1285
        %v1287 = vrot.slane %v1286, 2
        %v1288 = vadd.f32 %v1286, %v1287
        %v1289 = vrot.slane %v1288, 1
        %v1290 = vadd.f32 %v1288, %v1289
        %v1291 = vrot.slane %v1153, 4
        %v1292 = vadd.f32 %v1153, %v1291
        %v1293 = vrot.slane %v1292, 2
        %v1294 = vadd.f32 %v1292, %v1293
        %v1295 = vrot.slane %v1294, 1
        %v1296 = vadd.f32 %v1294, %v1295
        %v1297 = vadd.f32 %v1149, %v1290
        %v1298 = vadd.f32 %v1150, %v1296
        %s1299 = scalar_lea.vmem %s227, 112 [#allocation2]
        %v1300 = vld [vmem:[%s1299] sm:$0xff]
        %v1301 = vld [vmem:[%s1299 + $0x8] sm:$0xff]
        %s1302 = scalar_lea.vmem %s1, 56
        %v1303 = vld [vmem:[%s1302] sm:$0xff]
        %v1304 = vlaneseq
        %v1305 = vshrl.u32 %v1304, 7
        %v1306 = vsub.s32 0, %v1305
        %v1307 = vrot.slane %v1300, %v1306
        %v1308 = vlaneseq
        %v1309 = vshrl.u32 %v1308, 7
        %v1310 = vsub.s32 0, %v1309
        %v1311 = vrot.slane %v1301, %v1310
        %1313 = vset.pattern.permute.xlu0 0
        %1314 = vperm.xlu0 %1313, %v1303
        %v1315 = vpop.permute.xlu0 %1314
        %v1317 = vmin.f32 %v1307, %v1315
        %v1318 = vmin.f32 %v1311, %v1315
        %v1319 = vadd.f32 %v1283, %v1317
        %v1320 = vadd.f32 %v1284, %v1318
        %v1321 = vlaneseq
        %v1322 = vshrl.u32 %v1321, 7
        %v1323 = vsub.s32 1, %v1322
        %v1324 = vrot.slane %v1300, %v1323
        %v1325 = vlaneseq
        %v1326 = vshrl.u32 %v1325, 7
        %v1327 = vsub.s32 1, %v1326
        %v1328 = vrot.slane %v1301, %v1327
        %1329 = vset.pattern.permute.xlu0 1
        %1330 = vperm.xlu0 %1329, %v1303
        %v1331 = vpop.permute.xlu0 %1330
        %v1333 = vmin.f32 %v1324, %v1331
        %v1334 = vmin.f32 %v1328, %v1331
        %v1335 = vadd.f32 %v1319, %v1333
        %v1336 = vadd.f32 %v1320, %v1334
        %v1337 = vlaneseq
        %v1338 = vshrl.u32 %v1337, 7
        %v1339 = vsub.s32 2, %v1338
        %v1340 = vrot.slane %v1300, %v1339
        %v1341 = vlaneseq
        %v1342 = vshrl.u32 %v1341, 7
        %v1343 = vsub.s32 2, %v1342
        %v1344 = vrot.slane %v1301, %v1343
        %1345 = vset.pattern.permute.xlu0 2
        %1346 = vperm.xlu0 %1345, %v1303
        %v1347 = vpop.permute.xlu0 %1346
        %v1349 = vmin.f32 %v1340, %v1347
        %v1350 = vmin.f32 %v1344, %v1347
        %v1351 = vadd.f32 %v1335, %v1349
        %v1352 = vadd.f32 %v1336, %v1350
        %v1353 = vlaneseq
        %v1354 = vshrl.u32 %v1353, 7
        %v1355 = vsub.s32 3, %v1354
        %v1356 = vrot.slane %v1300, %v1355
        %v1357 = vlaneseq
        %v1358 = vshrl.u32 %v1357, 7
        %v1359 = vsub.s32 3, %v1358
        %v1360 = vrot.slane %v1301, %v1359
        %1361 = vset.pattern.permute.xlu0 3
        %1362 = vperm.xlu0 %1361, %v1303
        %v1363 = vpop.permute.xlu0 %1362
        %v1365 = vmin.f32 %v1356, %v1363
        %v1366 = vmin.f32 %v1360, %v1363
        %v1367 = vadd.f32 %v1351, %v1365
        %v1368 = vadd.f32 %v1352, %v1366
        %v1369 = vlaneseq
        %v1370 = vshrl.u32 %v1369, 7
        %v1371 = vsub.s32 4, %v1370
        %v1372 = vrot.slane %v1300, %v1371
        %v1373 = vlaneseq
        %v1374 = vshrl.u32 %v1373, 7
        %v1375 = vsub.s32 4, %v1374
        %v1376 = vrot.slane %v1301, %v1375
        %1377 = vset.pattern.permute.xlu0 4
        %1378 = vperm.xlu0 %1377, %v1303
        %v1379 = vpop.permute.xlu0 %1378
        %v1381 = vmin.f32 %v1372, %v1379
        %v1382 = vmin.f32 %v1376, %v1379
        %v1383 = vadd.f32 %v1367, %v1381
        %v1384 = vadd.f32 %v1368, %v1382
        %v1385 = vlaneseq
        %v1386 = vshrl.u32 %v1385, 7
        %v1387 = vsub.s32 5, %v1386
        %v1388 = vrot.slane %v1300, %v1387
        %v1389 = vlaneseq
        %v1390 = vshrl.u32 %v1389, 7
        %v1391 = vsub.s32 5, %v1390
        %v1392 = vrot.slane %v1301, %v1391
        %1393 = vset.pattern.permute.xlu0 5
        %1394 = vperm.xlu0 %1393, %v1303
        %v1395 = vpop.permute.xlu0 %1394
        %v1397 = vmin.f32 %v1388, %v1395
        %v1398 = vmin.f32 %v1392, %v1395
        %v1399 = vadd.f32 %v1383, %v1397
        %v1400 = vadd.f32 %v1384, %v1398
        %v1401 = vlaneseq
        %v1402 = vshrl.u32 %v1401, 7
        %v1403 = vsub.s32 6, %v1402
        %v1404 = vrot.slane %v1300, %v1403
        %v1405 = vlaneseq
        %v1406 = vshrl.u32 %v1405, 7
        %v1407 = vsub.s32 6, %v1406
        %v1408 = vrot.slane %v1301, %v1407
        %1409 = vset.pattern.permute.xlu0 6
        %1410 = vperm.xlu0 %1409, %v1303
        %v1411 = vpop.permute.xlu0 %1410
        %v1413 = vmin.f32 %v1404, %v1411
        %v1414 = vmin.f32 %v1408, %v1411
        %v1415 = vadd.f32 %v1399, %v1413
        %v1416 = vadd.f32 %v1400, %v1414
        %v1417 = vlaneseq
        %v1418 = vshrl.u32 %v1417, 7
        %v1419 = vsub.s32 7, %v1418
        %v1420 = vrot.slane %v1300, %v1419
        %v1421 = vlaneseq
        %v1422 = vshrl.u32 %v1421, 7
        %v1423 = vsub.s32 7, %v1422
        %v1424 = vrot.slane %v1301, %v1423
        %1425 = vset.pattern.permute.xlu0 7
        %1426 = vperm.xlu0 %1425, %v1303
        %v1427 = vpop.permute.xlu0 %1426
        %v1429 = vmin.f32 %v1420, %v1427
        %v1430 = vmin.f32 %v1424, %v1427
        %v1431 = vadd.f32 %v1415, %v1429
        %v1432 = vadd.f32 %v1416, %v1430
        %v1433 = vrot.slane %v1300, 4
        %v1434 = vadd.f32 %v1300, %v1433
        %v1435 = vrot.slane %v1434, 2
        %v1436 = vadd.f32 %v1434, %v1435
        %v1437 = vrot.slane %v1436, 1
        %v1438 = vadd.f32 %v1436, %v1437
        %v1439 = vrot.slane %v1301, 4
        %v1440 = vadd.f32 %v1301, %v1439
        %v1441 = vrot.slane %v1440, 2
        %v1442 = vadd.f32 %v1440, %v1441
        %v1443 = vrot.slane %v1442, 1
        %v1444 = vadd.f32 %v1442, %v1443
        %v1445 = vadd.f32 %v1297, %v1438
        %v1446 = vadd.f32 %v1298, %v1444
        %s1447 = scalar_lea.vmem %s227, 128 [#allocation2]
        %v1448 = vld [vmem:[%s1447] sm:$0xff]
        %v1449 = vld [vmem:[%s1447 + $0x8] sm:$0xff]
        %s1450 = scalar_lea.vmem %s1, 64
        %v1451 = vld [vmem:[%s1450] sm:$0xff]
        %v1452 = vlaneseq
        %v1453 = vshrl.u32 %v1452, 7
        %v1454 = vsub.s32 0, %v1453
        %v1455 = vrot.slane %v1448, %v1454
        %v1456 = vlaneseq
        %v1457 = vshrl.u32 %v1456, 7
        %v1458 = vsub.s32 0, %v1457
        %v1459 = vrot.slane %v1449, %v1458
        %1461 = vset.pattern.permute.xlu0 0
        %1462 = vperm.xlu0 %1461, %v1451
        %v1463 = vpop.permute.xlu0 %1462
        %v1465 = vmin.f32 %v1455, %v1463
        %v1466 = vmin.f32 %v1459, %v1463
        %v1467 = vadd.f32 %v1431, %v1465
        %v1468 = vadd.f32 %v1432, %v1466
        %v1469 = vlaneseq
        %v1470 = vshrl.u32 %v1469, 7
        %v1471 = vsub.s32 1, %v1470
        %v1472 = vrot.slane %v1448, %v1471
        %v1473 = vlaneseq
        %v1474 = vshrl.u32 %v1473, 7
        %v1475 = vsub.s32 1, %v1474
        %v1476 = vrot.slane %v1449, %v1475
        %1477 = vset.pattern.permute.xlu0 1
        %1478 = vperm.xlu0 %1477, %v1451
        %v1479 = vpop.permute.xlu0 %1478
        %v1481 = vmin.f32 %v1472, %v1479
        %v1482 = vmin.f32 %v1476, %v1479
        %v1483 = vadd.f32 %v1467, %v1481
        %v1484 = vadd.f32 %v1468, %v1482
        %v1485 = vlaneseq
        %v1486 = vshrl.u32 %v1485, 7
        %v1487 = vsub.s32 2, %v1486
        %v1488 = vrot.slane %v1448, %v1487
        %v1489 = vlaneseq
        %v1490 = vshrl.u32 %v1489, 7
        %v1491 = vsub.s32 2, %v1490
        %v1492 = vrot.slane %v1449, %v1491
        %1493 = vset.pattern.permute.xlu0 2
        %1494 = vperm.xlu0 %1493, %v1451
        %v1495 = vpop.permute.xlu0 %1494
        %v1497 = vmin.f32 %v1488, %v1495
        %v1498 = vmin.f32 %v1492, %v1495
        %v1499 = vadd.f32 %v1483, %v1497
        %v1500 = vadd.f32 %v1484, %v1498
        %v1501 = vlaneseq
        %v1502 = vshrl.u32 %v1501, 7
        %v1503 = vsub.s32 3, %v1502
        %v1504 = vrot.slane %v1448, %v1503
        %v1505 = vlaneseq
        %v1506 = vshrl.u32 %v1505, 7
        %v1507 = vsub.s32 3, %v1506
        %v1508 = vrot.slane %v1449, %v1507
        %1509 = vset.pattern.permute.xlu0 3
        %1510 = vperm.xlu0 %1509, %v1451
        %v1511 = vpop.permute.xlu0 %1510
        %v1513 = vmin.f32 %v1504, %v1511
        %v1514 = vmin.f32 %v1508, %v1511
        %v1515 = vadd.f32 %v1499, %v1513
        %v1516 = vadd.f32 %v1500, %v1514
        %v1517 = vlaneseq
        %v1518 = vshrl.u32 %v1517, 7
        %v1519 = vsub.s32 4, %v1518
        %v1520 = vrot.slane %v1448, %v1519
        %v1521 = vlaneseq
        %v1522 = vshrl.u32 %v1521, 7
        %v1523 = vsub.s32 4, %v1522
        %v1524 = vrot.slane %v1449, %v1523
        %1525 = vset.pattern.permute.xlu0 4
        %1526 = vperm.xlu0 %1525, %v1451
        %v1527 = vpop.permute.xlu0 %1526
        %v1529 = vmin.f32 %v1520, %v1527
        %v1530 = vmin.f32 %v1524, %v1527
        %v1531 = vadd.f32 %v1515, %v1529
        %v1532 = vadd.f32 %v1516, %v1530
        %v1533 = vlaneseq
        %v1534 = vshrl.u32 %v1533, 7
        %v1535 = vsub.s32 5, %v1534
        %v1536 = vrot.slane %v1448, %v1535
        %v1537 = vlaneseq
        %v1538 = vshrl.u32 %v1537, 7
        %v1539 = vsub.s32 5, %v1538
        %v1540 = vrot.slane %v1449, %v1539
        %1541 = vset.pattern.permute.xlu0 5
        %1542 = vperm.xlu0 %1541, %v1451
        %v1543 = vpop.permute.xlu0 %1542
        %v1545 = vmin.f32 %v1536, %v1543
        %v1546 = vmin.f32 %v1540, %v1543
        %v1547 = vadd.f32 %v1531, %v1545
        %v1548 = vadd.f32 %v1532, %v1546
        %v1549 = vlaneseq
        %v1550 = vshrl.u32 %v1549, 7
        %v1551 = vsub.s32 6, %v1550
        %v1552 = vrot.slane %v1448, %v1551
        %v1553 = vlaneseq
        %v1554 = vshrl.u32 %v1553, 7
        %v1555 = vsub.s32 6, %v1554
        %v1556 = vrot.slane %v1449, %v1555
        %1557 = vset.pattern.permute.xlu0 6
        %1558 = vperm.xlu0 %1557, %v1451
        %v1559 = vpop.permute.xlu0 %1558
        %v1561 = vmin.f32 %v1552, %v1559
        %v1562 = vmin.f32 %v1556, %v1559
        %v1563 = vadd.f32 %v1547, %v1561
        %v1564 = vadd.f32 %v1548, %v1562
        %v1565 = vlaneseq
        %v1566 = vshrl.u32 %v1565, 7
        %v1567 = vsub.s32 7, %v1566
        %v1568 = vrot.slane %v1448, %v1567
        %v1569 = vlaneseq
        %v1570 = vshrl.u32 %v1569, 7
        %v1571 = vsub.s32 7, %v1570
        %v1572 = vrot.slane %v1449, %v1571
        %1573 = vset.pattern.permute.xlu0 7
        %1574 = vperm.xlu0 %1573, %v1451
        %v1575 = vpop.permute.xlu0 %1574
        %v1577 = vmin.f32 %v1568, %v1575
        %v1578 = vmin.f32 %v1572, %v1575
        %v1579 = vadd.f32 %v1563, %v1577
        %v1580 = vadd.f32 %v1564, %v1578
        %v1581 = vrot.slane %v1448, 4
        %v1582 = vadd.f32 %v1448, %v1581
        %v1583 = vrot.slane %v1582, 2
        %v1584 = vadd.f32 %v1582, %v1583
        %v1585 = vrot.slane %v1584, 1
        %v1586 = vadd.f32 %v1584, %v1585
        %v1587 = vrot.slane %v1449, 4
        %v1588 = vadd.f32 %v1449, %v1587
        %v1589 = vrot.slane %v1588, 2
        %v1590 = vadd.f32 %v1588, %v1589
        %v1591 = vrot.slane %v1590, 1
        %v1592 = vadd.f32 %v1590, %v1591
        %v1593 = vadd.f32 %v1445, %v1586
        %v1594 = vadd.f32 %v1446, %v1592
        %v1595 = vmul.f32 %v1579, 2.0
        %v1596 = vmul.f32 %v1580, 2.0
        %v1597 = vsub.f32 %v1595, %v1593
        %v1598 = vsub.f32 %v1596, %v1594
        %v1599 = vld [vmem:[%s2] sm:$0xff]
        %1601 = vset.pattern.permute.xlu0 0
        %1602 = vperm.xlu0 %1601, %v1599
        %v1603 = vpop.permute.xlu0 %1602
        %v1605 = vsub.f32 %v1597, %v1603
        %v1606 = vsub.f32 %v1598, %v1603
        %1607 = vst [vmem:[%s259] sm:$0xff] %v1605
        %1608 = vst [vmem:[%s259 + $0x8] sm:$0xff] %v1606
        %v1609 = vlaneseq
        %v1610 = vand.u32 %v1609, 127
        %v1611 = vadd.s32 %v1610, 128
        %s1612 = smul.u32 %s16, 256
        %v1613 = vstv %s1612
        %v1614 = vadd.s32 %v1610, %v1613
        %v1615 = vadd.s32 %v1611, %v1613
        %vm1616 = vcmp.lt.s32.totalorder %v1614, 512
        %vm1617 = vcmp.lt.s32.totalorder %v1615, 512
        %s1618 = ssub.s32 512, %s1612
        %p1619 = scmp.lt.s32.totalorder %s1618, 256
        %s1620 = scalar_select %p1619, %s1618, 256
        %s1621 = scvt.s32.f32 %s1620
        %v1622 = vsel %vm1616, 1, 0
        %v1623 = vsel %vm1617, 1, 0
        %vm1624 = vcmp.eq.s32.totalorder %v1622, 1
        %vm1625 = vcmp.eq.s32.totalorder %v1623, 1
        %v1626 = vsel %vm1624, %v1605, 0.0
        %v1627 = vsel %vm1625, %v1606, 0.0
        %v1628 = vadd.f32 %v1626, %v1627
        %1629 = vadd.xlane.f32.xlu0 %v1628
        %v1630 = vpop.xlane.xlu0 %1629
        %v1631 = vstv %s1621
        %v1632 = vrcp.pop %v1631
        %v1633 = vmul.f32 %v1630, %v1632
        %v1634 = vsub.f32 %v1605, %v1633
        %v1635 = vsub.f32 %v1606, %v1633
        %v1636 = vsel %vm1624, %v1634, 0.0
        %v1637 = vsel %vm1625, %v1635, 0.0
        %v1638 = vmul.f32 %v1636, %v1636
        %v1639 = vmul.f32 %v1637, %v1637
        %v1640 = vadd.f32 %v1638, %v1639
        %1641 = vadd.xlane.f32.xlu0 %v1640
        %v1642 = vpop.xlane.xlu0 %1641
        %vm1643 = vcmask 7168
        %v1644 = vsel %vm1643, %v1630, %v1642
        %vm1645 = vcmask 15360
        %1646 = vst.msk [vmem:[%s264] sm:$0xff] %vm1645, %v1644
        %s1647 = smul.u32 2, %s16
        %p1648 = scmp.lt.s32.totalorder %s1647, 3
        %s1649 = scalar_select %p1648, %s1647, 3
        %s1650 = smul.addr %s1649, 8
        %s1651 = scalar_lea.vmem %s3, %s1650
        %p1652 = scmp.lt.s32.totalorder %s16, 1
        %s1653 = scalar_select %p1652, %s16, 1
        %s1654 = smul.addr %s1653, 8
        %s1655 = scalar_lea.vmem %s4, %s1654
        // Predicated region
        $region56: #{basic_block_forward.4} parent=50 // pred_check
          %p1656 = pneg %p102
        $region57: #{basic_block_forward.4} parent=50 // pred_check_branch
          %1658 = sbr.rel (%p1656) target = $region59
        $region58: #{basic_block_forward.4} parent=50 // pred_region
          %s1659 = smul.u32 2, %s16
        $region59: #{basic_block_forward.4} parent=50 // pred_fallthru
          _
        // Predicated region
        $region60: #{basic_block_forward.4} parent=50 // pred_check
          %p1660 = pneg %p128
        $region61: #{basic_block_forward.4} parent=50 // pred_check_branch
          %1662 = sbr.rel (%p1660) target = $region63
        $region62: #{basic_block_forward.4} parent=50 // pred_region
          _
        $region63: #{basic_block_forward.4} parent=50 // pred_fallthru
          _
      $region51: #{basic_block_forward.4} parent=5 // pred_fallthru
        _
      %p1663 = scmp.le.s32.totalorder 2, %s11
      // Predicated region
      $region64: #{basic_block_forward.4} parent=5 // pred_check
        %p1664 = pneg %p1663
      $region65: #{basic_block_forward.4} parent=5 // pred_check_branch
        %1666 = sbr.rel (%p1664) target = $region67
      $region66: #{basic_block_forward.4} parent=5 // pred_region
        %s1667 = ssub.s32 %s11, 2
        // Predicated region
        $region68: #{basic_block_forward.4} parent=66 // pred_check
          %p1668 = pneg %p108
        $region69: #{basic_block_forward.4} parent=66 // pred_check_branch
          %1670 = sbr.rel (%p1668) target = $region71
        $region70: #{basic_block_forward.4} parent=66 // pred_region
          %s1671 = smul.u32 2, %s17
          %p1672 = scmp.lt.s32.totalorder %s1671, 3
          %s1673 = scalar_select %p1672, %s1671, 3
          %s1674 = smul.addr %s1673, 8
          %s1675 = scalar_lea.vmem %s3, %s1674
        $region71: #{basic_block_forward.4} parent=66 // pred_fallthru
          _
        // Predicated region
        $region72: #{basic_block_forward.4} parent=66 // pred_check
          %p1676 = pneg %p134
        $region73: #{basic_block_forward.4} parent=66 // pred_check_branch
          %1678 = sbr.rel (%p1676) target = $region75
        $region74: #{basic_block_forward.4} parent=66 // pred_region
          %p1679 = scmp.lt.s32.totalorder %s17, 1
          %s1680 = scalar_select %p1679, %s17, 1
          %s1681 = smul.addr %s1680, 8
          %s1682 = scalar_lea.vmem %s4, %s1681
        $region75: #{basic_block_forward.4} parent=66 // pred_fallthru
          _
      $region67: #{basic_block_forward.4} parent=5 // pred_fallthru
        _
    $region6: #{basic_block_forward.4} parent=1 // loop_footer
      %s15 = sadd.s32 1, %s11
    $region7: #{basic_block_forward.4} parent=1 // loop_footer_branch
      %10 = sbr.rel target = $region3
    $region8: #{basic_block_forward.4} parent=1 // loop_exit
      _

// kernel: basic_block_forward.7
$region0: #{basic_block_forward.7}
  #allocation0 [shape = 'u32[]', space=smem, size = 0x4, offset = 0x4, fixed_abs, tag = 'smem constant byte address 0x4 - core index']
  #allocation1 [shape = 'u32[144,128]{1,0:T(1,128)}', space=vmem, size = 0x12000, scoped, tag = 'internal scratch']
  %s0 = inlined_call_operand.vmem [shape: f32[8,512], index: 0, kind: input, shape index: {}]
  %s1 = inlined_call_operand.vmem [shape: f32[8,512], index: 1, kind: input, shape index: {}]
  %s2 = inlined_call_operand.vmem [shape: f32[8,1], index: 2, kind: input, shape index: {}]
  %s3 = inlined_call_operand.vmem [shape: f32[8,1], index: 3, kind: input, shape index: {}]
  %s4 = inlined_call_operand.vmem [shape: f32[8,512], index: 4, kind: output, shape index: {}]
  %s5 = sld [smem:[#allocation0]]
  $region49: #{basic_block_forward.7} parent=0
    _
  %s7 = ssub.s32 1, %s5
  %s8 = scalar_select 0, %s7, %s5
  loop: start=0, step=1, limit=4
  $region2: #{basic_block_forward.7} parent=0 // loop_pre_header
    _
  $region3: #{basic_block_forward.7} parent=0 // loop_header
    %s10 = sphi 0, %s14
    %p11 = scmp.ge.s32.totalorder %s10, 4
    %s20 = sphi 0, %s22
    %s23 = sphi 0, %s20
    %s24 = sphi 0, %s23
    %s40 = sphi 0, %s24
    %s46 = sphi 0, %s48
    %s49 = sphi 0, %s46
    %s50 = sphi 0, %s49
    %s66 = sphi 0, %s50
    %s70 = sphi 0, %s70
    %s72 = sphi 0, %s70
    %s73 = sphi 0, %s72
    %s87 = sphi 0, %s73
    %s91 = sphi 0, %s91
    %s93 = sphi 0, %s91
    %s94 = sphi 0, %s93
    %s108 = sphi 0, %s94
    %s114 = sphi 0, %s116
    %s117 = sphi 0, %s114
    %s118 = sphi 0, %s117
    %s134 = sphi 0, %s118
  $region4: #{basic_block_forward.7} parent=0 // loop_header_branch
    %13 = sbr.rel (%p11) target = $region8
  $region5: #{basic_block_forward.7} parent=0 // loop_body
    %s15 = ssub.s32 %s10, 1
    %s16 = ssub.s32 %s10, 2
    %s17 = sadd.s32 %s10, 1
    %s18 = ssub.s32 %s10, %s17
    %p19 = scmp.eq.s32.totalorder %s18, 0
    %s21 = sadd.s32 %s20, 1
    %s22 = scalar_select %p19, %s20, %s21
    %p25 = pneg %p19
    %p26 = scmp.eq.s32.totalorder %s10, 1
    %p27 = por %p25, %p26
    %p28 = scmp.ne.s32.totalorder %s20, %s23
    %p29 = scmp.eq.s32.totalorder %s10, 0
    %p30 = por %p28, %p29
    %p31 = scmp.ne.s32.totalorder %s20, %s23
    %p32 = scmp.eq.s32.totalorder %s15, 1
    %p33 = por %p31, %p32
    %p34 = scmp.ne.s32.totalorder %s23, %s24
    %p35 = scmp.eq.s32.totalorder %s15, 0
    %p36 = por %p34, %p35
    %p37 = scmp.ne.s32.totalorder %s23, %s24
    %p38 = scmp.eq.s32.totalorder %s16, 1
    %p39 = por %p37, %p38
    %p41 = scmp.ne.s32.totalorder %s24, %s40
    %p42 = scmp.eq.s32.totalorder %s16, 0
    %p43 = por %p41, %p42
    %s44 = ssub.s32 %s10, %s17
    %p45 = scmp.eq.s32.totalorder %s44, 0
    %s47 = sadd.s32 %s46, 1
    %s48 = scalar_select %p45, %s46, %s47
    %p51 = pneg %p45
    %p52 = scmp.eq.s32.totalorder %s10, 1
    %p53 = por %p51, %p52
    %p54 = scmp.ne.s32.totalorder %s46, %s49
    %p55 = scmp.eq.s32.totalorder %s10, 0
    %p56 = por %p54, %p55
    %p57 = scmp.ne.s32.totalorder %s46, %s49
    %p58 = scmp.eq.s32.totalorder %s15, 1
    %p59 = por %p57, %p58
    %p60 = scmp.ne.s32.totalorder %s49, %s50
    %p61 = scmp.eq.s32.totalorder %s15, 0
    %p62 = por %p60, %p61
    %p63 = scmp.ne.s32.totalorder %s49, %s50
    %p64 = scmp.eq.s32.totalorder %s16, 1
    %p65 = por %p63, %p64
    %p67 = scmp.ne.s32.totalorder %s50, %s66
    %p68 = scmp.eq.s32.totalorder %s16, 0
    %p69 = por %p67, %p68
    %s71 = sadd.s32 %s70, 1
    %p74 = scmp.eq.s32.totalorder %s10, 1
    %p75 = scmp.ne.s32.totalorder %s70, %s72
    %p76 = scmp.eq.s32.totalorder %s10, 0
    %p77 = por %p75, %p76
    %p78 = scmp.ne.s32.totalorder %s70, %s72
    %p79 = scmp.eq.s32.totalorder %s15, 1
    %p80 = por %p78, %p79
    %p81 = scmp.ne.s32.totalorder %s72, %s73
    %p82 = scmp.eq.s32.totalorder %s15, 0
    %p83 = por %p81, %p82
    %p84 = scmp.ne.s32.totalorder %s72, %s73
    %p85 = scmp.eq.s32.totalorder %s16, 1
    %p86 = por %p84, %p85
    %p88 = scmp.ne.s32.totalorder %s73, %s87
    %p89 = scmp.eq.s32.totalorder %s16, 0
    %p90 = por %p88, %p89
    %s92 = sadd.s32 %s91, 1
    %p95 = scmp.eq.s32.totalorder %s10, 1
    %p96 = scmp.ne.s32.totalorder %s91, %s93
    %p97 = scmp.eq.s32.totalorder %s10, 0
    %p98 = por %p96, %p97
    %p99 = scmp.ne.s32.totalorder %s91, %s93
    %p100 = scmp.eq.s32.totalorder %s15, 1
    %p101 = por %p99, %p100
    %p102 = scmp.ne.s32.totalorder %s93, %s94
    %p103 = scmp.eq.s32.totalorder %s15, 0
    %p104 = por %p102, %p103
    %p105 = scmp.ne.s32.totalorder %s93, %s94
    %p106 = scmp.eq.s32.totalorder %s16, 1
    %p107 = por %p105, %p106
    %p109 = scmp.ne.s32.totalorder %s94, %s108
    %p110 = scmp.eq.s32.totalorder %s16, 0
    %p111 = por %p109, %p110
    %s112 = ssub.s32 %s10, %s17
    %p113 = scmp.eq.s32.totalorder %s112, 0
    %s115 = sadd.s32 %s114, 1
    %s116 = scalar_select %p113, %s114, %s115
    %p119 = pneg %p113
    %p120 = scmp.eq.s32.totalorder %s10, 1
    %p121 = por %p119, %p120
    %p122 = scmp.ne.s32.totalorder %s114, %s117
    %p123 = scmp.eq.s32.totalorder %s10, 0
    %p124 = por %p122, %p123
    %p125 = scmp.ne.s32.totalorder %s114, %s117
    %p126 = scmp.eq.s32.totalorder %s15, 1
    %p127 = por %p125, %p126
    %p128 = scmp.ne.s32.totalorder %s117, %s118
    %p129 = scmp.eq.s32.totalorder %s15, 0
    %p130 = por %p128, %p129
    %p131 = scmp.ne.s32.totalorder %s117, %s118
    %p132 = scmp.eq.s32.totalorder %s16, 1
    %p133 = por %p131, %p132
    %p135 = scmp.ne.s32.totalorder %s118, %s134
    %p136 = scmp.eq.s32.totalorder %s16, 0
    %p137 = por %p135, %p136
    %p138 = scmp.le.s32.totalorder 1, %s10
    %p139 = scmp.lt.s32.totalorder %s10, 3
    %p140 = pnand %p138, %p139
    %p141 = pneg %p140
    // Predicated region
    $region9: #{basic_block_forward.7} parent=5 // pred_check
      _
    $region10: #{basic_block_forward.7} parent=5 // pred_check_branch
      %143 = sbr.rel (%p140) target = $region12
    $region11: #{basic_block_forward.7} parent=5 // pred_region
      %s144 = ssub.s32 %s10, 1
      // Predicated region
      $region13: #{basic_block_forward.7} parent=11 // pred_check
        %p145 = pneg %p83
      $region14: #{basic_block_forward.7} parent=11 // pred_check_branch
        %147 = sbr.rel (%p145) target = $region16
      $region15: #{basic_block_forward.7} parent=11 // pred_region
        _
      $region16: #{basic_block_forward.7} parent=11 // pred_fallthru
        _
      // Predicated region
      $region17: #{basic_block_forward.7} parent=11 // pred_check
        %p148 = pneg %p104
      $region18: #{basic_block_forward.7} parent=11 // pred_check_branch
        %150 = sbr.rel (%p148) target = $region20
      $region19: #{basic_block_forward.7} parent=11 // pred_region
        _
      $region20: #{basic_block_forward.7} parent=11 // pred_fallthru
        _
    $region12: #{basic_block_forward.7} parent=5 // pred_fallthru
      _
    %p151 = scmp.lt.s32.totalorder %s10, 2
    // Predicated region
    $region21: #{basic_block_forward.7} parent=5 // pred_check
      %p152 = pneg %p151
    $region22: #{basic_block_forward.7} parent=5 // pred_check_branch
      %154 = sbr.rel (%p152) target = $region24
    $region23: #{basic_block_forward.7} parent=5 // pred_region
      // Predicated region
      $region25: #{basic_block_forward.7} parent=23 // pred_check
        %p155 = pneg %p30
      $region26: #{basic_block_forward.7} parent=23 // pred_check_branch
        %157 = sbr.rel (%p155) target = $region28
      $region27: #{basic_block_forward.7} parent=23 // pred_region
        %s158 = smul.u32 2, %s10
        %p159 = scmp.lt.s32.totalorder %s158, 3
        %s160 = scalar_select %p159, %s158, 3
        %s161 = smul.addr %s160, 8
        %s162 = scalar_lea.vmem %s0, %s161
        %s163 = smul.u32 2, %s10
      $region28: #{basic_block_forward.7} parent=23 // pred_fallthru
        _
      // Predicated region
      $region29: #{basic_block_forward.7} parent=23 // pred_check
        %p164 = pneg %p56
      $region30: #{basic_block_forward.7} parent=23 // pred_check_branch
        %166 = sbr.rel (%p164) target = $region32
      $region31: #{basic_block_forward.7} parent=23 // pred_region
        %s167 = smul.u32 2, %s10
        %p168 = scmp.lt.s32.totalorder %s167, 3
        %s169 = scalar_select %p168, %s167, 3
        %s170 = smul.addr %s169, 8
        %s171 = scalar_lea.vmem %s1, %s170
        %s172 = smul.u32 2, %s10
      $region32: #{basic_block_forward.7} parent=23 // pred_fallthru
        _
    $region24: #{basic_block_forward.7} parent=5 // pred_fallthru
      _
    %p173 = scmp.le.s32.totalorder 1, %s10
    %p174 = scmp.lt.s32.totalorder %s10, 3
    %p175 = pnand %p173, %p174
    %p176 = pneg %p175
    // Predicated region
    $region33: #{basic_block_forward.7} parent=5 // pred_check
      _
    $region34: #{basic_block_forward.7} parent=5 // pred_check_branch
      %178 = sbr.rel (%p175) target = $region36
    $region35: #{basic_block_forward.7} parent=5 // pred_region
      %s179 = ssub.s32 %s10, 1
      %s180 = smul.u32 2, %s15
      %p181 = scmp.lt.s32.totalorder %s180, 3
      %s182 = scalar_select %p181, %s180, 3
      %s183 = smul.addr %s182, 8
      %s184 = scalar_lea.vmem %s0, %s183
      %p185 = pneg %p36
      %p186 = pneg %p33
      %s187 = smul.u32 2, %s15
      %p188 = scmp.lt.s32.totalorder %s187, 3
      %s189 = scalar_select %p188, %s187, 3
      %s190 = smul.addr %s189, 8
      %s191 = scalar_lea.vmem %s1, %s190
      %p192 = pneg %p62
      %p193 = pneg %p59
      %p194 = pneg %p83
      %p195 = pneg %p80
      %p196 = pneg %p104
      %p197 = pneg %p101
      %p198 = pneg %p130
      %p199 = pneg %p127
      %s200 = smul.u32 2, %s15
      %p201 = scmp.lt.s32.totalorder %s200, 3
      %s202 = scalar_select %p201, %s200, 3
      %s203 = smul.addr %s202, 8
      %s204 = scalar_lea.vmem %s4, %s203
      %s205 = smul.u32 2, %s15
      %p206 = scmp.lt.s32.totalorder %s205, 3
      %s207 = scalar_select %p206, %s205, 3
      %s208 = smul.addr %s207, 8
      %s209 = scalar_lea.vmem %s0, %s208
      %s210 = smul.u32 2, %s15
      %s211 = smul.u32 2, %s15
      %p212 = scmp.lt.s32.totalorder %s211, 3
      %s213 = scalar_select %p212, %s211, 3
      %s214 = smul.addr %s213, 8
      %s215 = scalar_lea.vmem %s1, %s214
      %s216 = smul.u32 2, %s15
      %s217 = smul.u32 2, %s15
      %p218 = scmp.lt.s32.totalorder %s217, 3
      %s219 = scalar_select %p218, %s217, 3
      %s220 = smul.addr %s219, 8
      %s221 = scalar_lea.vmem %s4, %s220
      %s222 = smul.u32 2, %s15
      %v223 = vld [vmem:[%s209] sm:$0xff]
      %v224 = vld [vmem:[%s209 + $0x8] sm:$0xff]
      %v225 = vld [vmem:[%s2] sm:$0xff]
      %227 = vset.pattern.permute.xlu0 0
      %228 = vperm.xlu0 %227, %v225
      %v229 = vpop.permute.xlu0 %228
      %v231 = vmul.f32 %v223, %v229
      %v232 = vmul.f32 %v224, %v229
      %v233 = vld [vmem:[%s3] sm:$0xff]
      %235 = vset.pattern.permute.xlu0 0
      %236 = vperm.xlu0 %235, %v233
      %v237 = vpop.permute.xlu0 %236
      %v239 = vadd.f32 %v231, %v237
      %v240 = vadd.f32 %v232, %v237
      %v241 = vld [vmem:[%s215] sm:$0xff]
      %v242 = vld [vmem:[%s215 + $0x8] sm:$0xff]
      %v243 = vadd.f32 %v239, %v241
      %v244 = vadd.f32 %v240, %v242
      %v245 = vmax.f32 %v243, 0.0
      %v246 = vmax.f32 %v244, 0.0
      %247 = vst [vmem:[%s221] sm:$0xff] %v245
      %248 = vst [vmem:[%s221 + $0x8] sm:$0xff] %v246
      %s249 = smul.u32 2, %s15
      %p250 = scmp.lt.s32.totalorder %s249, 3
      %s251 = scalar_select %p250, %s249, 3
      %s252 = smul.addr %s251, 8
      %s253 = scalar_lea.vmem %s4, %s252
      // Predicated region
      $region37: #{basic_block_forward.7} parent=35 // pred_check
        %p254 = pneg %p127
      $region38: #{basic_block_forward.7} parent=35 // pred_check_branch
        %256 = sbr.rel (%p254) target = $region40
      $region39: #{basic_block_forward.7} parent=35 // pred_region
        %s257 = smul.u32 2, %s15
      $region40: #{basic_block_forward.7} parent=35 // pred_fallthru
        _
    $region36: #{basic_block_forward.7} parent=5 // pred_fallthru
      _
    %p258 = scmp.le.s32.totalorder 2, %s10
    // Predicated region
    $region41: #{basic_block_forward.7} parent=5 // pred_check
      %p259 = pneg %p258
    $region42: #{basic_block_forward.7} parent=5 // pred_check_branch
      %261 = sbr.rel (%p259) target = $region44
    $region43: #{basic_block_forward.7} parent=5 // pred_region
      %s262 = ssub.s32 %s10, 2
      // Predicated region
      $region45: #{basic_block_forward.7} parent=43 // pred_check
        %p263 = pneg %p133
      $region46: #{basic_block_forward.7} parent=43 // pred_check_branch
        %265 = sbr.rel (%p263) target = $region48
      $region47: #{basic_block_forward.7} parent=43 // pred_region
        %s266 = smul.u32 2, %s16
        %p267 = scmp.lt.s32.totalorder %s266, 3
        %s268 = scalar_select %p267, %s266, 3
        %s269 = smul.addr %s268, 8
        %s270 = scalar_lea.vmem %s4, %s269
      $region48: #{basic_block_forward.7} parent=43 // pred_fallthru
        _
    $region44: #{basic_block_forward.7} parent=5 // pred_fallthru
      _
  $region6: #{basic_block_forward.7} parent=0 // loop_footer
    %s14 = sadd.s32 1, %s10
  $region7: #{basic_block_forward.7} parent=0 // loop_footer_branch
    %9 = sbr.rel target = $region3
  $region8: #{basic_block_forward.7} parent=0 // loop_exit
    _

</llo_original>
